<compile_context>
chip_gen: v6e
topology: v6e:2x2x1
jax: 0.10.0
libtpu: 0.0.40
codegen_flags: <defaults>
</compile_context>

<pallas_src>
import math

import jax
import jax.numpy as jnp
from jax.experimental import pallas as pl
from jax.experimental.pallas import tpu as pltpu

# ---------------- model config (small, RoBERTa-like) ----------------
VOCAB = 100
MAX_POS = 64
TYPE_VOCAB = 2
HIDDEN = 128
N_HEADS = 4
HEAD_DIM = HIDDEN // N_HEADS
INTERMEDIATE = 512
N_LAYERS = 2
N_CLASSES = 4
LN_EPS = 1e-5
HEAD_PAD = 128  # classifier output padded to a lane-dense 128-wide slab


# ---------------- in-kernel helpers (f32 math) ----------------
def _ln(x, g, b):
    mu = jnp.mean(x, axis=-1, keepdims=True)
    xc = x - mu
    var = jnp.mean(xc * xc, axis=-1, keepdims=True)
    return xc * jax.lax.rsqrt(var + LN_EPS) * g + b


def _gelu(y):
    # tanh-approx GELU (EUP-friendly)
    return 0.5 * y * (1.0 + jnp.tanh(0.7978845608028654 * (y + 0.044715 * y * y * y)))


def _bf16_dot(a, w_bf16):
    return jnp.dot(a.astype(jnp.bfloat16), w_bf16, preferred_element_type=jnp.float32)


# ---------------- fused encoder kernel: emb-LN + (QKV -> attn -> O+LN -> FFN+LN) ----------------
def _encoder_kernel(
    x_ref, mask_ref, embg_ref, embb_ref,
    wqkv_ref, bqkv_ref, wo_ref, bo_ref, ln1g_ref, ln1b_ref,
    w1_ref, b1_ref, w2_ref, b2_ref, ln2g_ref, ln2b_ref,
    o_ref,
):
    l = pl.program_id(1)

    @pl.when(l == 0)
    def _():
        # embedding LayerNorm, applied once before layer 0; output block is the
        # resident hidden-state carrier across the layer axis.
        o_ref[0] = _ln(x_ref[0], embg_ref[...], embb_ref[...])

    x = o_ref[0]          # (S, H) f32, resident in VMEM across layers
    m = mask_ref[0]       # (1, S) additive mask over keys

    # Fused Q/K/V projection: one MXU pass, 3H output lanes.
    qkv = _bf16_dot(x, wqkv_ref[0]) + bqkv_ref[0]          # (S, 3H) f32

    # Per-head attention with static lane slices (NH small; fully unrolled).
    scale = 1.0 / math.sqrt(HEAD_DIM)
    ctx_parts = []
    for h in range(N_HEADS):
        q_h = qkv[:, h * HEAD_DIM:(h + 1) * HEAD_DIM]                          # (S, DH)
        k_h = qkv[:, HIDDEN + h * HEAD_DIM:HIDDEN + (h + 1) * HEAD_DIM]        # (S, DH)
        v_h = qkv[:, 2 * HIDDEN + h * HEAD_DIM:2 * HIDDEN + (h + 1) * HEAD_DIM]
        s = jnp.dot(q_h, k_h.T, preferred_element_type=jnp.float32) * scale + m
        s = s - jnp.max(s, axis=-1, keepdims=True)
        p = jnp.exp(s)
        p = p * pl.reciprocal(jnp.sum(p, axis=-1, keepdims=True), approx=True)
        ctx_parts.append(jnp.dot(p, v_h, preferred_element_type=jnp.float32))
    ctx = jnp.concatenate(ctx_parts, axis=-1)               # (S, H)

    # Output projection + residual + LayerNorm 1 (fused, single VMEM store path).
    attn = _bf16_dot(ctx, wo_ref[0]) + bo_ref[0]
    x1 = _ln(attn + x, ln1g_ref[0], ln1b_ref[0])

    # FFN (GELU) + residual + LayerNorm 2.
    hdn = _gelu(_bf16_dot(x1, w1_ref[0]) + b1_ref[0])
    ffn = _bf16_dot(hdn, w2_ref[0]) + b2_ref[0]
    o_ref[0] = _ln(ffn + x1, ln2g_ref[0], ln2b_ref[0])


def encoder(emb, add_mask, p):
    """emb: (B, S, H) f32; add_mask: (B, 1, S) f32 additive. Returns (B, S, H) f32."""
    B, S, H = emb.shape
    L = p["wqkv"].shape[0]

    bmap = lambda b, l: (b, 0, 0)      # batch-indexed, layer-invariant (stays resident)
    lmap = lambda b, l: (l, 0, 0)      # layer-indexed weights
    cmap = lambda b, l: (0, 0)         # shared (embedding LN) params

    return pl.pallas_call(
        _encoder_kernel,
        out_shape=jax.ShapeDtypeStruct((B, S, H), jnp.float32),
        grid=(B, L),
        in_specs=[
            pl.BlockSpec((1, S, H), bmap),               # embeddings
            pl.BlockSpec((1, 1, S), bmap),               # additive mask
            pl.BlockSpec((1, H), cmap),                  # emb_ln_g
            pl.BlockSpec((1, H), cmap),                  # emb_ln_b
            pl.BlockSpec((1, H, 3 * H), lmap),           # wqkv (bf16)
            pl.BlockSpec((1, 1, 3 * H), lmap),           # bqkv
            pl.BlockSpec((1, H, H), lmap),               # wo (bf16)
            pl.BlockSpec((1, 1, H), lmap),               # bo
            pl.BlockSpec((1, 1, H), lmap),               # ln1_g
            pl.BlockSpec((1, 1, H), lmap),               # ln1_b
            pl.BlockSpec((1, H, INTERMEDIATE), lmap),    # w1 (bf16)
            pl.BlockSpec((1, 1, INTERMEDIATE), lmap),    # b1
            pl.BlockSpec((1, INTERMEDIATE, H), lmap),    # w2 (bf16)
            pl.BlockSpec((1, 1, H), lmap),               # b2
            pl.BlockSpec((1, 1, H), lmap),               # ln2_g
            pl.BlockSpec((1, 1, H), lmap),               # ln2_b
        ],
        out_specs=pl.BlockSpec((1, S, H), bmap),
        compiler_params=pltpu.CompilerParams(
            dimension_semantics=("parallel", "arbitrary")),
    )(
        emb, add_mask, p["emb_ln_g"], p["emb_ln_b"],
        p["wqkv"], p["bqkv"], p["wo"], p["bo"], p["ln1_g"], p["ln1_b"],
        p["w1"], p["b1"], p["w2"], p["b2"], p["ln2_g"], p["ln2_b"],
    )


# ---------------- fused pooler + classifier head (lane-dense padded output) ----------------
def _head_kernel(cls_ref, pw_ref, pb_ref, cw_ref, cb_ref, o_ref):
    pooled = jnp.tanh(_bf16_dot(cls_ref[...], pw_ref[...]) + pb_ref[...])
    # dropout(p=0.3): eval-mode identity (see TODO at top)
    o_ref[...] = _bf16_dot(pooled, cw_ref[...]) + cb_ref[...]


def head(cls_tok, p):
    B, H = cls_tok.shape
    return pl.pallas_call(
        _head_kernel,
        out_shape=jax.ShapeDtypeStruct((B, HEAD_PAD), jnp.float32),
        grid=(1,),
        in_specs=[
            pl.BlockSpec((B, H), lambda i: (0, 0)),
            pl.BlockSpec((H, H), lambda i: (0, 0)),
            pl.BlockSpec((1, H), lambda i: (0, 0)),
            pl.BlockSpec((H, HEAD_PAD), lambda i: (0, 0)),
            pl.BlockSpec((1, HEAD_PAD), lambda i: (0, 0)),
        ],
        out_specs=pl.BlockSpec((B, HEAD_PAD), lambda i: (0, 0)),
    )(cls_tok, p["pooler_w"], p["pooler_b"], p["cls_w_pad"], p["cls_b_pad"])


# ---------------- full forward ----------------
def roberta_base_forward(params, input_ids, attention_mask, token_type_ids):
    B, S = input_ids.shape
    # embeddings (gathers are XLA glue; everything downstream runs in Pallas)
    pos_ids = jnp.arange(S, dtype=jnp.int32) + 2  # RoBERTa: positions start at padding_idx+1
    emb = (
        params["word_emb"][input_ids]
        + params["pos_emb"][pos_ids][None, :, :]
        + params["type_emb"][token_type_ids]
    ).astype(jnp.float32)                                              # (B, S, H)

    add_mask = ((1.0 - attention_mask.astype(jnp.float32)) * -10000.0).reshape(B, 1, S)

    x = encoder(emb, add_mask, params)                                 # (B, S, H)

    cls_tok = x[:, 0, :]                                               # (B, H) pooler input
    logits_padded = head(cls_tok, params)                              # (B, 128)
    return logits_padded[:, :N_CLASSES]


# ---------------- deterministic parameter init ----------------
def init_params(key):
    std = 0.02
    keys = iter(jax.random.split(key, 64))

    def nrm(shape):
        return std * jax.random.normal(next(keys), shape, dtype=jnp.float32)

    wqkv, bqkv, wo, bo = [], [], [], []
    ln1g, ln1b, w1, b1, w2, b2, ln2g, ln2b = [], [], [], [], [], [], [], []
    for _ in range(N_LAYERS):
        wq, wk, wv = nrm((HIDDEN, HIDDEN)), nrm((HIDDEN, HIDDEN)), nrm((HIDDEN, HIDDEN))
        wqkv.append(jnp.concatenate([wq, wk, wv], axis=1))             # (H, 3H)
        bqkv.append(jnp.zeros((1, 3 * HIDDEN), jnp.float32))
        wo.append(nrm((HIDDEN, HIDDEN)))
        bo.append(jnp.zeros((1, HIDDEN), jnp.float32))
        ln1g.append(jnp.ones((1, HIDDEN), jnp.float32))
        ln1b.append(jnp.zeros((1, HIDDEN), jnp.float32))
        w1.append(nrm((HIDDEN, INTERMEDIATE)))
        b1.append(jnp.zeros((1, INTERMEDIATE), jnp.float32))
        w2.append(nrm((INTERMEDIATE, HIDDEN)))
        b2.append(jnp.zeros((1, HIDDEN), jnp.float32))
        ln2g.append(jnp.ones((1, HIDDEN), jnp.float32))
        ln2b.append(jnp.zeros((1, HIDDEN), jnp.float32))

    cls_w = nrm((HIDDEN, N_CLASSES))
    cls_w_pad = jnp.zeros((HIDDEN, HEAD_PAD), jnp.float32).at[:, :N_CLASSES].set(cls_w)

    params = {
        "word_emb": nrm((VOCAB, HIDDEN)),
        "pos_emb": nrm((MAX_POS, HIDDEN)),
        "type_emb": nrm((TYPE_VOCAB, HIDDEN)),
        "emb_ln_g": jnp.ones((1, HIDDEN), jnp.float32),
        "emb_ln_b": jnp.zeros((1, HIDDEN), jnp.float32),
        # stacked per-layer weights; matmul weights stored bf16 (f32 accumulation in-kernel)
        "wqkv": jnp.stack(wqkv).astype(jnp.bfloat16),
        "bqkv": jnp.stack(bqkv),
        "wo": jnp.stack(wo).astype(jnp.bfloat16),
        "bo": jnp.stack(bo),
        "ln1_g": jnp.stack(ln1g),
        "ln1_b": jnp.stack(ln1b),
        "w1": jnp.stack(w1).astype(jnp.bfloat16),
        "b1": jnp.stack(b1),
        "w2": jnp.stack(w2).astype(jnp.bfloat16),
        "b2": jnp.stack(b2),
        "ln2_g": jnp.stack(ln2g),
        "ln2_b": jnp.stack(ln2b),
        "pooler_w": nrm((HIDDEN, HIDDEN)).astype(jnp.bfloat16),
        "pooler_b": jnp.zeros((1, HIDDEN), jnp.float32),
        "cls_w_pad": cls_w_pad.astype(jnp.bfloat16),
        "cls_b_pad": jnp.zeros((1, HEAD_PAD), jnp.float32),
    }
    return params


if __name__ == "__main__":
    key = jax.random.PRNGKey(0)
    k_params, k_ids, k_mask = jax.random.split(key, 3)

    B, S = 2, 8
    params = init_params(k_params)

    input_ids = jax.random.randint(k_ids, (B, S), 0, VOCAB, dtype=jnp.int32)
    attention_mask = jnp.ones((B, S), dtype=jnp.int32).at[1, 6:].set(0)
    token_type_ids = jnp.zeros((B, S), dtype=jnp.int32)

    logits = roberta_base_forward(params, input_ids, attention_mask, token_type_ids)
    logits = jax.block_until_ready(logits)
    assert logits.shape == (B, N_CLASSES)
    assert bool(jnp.all(jnp.isfinite(logits)))
    print("KERNEL_OK")
</pallas_src>

<mosaic_0001>
module attributes {stable_mosaic.version = 11 : i64} {
  func.func @_encoder_kernel(%arg0: i32, %arg1: i32, %arg2: memref<1x8x128xf32, #tpu.memory_space<vmem>>, %arg3: memref<1x1x8xf32, #tpu.memory_space<vmem>>, %arg4: memref<1x128xf32, #tpu.memory_space<vmem>>, %arg5: memref<1x128xf32, #tpu.memory_space<vmem>>, %arg6: memref<1x128x384xbf16, #tpu.memory_space<vmem>>, %arg7: memref<1x1x384xf32, #tpu.memory_space<vmem>>, %arg8: memref<1x128x128xbf16, #tpu.memory_space<vmem>>, %arg9: memref<1x1x128xf32, #tpu.memory_space<vmem>>, %arg10: memref<1x1x128xf32, #tpu.memory_space<vmem>>, %arg11: memref<1x1x128xf32, #tpu.memory_space<vmem>>, %arg12: memref<1x128x512xbf16, #tpu.memory_space<vmem>>, %arg13: memref<1x1x512xf32, #tpu.memory_space<vmem>>, %arg14: memref<1x512x128xbf16, #tpu.memory_space<vmem>>, %arg15: memref<1x1x128xf32, #tpu.memory_space<vmem>>, %arg16: memref<1x1x128xf32, #tpu.memory_space<vmem>>, %arg17: memref<1x1x128xf32, #tpu.memory_space<vmem>>, %arg18: memref<1x8x128xf32, #tpu.memory_space<vmem>>) attributes {dimension_semantics = [#tpu.dimension_semantics<parallel>, #tpu.dimension_semantics<arbitrary>], iteration_bounds = array<i64: 2, 2>, scalar_prefetch = 0 : i64, scratch_operands = 0 : i64, tpu.core_type = #tpu.core_type<tc>, window_params = [{transform_indices = @transform_0, window_bounds = array<i64: 1, 8, 128>}, {transform_indices = @transform_1, window_bounds = array<i64: 1, 1, 8>}, {pipeline_mode = #tpu.pipeline_mode<synchronous>, transform_indices = @transform_2, window_bounds = array<i64: 1, 128>}, {pipeline_mode = #tpu.pipeline_mode<synchronous>, transform_indices = @transform_3, window_bounds = array<i64: 1, 128>}, {transform_indices = @transform_4, window_bounds = array<i64: 1, 128, 384>}, {transform_indices = @transform_5, window_bounds = array<i64: 1, 1, 384>}, {transform_indices = @transform_6, window_bounds = array<i64: 1, 128, 128>}, {transform_indices = @transform_7, window_bounds = array<i64: 1, 1, 128>}, {transform_indices = @transform_8, window_bounds = array<i64: 1, 1, 128>}, {transform_indices = @transform_9, window_bounds = array<i64: 1, 1, 128>}, {transform_indices = @transform_10, window_bounds = array<i64: 1, 128, 512>}, {transform_indices = @transform_11, window_bounds = array<i64: 1, 1, 512>}, {transform_indices = @transform_12, window_bounds = array<i64: 1, 512, 128>}, {transform_indices = @transform_13, window_bounds = array<i64: 1, 1, 128>}, {transform_indices = @transform_14, window_bounds = array<i64: 1, 1, 128>}, {transform_indices = @transform_15, window_bounds = array<i64: 1, 1, 128>}, {transform_indices = @transform_16, window_bounds = array<i64: 1, 8, 128>}]} {
    %c0_i32 = arith.constant 0 : i32
    %0 = arith.cmpi eq, %arg1, %c0_i32 : i32
    %1 = arith.extui %0 : i1 to i32
    %c0_i32_0 = arith.constant 0 : i32
    %2 = arith.cmpi ne, %1, %c0_i32_0 : i32
    scf.if %2 {
      %c0_82 = arith.constant 0 : index
      %c0_83 = arith.constant 0 : index
      %c0_84 = arith.constant 0 : index
      %186 = vector.load %arg2[%c0_82, %c0_83, %c0_84] : memref<1x8x128xf32, #tpu.memory_space<vmem>>, vector<1x8x128xf32>
      %187 = vector.shape_cast %186 : vector<1x8x128xf32> to vector<8x128xf32>
      %c0_85 = arith.constant 0 : index
      %c0_86 = arith.constant 0 : index
      %188 = vector.load %arg4[%c0_85, %c0_86] : memref<1x128xf32, #tpu.memory_space<vmem>>, vector<1x128xf32>
      %c0_87 = arith.constant 0 : index
      %c0_88 = arith.constant 0 : index
      %189 = vector.load %arg5[%c0_87, %c0_88] : memref<1x128xf32, #tpu.memory_space<vmem>>, vector<1x128xf32>
      %cst_89 = arith.constant dense<0.000000e+00> : vector<8xf32>
      %190 = vector.multi_reduction <add>, %187, %cst_89 [1] : vector<8x128xf32> to vector<8xf32>
      %191 = vector.shape_cast %190 : vector<8xf32> to vector<8x1xf32>
      %cst_90 = arith.constant 1.280000e+02 : f32
      %192 = vector.broadcast %cst_90 : f32 to vector<8x1xf32>
      %193 = arith.divf %191, %192 : vector<8x1xf32>
      %194 = vector.broadcast %193 : vector<8x1xf32> to vector<8x128xf32>
      %195 = arith.subf %187, %194 : vector<8x128xf32>
      %196 = arith.mulf %195, %195 : vector<8x128xf32>
      %cst_91 = arith.constant dense<0.000000e+00> : vector<8xf32>
      %197 = vector.multi_reduction <add>, %196, %cst_91 [1] : vector<8x128xf32> to vector<8xf32>
      %198 = vector.shape_cast %197 : vector<8xf32> to vector<8x1xf32>
      %cst_92 = arith.constant 1.280000e+02 : f32
      %199 = vector.broadcast %cst_92 : f32 to vector<8x1xf32>
      %200 = arith.divf %198, %199 : vector<8x1xf32>
      %cst_93 = arith.constant 9.99999974E-6 : f32
      %201 = vector.broadcast %cst_93 : f32 to vector<8x1xf32>
      %202 = arith.addf %200, %201 : vector<8x1xf32>
      %203 = math.rsqrt %202 : vector<8x1xf32>
      %204 = vector.broadcast %203 : vector<8x1xf32> to vector<8x128xf32>
      %205 = arith.mulf %195, %204 : vector<8x128xf32>
      %206 = vector.broadcast %188 : vector<1x128xf32> to vector<8x128xf32>
      %207 = arith.mulf %205, %206 : vector<8x128xf32>
      %208 = vector.broadcast %189 : vector<1x128xf32> to vector<8x128xf32>
      %209 = arith.addf %207, %208 : vector<8x128xf32>
      %c0_94 = arith.constant 0 : index
      %c0_95 = arith.constant 0 : index
      %c0_96 = arith.constant 0 : index
      %210 = vector.load %arg18[%c0_94, %c0_95, %c0_96] : memref<1x8x128xf32, #tpu.memory_space<vmem>>, vector<1x8x128xf32>
      %211 = vector.shape_cast %210 : vector<1x8x128xf32> to vector<8x128xf32>
      %212 = vector.shape_cast %209 : vector<8x128xf32> to vector<1x8x128xf32>
      tpu.vector_store %arg18[%c0_94, %c0_95, %c0_96], %212 {strides = array<i32>} : memref<1x8x128xf32, #tpu.memory_space<vmem>>, vector<1x8x128xf32>,
    } else {
    }
    %c0 = arith.constant 0 : index
    %c0_1 = arith.constant 0 : index
    %c0_2 = arith.constant 0 : index
    %3 = vector.load %arg18[%c0, %c0_1, %c0_2] : memref<1x8x128xf32, #tpu.memory_space<vmem>>, vector<1x8x128xf32>
    %4 = vector.shape_cast %3 : vector<1x8x128xf32> to vector<8x128xf32>
    %c0_3 = arith.constant 0 : index
    %c0_4 = arith.constant 0 : index
    %c0_5 = arith.constant 0 : index
    %5 = vector.load %arg3[%c0_3, %c0_4, %c0_5] : memref<1x1x8xf32, #tpu.memory_space<vmem>>, vector<1x1x8xf32>
    %6 = vector.shape_cast %5 : vector<1x1x8xf32> to vector<1x8xf32>
    %c0_6 = arith.constant 0 : index
    %c0_7 = arith.constant 0 : index
    %c0_8 = arith.constant 0 : index
    %7 = vector.load %arg6[%c0_6, %c0_7, %c0_8] : memref<1x128x384xbf16, #tpu.memory_space<vmem>>, vector<1x128x384xbf16>
    %8 = vector.shape_cast %7 : vector<1x128x384xbf16> to vector<128x384xbf16>
    %9 = arith.truncf %4 : vector<8x128xf32> to vector<8x128xbf16>
    %cst = arith.constant dense<0.000000e+00> : vector<8x384xf32>
    %10 = tpu.matmul %9, %8, %cst {dimension_numbers = #tpu.dot_dimension_numbers<[1], [0], [0], [1], [0, 0, 1, 1], [], []>} : vector<8x128xbf16>, vector<128x384xbf16>, vector<8x384xf32> -> vector<8x384xf32>
    %c0_9 = arith.constant 0 : index
    %c0_10 = arith.constant 0 : index
    %c0_11 = arith.constant 0 : index
    %11 = vector.load %arg7[%c0_9, %c0_10, %c0_11] : memref<1x1x384xf32, #tpu.memory_space<vmem>>, vector<1x1x384xf32>
    %12 = vector.shape_cast %11 : vector<1x1x384xf32> to vector<1x384xf32>
    %13 = vector.broadcast %12 : vector<1x384xf32> to vector<8x384xf32>
    %14 = arith.addf %10, %13 : vector<8x384xf32>
    %15 = vector.extract_strided_slice %14 {offsets = [0, 0], sizes = [8, 32], strides = [1, 1]} : vector<8x384xf32> to vector<8x32xf32>
    %16 = vector.extract_strided_slice %14 {offsets = [0, 128], sizes = [8, 32], strides = [1, 1]} : vector<8x384xf32> to vector<8x32xf32>
    %17 = vector.extract_strided_slice %14 {offsets = [0, 256], sizes = [8, 32], strides = [1, 1]} : vector<8x384xf32> to vector<8x32xf32>
    %18 = tpu.transpose %16, [1, 0] : vector<8x32xf32> -> vector<32x8xf32>
    %cst_12 = arith.constant dense<0.000000e+00> : vector<8x8xf32>
    %19 = tpu.matmul %15, %18, %cst_12 {dimension_numbers = #tpu.dot_dimension_numbers<[1], [0], [0], [1], [0, 0, 1, 1], [], []>} : vector<8x32xf32>, vector<32x8xf32>, vector<8x8xf32> -> vector<8x8xf32>
    %cst_13 = arith.constant 0.176776692 : f32
    %20 = vector.broadcast %cst_13 : f32 to vector<8x8xf32>
    %21 = arith.mulf %19, %20 : vector<8x8xf32>
    %22 = vector.broadcast %6 : vector<1x8xf32> to vector<8x8xf32>
    %23 = arith.addf %21, %22 : vector<8x8xf32>
    %cst_14 = arith.constant dense<0xFF800000> : vector<8xf32>
    %24 = vector.multi_reduction <maximumf>, %23, %cst_14 [1] : vector<8x8xf32> to vector<8xf32>
    %25 = vector.shape_cast %24 : vector<8xf32> to vector<8x1xf32>
    %26 = vector.broadcast %25 : vector<8x1xf32> to vector<8x8xf32>
    %27 = arith.subf %23, %26 : vector<8x8xf32>
    %28 = math.exp %27 : vector<8x8xf32>
    %cst_15 = arith.constant dense<0.000000e+00> : vector<8xf32>
    %29 = vector.multi_reduction <add>, %28, %cst_15 [1] : vector<8x8xf32> to vector<8xf32>
    %30 = vector.shape_cast %29 : vector<8xf32> to vector<8x1xf32>
    %31 = tpu.reciprocal %30 {approx = true} : vector<8x1xf32> -> vector<8x1xf32>
    %32 = vector.broadcast %31 : vector<8x1xf32> to vector<8x8xf32>
    %33 = arith.mulf %28, %32 : vector<8x8xf32>
    %cst_16 = arith.constant dense<0.000000e+00> : vector<8x32xf32>
    %34 = tpu.matmul %33, %17, %cst_16 {dimension_numbers = #tpu.dot_dimension_numbers<[1], [0], [0], [1], [0, 0, 1, 1], [], []>} : vector<8x8xf32>, vector<8x32xf32>, vector<8x32xf32> -> vector<8x32xf32>
    %35 = vector.extract_strided_slice %14 {offsets = [0, 32], sizes = [8, 32], strides = [1, 1]} : vector<8x384xf32> to vector<8x32xf32>
    %36 = vector.extract_strided_slice %14 {offsets = [0, 160], sizes = [8, 32], strides = [1, 1]} : vector<8x384xf32> to vector<8x32xf32>
    %37 = vector.extract_strided_slice %14 {offsets = [0, 288], sizes = [8, 32], strides = [1, 1]} : vector<8x384xf32> to vector<8x32xf32>
    %38 = tpu.transpose %36, [1, 0] : vector<8x32xf32> -> vector<32x8xf32>
    %cst_17 = arith.constant dense<0.000000e+00> : vector<8x8xf32>
    %39 = tpu.matmul %35, %38, %cst_17 {dimension_numbers = #tpu.dot_dimension_numbers<[1], [0], [0], [1], [0, 0, 1, 1], [], []>} : vector<8x32xf32>, vector<32x8xf32>, vector<8x8xf32> -> vector<8x8xf32>
    %cst_18 = arith.constant 0.176776692 : f32
    %40 = vector.broadcast %cst_18 : f32 to vector<8x8xf32>
    %41 = arith.mulf %39, %40 : vector<8x8xf32>
    %42 = vector.broadcast %6 : vector<1x8xf32> to vector<8x8xf32>
    %43 = arith.addf %41, %42 : vector<8x8xf32>
    %cst_19 = arith.constant dense<0xFF800000> : vector<8xf32>
    %44 = vector.multi_reduction <maximumf>, %43, %cst_19 [1] : vector<8x8xf32> to vector<8xf32>
    %45 = vector.shape_cast %44 : vector<8xf32> to vector<8x1xf32>
    %46 = vector.broadcast %45 : vector<8x1xf32> to vector<8x8xf32>
    %47 = arith.subf %43, %46 : vector<8x8xf32>
    %48 = math.exp %47 : vector<8x8xf32>
    %cst_20 = arith.constant dense<0.000000e+00> : vector<8xf32>
    %49 = vector.multi_reduction <add>, %48, %cst_20 [1] : vector<8x8xf32> to vector<8xf32>
    %50 = vector.shape_cast %49 : vector<8xf32> to vector<8x1xf32>
    %51 = tpu.reciprocal %50 {approx = true} : vector<8x1xf32> -> vector<8x1xf32>
    %52 = vector.broadcast %51 : vector<8x1xf32> to vector<8x8xf32>
    %53 = arith.mulf %48, %52 : vector<8x8xf32>
    %cst_21 = arith.constant dense<0.000000e+00> : vector<8x32xf32>
    %54 = tpu.matmul %53, %37, %cst_21 {dimension_numbers = #tpu.dot_dimension_numbers<[1], [0], [0], [1], [0, 0, 1, 1], [], []>} : vector<8x8xf32>, vector<8x32xf32>, vector<8x32xf32> -> vector<8x32xf32>
    %55 = vector.extract_strided_slice %14 {offsets = [0, 64], sizes = [8, 32], strides = [1, 1]} : vector<8x384xf32> to vector<8x32xf32>
    %56 = vector.extract_strided_slice %14 {offsets = [0, 192], sizes = [8, 32], strides = [1, 1]} : vector<8x384xf32> to vector<8x32xf32>
    %57 = vector.extract_strided_slice %14 {offsets = [0, 320], sizes = [8, 32], strides = [1, 1]} : vector<8x384xf32> to vector<8x32xf32>
    %58 = tpu.transpose %56, [1, 0] : vector<8x32xf32> -> vector<32x8xf32>
    %cst_22 = arith.constant dense<0.000000e+00> : vector<8x8xf32>
    %59 = tpu.matmul %55, %58, %cst_22 {dimension_numbers = #tpu.dot_dimension_numbers<[1], [0], [0], [1], [0, 0, 1, 1], [], []>} : vector<8x32xf32>, vector<32x8xf32>, vector<8x8xf32> -> vector<8x8xf32>
    %cst_23 = arith.constant 0.176776692 : f32
    %60 = vector.broadcast %cst_23 : f32 to vector<8x8xf32>
    %61 = arith.mulf %59, %60 : vector<8x8xf32>
    %62 = vector.broadcast %6 : vector<1x8xf32> to vector<8x8xf32>
    %63 = arith.addf %61, %62 : vector<8x8xf32>
    %cst_24 = arith.constant dense<0xFF800000> : vector<8xf32>
    %64 = vector.multi_reduction <maximumf>, %63, %cst_24 [1] : vector<8x8xf32> to vector<8xf32>
    %65 = vector.shape_cast %64 : vector<8xf32> to vector<8x1xf32>
    %66 = vector.broadcast %65 : vector<8x1xf32> to vector<8x8xf32>
    %67 = arith.subf %63, %66 : vector<8x8xf32>
    %68 = math.exp %67 : vector<8x8xf32>
    %cst_25 = arith.constant dense<0.000000e+00> : vector<8xf32>
    %69 = vector.multi_reduction <add>, %68, %cst_25 [1] : vector<8x8xf32> to vector<8xf32>
    %70 = vector.shape_cast %69 : vector<8xf32> to vector<8x1xf32>
    %71 = tpu.reciprocal %70 {approx = true} : vector<8x1xf32> -> vector<8x1xf32>
    %72 = vector.broadcast %71 : vector<8x1xf32> to vector<8x8xf32>
    %73 = arith.mulf %68, %72 : vector<8x8xf32>
    %cst_26 = arith.constant dense<0.000000e+00> : vector<8x32xf32>
    %74 = tpu.matmul %73, %57, %cst_26 {dimension_numbers = #tpu.dot_dimension_numbers<[1], [0], [0], [1], [0, 0, 1, 1], [], []>} : vector<8x8xf32>, vector<8x32xf32>, vector<8x32xf32> -> vector<8x32xf32>
    %75 = vector.extract_strided_slice %14 {offsets = [0, 96], sizes = [8, 32], strides = [1, 1]} : vector<8x384xf32> to vector<8x32xf32>
    %76 = vector.extract_strided_slice %14 {offsets = [0, 224], sizes = [8, 32], strides = [1, 1]} : vector<8x384xf32> to vector<8x32xf32>
    %77 = vector.extract_strided_slice %14 {offsets = [0, 352], sizes = [8, 32], strides = [1, 1]} : vector<8x384xf32> to vector<8x32xf32>
    %78 = tpu.transpose %76, [1, 0] : vector<8x32xf32> -> vector<32x8xf32>
    %cst_27 = arith.constant dense<0.000000e+00> : vector<8x8xf32>
    %79 = tpu.matmul %75, %78, %cst_27 {dimension_numbers = #tpu.dot_dimension_numbers<[1], [0], [0], [1], [0, 0, 1, 1], [], []>} : vector<8x32xf32>, vector<32x8xf32>, vector<8x8xf32> -> vector<8x8xf32>
    %cst_28 = arith.constant 0.176776692 : f32
    %80 = vector.broadcast %cst_28 : f32 to vector<8x8xf32>
    %81 = arith.mulf %79, %80 : vector<8x8xf32>
    %82 = vector.broadcast %6 : vector<1x8xf32> to vector<8x8xf32>
    %83 = arith.addf %81, %82 : vector<8x8xf32>
    %cst_29 = arith.constant dense<0xFF800000> : vector<8xf32>
    %84 = vector.multi_reduction <maximumf>, %83, %cst_29 [1] : vector<8x8xf32> to vector<8xf32>
    %85 = vector.shape_cast %84 : vector<8xf32> to vector<8x1xf32>
    %86 = vector.broadcast %85 : vector<8x1xf32> to vector<8x8xf32>
    %87 = arith.subf %83, %86 : vector<8x8xf32>
    %88 = math.exp %87 : vector<8x8xf32>
    %cst_30 = arith.constant dense<0.000000e+00> : vector<8xf32>
    %89 = vector.multi_reduction <add>, %88, %cst_30 [1] : vector<8x8xf32> to vector<8xf32>
    %90 = vector.shape_cast %89 : vector<8xf32> to vector<8x1xf32>
    %91 = tpu.reciprocal %90 {approx = true} : vector<8x1xf32> -> vector<8x1xf32>
    %92 = vector.broadcast %91 : vector<8x1xf32> to vector<8x8xf32>
    %93 = arith.mulf %88, %92 : vector<8x8xf32>
    %cst_31 = arith.constant dense<0.000000e+00> : vector<8x32xf32>
    %94 = tpu.matmul %93, %77, %cst_31 {dimension_numbers = #tpu.dot_dimension_numbers<[1], [0], [0], [1], [0, 0, 1, 1], [], []>} : vector<8x8xf32>, vector<8x32xf32>, vector<8x32xf32> -> vector<8x32xf32>
    %95 = tpu.concatenate %34, %54, %74, %94 in 1 : vector<8x32xf32>, vector<8x32xf32>, vector<8x32xf32>, vector<8x32xf32> -> vector<8x128xf32>
    %c0_32 = arith.constant 0 : index
    %c0_33 = arith.constant 0 : index
    %c0_34 = arith.constant 0 : index
    %96 = vector.load %arg8[%c0_32, %c0_33, %c0_34] : memref<1x128x128xbf16, #tpu.memory_space<vmem>>, vector<1x128x128xbf16>
    %97 = vector.shape_cast %96 : vector<1x128x128xbf16> to vector<128x128xbf16>
    %98 = arith.truncf %95 : vector<8x128xf32> to vector<8x128xbf16>
    %cst_35 = arith.constant dense<0.000000e+00> : vector<8x128xf32>
    %99 = tpu.matmul %98, %97, %cst_35 {dimension_numbers = #tpu.dot_dimension_numbers<[1], [0], [0], [1], [0, 0, 1, 1], [], []>} : vector<8x128xbf16>, vector<128x128xbf16>, vector<8x128xf32> -> vector<8x128xf32>
    %c0_36 = arith.constant 0 : index
    %c0_37 = arith.constant 0 : index
    %c0_38 = arith.constant 0 : index
    %100 = vector.load %arg9[%c0_36, %c0_37, %c0_38] : memref<1x1x128xf32, #tpu.memory_space<vmem>>, vector<1x1x128xf32>
    %101 = vector.shape_cast %100 : vector<1x1x128xf32> to vector<1x128xf32>
    %102 = vector.broadcast %101 : vector<1x128xf32> to vector<8x128xf32>
    %103 = arith.addf %99, %102 : vector<8x128xf32>
    %104 = arith.addf %103, %4 : vector<8x128xf32>
    %c0_39 = arith.constant 0 : index
    %c0_40 = arith.constant 0 : index
    %c0_41 = arith.constant 0 : index
    %105 = vector.load %arg10[%c0_39, %c0_40, %c0_41] : memref<1x1x128xf32, #tpu.memory_space<vmem>>, vector<1x1x128xf32>
    %106 = vector.shape_cast %105 : vector<1x1x128xf32> to vector<1x128xf32>
    %c0_42 = arith.constant 0 : index
    %c0_43 = arith.constant 0 : index
    %c0_44 = arith.constant 0 : index
    %107 = vector.load %arg11[%c0_42, %c0_43, %c0_44] : memref<1x1x128xf32, #tpu.memory_space<vmem>>, vector<1x1x128xf32>
    %108 = vector.shape_cast %107 : vector<1x1x128xf32> to vector<1x128xf32>
    %cst_45 = arith.constant dense<0.000000e+00> : vector<8xf32>
    %109 = vector.multi_reduction <add>, %104, %cst_45 [1] : vector<8x128xf32> to vector<8xf32>
    %110 = vector.shape_cast %109 : vector<8xf32> to vector<8x1xf32>
    %cst_46 = arith.constant 1.280000e+02 : f32
    %111 = vector.broadcast %cst_46 : f32 to vector<8x1xf32>
    %112 = arith.divf %110, %111 : vector<8x1xf32>
    %113 = vector.broadcast %112 : vector<8x1xf32> to vector<8x128xf32>
    %114 = arith.subf %104, %113 : vector<8x128xf32>
    %115 = arith.mulf %114, %114 : vector<8x128xf32>
    %cst_47 = arith.constant dense<0.000000e+00> : vector<8xf32>
    %116 = vector.multi_reduction <add>, %115, %cst_47 [1] : vector<8x128xf32> to vector<8xf32>
    %117 = vector.shape_cast %116 : vector<8xf32> to vector<8x1xf32>
    %cst_48 = arith.constant 1.280000e+02 : f32
    %118 = vector.broadcast %cst_48 : f32 to vector<8x1xf32>
    %119 = arith.divf %117, %118 : vector<8x1xf32>
    %cst_49 = arith.constant 9.99999974E-6 : f32
    %120 = vector.broadcast %cst_49 : f32 to vector<8x1xf32>
    %121 = arith.addf %119, %120 : vector<8x1xf32>
    %122 = math.rsqrt %121 : vector<8x1xf32>
    %123 = vector.broadcast %122 : vector<8x1xf32> to vector<8x128xf32>
    %124 = arith.mulf %114, %123 : vector<8x128xf32>
    %125 = vector.broadcast %106 : vector<1x128xf32> to vector<8x128xf32>
    %126 = arith.mulf %124, %125 : vector<8x128xf32>
    %127 = vector.broadcast %108 : vector<1x128xf32> to vector<8x128xf32>
    %128 = arith.addf %126, %127 : vector<8x128xf32>
    %c0_50 = arith.constant 0 : index
    %c0_51 = arith.constant 0 : index
    %c0_52 = arith.constant 0 : index
    %129 = vector.load %arg12[%c0_50, %c0_51, %c0_52] : memref<1x128x512xbf16, #tpu.memory_space<vmem>>, vector<1x128x512xbf16>
    %130 = vector.shape_cast %129 : vector<1x128x512xbf16> to vector<128x512xbf16>
    %131 = arith.truncf %128 : vector<8x128xf32> to vector<8x128xbf16>
    %cst_53 = arith.constant dense<0.000000e+00> : vector<8x512xf32>
    %132 = tpu.matmul %131, %130, %cst_53 {dimension_numbers = #tpu.dot_dimension_numbers<[1], [0], [0], [1], [0, 0, 1, 1], [], []>} : vector<8x128xbf16>, vector<128x512xbf16>, vector<8x512xf32> -> vector<8x512xf32>
    %c0_54 = arith.constant 0 : index
    %c0_55 = arith.constant 0 : index
    %c0_56 = arith.constant 0 : index
    %133 = vector.load %arg13[%c0_54, %c0_55, %c0_56] : memref<1x1x512xf32, #tpu.memory_space<vmem>>, vector<1x1x512xf32>
    %134 = vector.shape_cast %133 : vector<1x1x512xf32> to vector<1x512xf32>
    %135 = vector.broadcast %134 : vector<1x512xf32> to vector<8x512xf32>
    %136 = arith.addf %132, %135 : vector<8x512xf32>
    %cst_57 = arith.constant 5.000000e-01 : f32
    %137 = vector.broadcast %cst_57 : f32 to vector<8x512xf32>
    %138 = arith.mulf %137, %136 : vector<8x512xf32>
    %cst_58 = arith.constant 4.471500e-02 : f32
    %139 = vector.broadcast %cst_58 : f32 to vector<8x512xf32>
    %140 = arith.mulf %139, %136 : vector<8x512xf32>
    %141 = arith.mulf %140, %136 : vector<8x512xf32>
    %142 = arith.mulf %141, %136 : vector<8x512xf32>
    %143 = arith.addf %136, %142 : vector<8x512xf32>
    %cst_59 = arith.constant 0.797884583 : f32
    %144 = vector.broadcast %cst_59 : f32 to vector<8x512xf32>
    %145 = arith.mulf %144, %143 : vector<8x512xf32>
    %146 = math.tanh %145 : vector<8x512xf32>
    %cst_60 = arith.constant 1.000000e+00 : f32
    %147 = vector.broadcast %cst_60 : f32 to vector<8x512xf32>
    %148 = arith.addf %147, %146 : vector<8x512xf32>
    %149 = arith.mulf %138, %148 : vector<8x512xf32>
    %c0_61 = arith.constant 0 : index
    %c0_62 = arith.constant 0 : index
    %c0_63 = arith.constant 0 : index
    %150 = vector.load %arg14[%c0_61, %c0_62, %c0_63] : memref<1x512x128xbf16, #tpu.memory_space<vmem>>, vector<1x512x128xbf16>
    %151 = vector.shape_cast %150 : vector<1x512x128xbf16> to vector<512x128xbf16>
    %152 = arith.truncf %149 : vector<8x512xf32> to vector<8x512xbf16>
    %cst_64 = arith.constant dense<0.000000e+00> : vector<8x128xf32>
    %153 = tpu.matmul %152, %151, %cst_64 {dimension_numbers = #tpu.dot_dimension_numbers<[1], [0], [0], [1], [0, 0, 1, 1], [], []>} : vector<8x512xbf16>, vector<512x128xbf16>, vector<8x128xf32> -> vector<8x128xf32>
    %c0_65 = arith.constant 0 : index
    %c0_66 = arith.constant 0 : index
    %c0_67 = arith.constant 0 : index
    %154 = vector.load %arg15[%c0_65, %c0_66, %c0_67] : memref<1x1x128xf32, #tpu.memory_space<vmem>>, vector<1x1x128xf32>
    %155 = vector.shape_cast %154 : vector<1x1x128xf32> to vector<1x128xf32>
    %156 = vector.broadcast %155 : vector<1x128xf32> to vector<8x128xf32>
    %157 = arith.addf %153, %156 : vector<8x128xf32>
    %158 = arith.addf %157, %128 : vector<8x128xf32>
    %c0_68 = arith.constant 0 : index
    %c0_69 = arith.constant 0 : index
    %c0_70 = arith.constant 0 : index
    %159 = vector.load %arg16[%c0_68, %c0_69, %c0_70] : memref<1x1x128xf32, #tpu.memory_space<vmem>>, vector<1x1x128xf32>
    %160 = vector.shape_cast %159 : vector<1x1x128xf32> to vector<1x128xf32>
    %c0_71 = arith.constant 0 : index
    %c0_72 = arith.constant 0 : index
    %c0_73 = arith.constant 0 : index
    %161 = vector.load %arg17[%c0_71, %c0_72, %c0_73] : memref<1x1x128xf32, #tpu.memory_space<vmem>>, vector<1x1x128xf32>
    %162 = vector.shape_cast %161 : vector<1x1x128xf32> to vector<1x128xf32>
    %cst_74 = arith.constant dense<0.000000e+00> : vector<8xf32>
    %163 = vector.multi_reduction <add>, %158, %cst_74 [1] : vector<8x128xf32> to vector<8xf32>
    %164 = vector.shape_cast %163 : vector<8xf32> to vector<8x1xf32>
    %cst_75 = arith.constant 1.280000e+02 : f32
    %165 = vector.broadcast %cst_75 : f32 to vector<8x1xf32>
    %166 = arith.divf %164, %165 : vector<8x1xf32>
    %167 = vector.broadcast %166 : vector<8x1xf32> to vector<8x128xf32>
    %168 = arith.subf %158, %167 : vector<8x128xf32>
    %169 = arith.mulf %168, %168 : vector<8x128xf32>
    %cst_76 = arith.constant dense<0.000000e+00> : vector<8xf32>
    %170 = vector.multi_reduction <add>, %169, %cst_76 [1] : vector<8x128xf32> to vector<8xf32>
    %171 = vector.shape_cast %170 : vector<8xf32> to vector<8x1xf32>
    %cst_77 = arith.constant 1.280000e+02 : f32
    %172 = vector.broadcast %cst_77 : f32 to vector<8x1xf32>
    %173 = arith.divf %171, %172 : vector<8x1xf32>
    %cst_78 = arith.constant 9.99999974E-6 : f32
    %174 = vector.broadcast %cst_78 : f32 to vector<8x1xf32>
    %175 = arith.addf %173, %174 : vector<8x1xf32>
    %176 = math.rsqrt %175 : vector<8x1xf32>
    %177 = vector.broadcast %176 : vector<8x1xf32> to vector<8x128xf32>
    %178 = arith.mulf %168, %177 : vector<8x128xf32>
    %179 = vector.broadcast %160 : vector<1x128xf32> to vector<8x128xf32>
    %180 = arith.mulf %178, %179 : vector<8x128xf32>
    %181 = vector.broadcast %162 : vector<1x128xf32> to vector<8x128xf32>
    %182 = arith.addf %180, %181 : vector<8x128xf32>
    %c0_79 = arith.constant 0 : index
    %c0_80 = arith.constant 0 : index
    %c0_81 = arith.constant 0 : index
    %183 = vector.load %arg18[%c0_79, %c0_80, %c0_81] : memref<1x8x128xf32, #tpu.memory_space<vmem>>, vector<1x8x128xf32>
    %184 = vector.shape_cast %183 : vector<1x8x128xf32> to vector<8x128xf32>
    %185 = vector.shape_cast %182 : vector<8x128xf32> to vector<1x8x128xf32>
    tpu.vector_store %arg18[%c0_79, %c0_80, %c0_81], %185 {strides = array<i32>} : memref<1x8x128xf32, #tpu.memory_space<vmem>>, vector<1x8x128xf32>,
    return
  }
  func.func @transform_0(%arg0: i32, %arg1: i32) -> (i32, i32, i32) {
    %c0_i32 = arith.constant 0 : i32
    %c0_i32_0 = arith.constant 0 : i32
    %c0_i32_1 = arith.constant 0 : i32
    return %arg0, %c0_i32, %c0_i32_0 : i32, i32, i32
  }
  func.func @transform_1(%arg0: i32, %arg1: i32) -> (i32, i32, i32) {
    %c0_i32 = arith.constant 0 : i32
    %c0_i32_0 = arith.constant 0 : i32
    %c0_i32_1 = arith.constant 0 : i32
    return %arg0, %c0_i32, %c0_i32_0 : i32, i32, i32
  }
  func.func @transform_2(%arg0: i32, %arg1: i32) -> (i32, i32) {
    %c0_i32 = arith.constant 0 : i32
    %c0_i32_0 = arith.constant 0 : i32
    %c0_i32_1 = arith.constant 0 : i32
    return %c0_i32, %c0_i32_0 : i32, i32
  }
  func.func @transform_3(%arg0: i32, %arg1: i32) -> (i32, i32) {
    %c0_i32 = arith.constant 0 : i32
    %c0_i32_0 = arith.constant 0 : i32
    %c0_i32_1 = arith.constant 0 : i32
    return %c0_i32, %c0_i32_0 : i32, i32
  }
  func.func @transform_4(%arg0: i32, %arg1: i32) -> (i32, i32, i32) {
    %c0_i32 = arith.constant 0 : i32
    %c0_i32_0 = arith.constant 0 : i32
    %c0_i32_1 = arith.constant 0 : i32
    return %arg1, %c0_i32, %c0_i32_0 : i32, i32, i32
  }
  func.func @transform_5(%arg0: i32, %arg1: i32) -> (i32, i32, i32) {
    %c0_i32 = arith.constant 0 : i32
    %c0_i32_0 = arith.constant 0 : i32
    %c0_i32_1 = arith.constant 0 : i32
    return %arg1, %c0_i32, %c0_i32_0 : i32, i32, i32
  }
  func.func @transform_6(%arg0: i32, %arg1: i32) -> (i32, i32, i32) {
    %c0_i32 = arith.constant 0 : i32
    %c0_i32_0 = arith.constant 0 : i32
    %c0_i32_1 = arith.constant 0 : i32
    return %arg1, %c0_i32, %c0_i32_0 : i32, i32, i32
  }
  func.func @transform_7(%arg0: i32, %arg1: i32) -> (i32, i32, i32) {
    %c0_i32 = arith.constant 0 : i32
    %c0_i32_0 = arith.constant 0 : i32
    %c0_i32_1 = arith.constant 0 : i32
    return %arg1, %c0_i32, %c0_i32_0 : i32, i32, i32
  }
  func.func @transform_8(%arg0: i32, %arg1: i32) -> (i32, i32, i32) {
    %c0_i32 = arith.constant 0 : i32
    %c0_i32_0 = arith.constant 0 : i32
    %c0_i32_1 = arith.constant 0 : i32
    return %arg1, %c0_i32, %c0_i32_0 : i32, i32, i32
  }
  func.func @transform_9(%arg0: i32, %arg1: i32) -> (i32, i32, i32) {
    %c0_i32 = arith.constant 0 : i32
    %c0_i32_0 = arith.constant 0 : i32
    %c0_i32_1 = arith.constant 0 : i32
    return %arg1, %c0_i32, %c0_i32_0 : i32, i32, i32
  }
  func.func @transform_10(%arg0: i32, %arg1: i32) -> (i32, i32, i32) {
    %c0_i32 = arith.constant 0 : i32
    %c0_i32_0 = arith.constant 0 : i32
    %c0_i32_1 = arith.constant 0 : i32
    return %arg1, %c0_i32, %c0_i32_0 : i32, i32, i32
  }
  func.func @transform_11(%arg0: i32, %arg1: i32) -> (i32, i32, i32) {
    %c0_i32 = arith.constant 0 : i32
    %c0_i32_0 = arith.constant 0 : i32
    %c0_i32_1 = arith.constant 0 : i32
    return %arg1, %c0_i32, %c0_i32_0 : i32, i32, i32
  }
  func.func @transform_12(%arg0: i32, %arg1: i32) -> (i32, i32, i32) {
    %c0_i32 = arith.constant 0 : i32
    %c0_i32_0 = arith.constant 0 : i32
    %c0_i32_1 = arith.constant 0 : i32
    return %arg1, %c0_i32, %c0_i32_0 : i32, i32, i32
  }
  func.func @transform_13(%arg0: i32, %arg1: i32) -> (i32, i32, i32) {
    %c0_i32 = arith.constant 0 : i32
    %c0_i32_0 = arith.constant 0 : i32
    %c0_i32_1 = arith.constant 0 : i32
    return %arg1, %c0_i32, %c0_i32_0 : i32, i32, i32
  }
  func.func @transform_14(%arg0: i32, %arg1: i32) -> (i32, i32, i32) {
    %c0_i32 = arith.constant 0 : i32
    %c0_i32_0 = arith.constant 0 : i32
    %c0_i32_1 = arith.constant 0 : i32
    return %arg1, %c0_i32, %c0_i32_0 : i32, i32, i32
  }
  func.func @transform_15(%arg0: i32, %arg1: i32) -> (i32, i32, i32) {
    %c0_i32 = arith.constant 0 : i32
    %c0_i32_0 = arith.constant 0 : i32
    %c0_i32_1 = arith.constant 0 : i32
    return %arg1, %c0_i32, %c0_i32_0 : i32, i32, i32
  }
  func.func @transform_16(%arg0: i32, %arg1: i32) -> (i32, i32, i32) {
    %c0_i32 = arith.constant 0 : i32
    %c0_i32_0 = arith.constant 0 : i32
    %c0_i32_1 = arith.constant 0 : i32
    return %arg0, %c0_i32, %c0_i32_0 : i32, i32, i32
  }
}

</mosaic_0001>

<llo_original>
// kernel: tpu_custom_call.1
$region0: #{tpu_custom_call.1}
  #allocation0 [shape = 'u32[]', space=smem, size = 0x4, offset = 0x4, fixed_abs, tag = 'smem constant byte address 0x4 - core index']
  #allocation1 [shape = 'u32[144,128]{1,0:T(1,128)}', space=vmem, size = 0x12000, scoped, tag = 'internal scratch']
  %s0 = inlined_call_operand.hbm [shape: f32[2,8,128], index: 0, kind: input, shape index: {}]
  %s1 = inlined_call_operand.hbm [shape: f32[2,1,8], index: 1, kind: input, shape index: {}]
  %s2 = inlined_call_operand.hbm [shape: f32[1,128], index: 2, kind: input, shape index: {}]
  %s3 = inlined_call_operand.hbm [shape: f32[1,128], index: 3, kind: input, shape index: {}]
  %s4 = inlined_call_operand.hbm [shape: bf16[2,128,384], index: 4, kind: input, shape index: {}]
  %s5 = inlined_call_operand.vmem [shape: f32[2,1,384], index: 5, kind: input, shape index: {}]
  %s6 = inlined_call_operand.hbm [shape: bf16[2,128,128], index: 6, kind: input, shape index: {}]
  %s7 = inlined_call_operand.vmem [shape: f32[2,1,128], index: 7, kind: input, shape index: {}]
  %s8 = inlined_call_operand.hbm [shape: f32[2,1,128], index: 8, kind: input, shape index: {}]
  %s9 = inlined_call_operand.hbm [shape: f32[2,1,128], index: 9, kind: input, shape index: {}]
  %s10 = inlined_call_operand.hbm [shape: bf16[2,128,512], index: 10, kind: input, shape index: {}]
  %s11 = inlined_call_operand.vmem [shape: f32[2,1,512], index: 11, kind: input, shape index: {}]
  %s12 = inlined_call_operand.hbm [shape: bf16[2,512,128], index: 12, kind: input, shape index: {}]
  %s13 = inlined_call_operand.vmem [shape: f32[2,1,128], index: 13, kind: input, shape index: {}]
  %s14 = inlined_call_operand.vmem [shape: f32[2,1,128], index: 14, kind: input, shape index: {}]
  %s15 = inlined_call_operand.vmem [shape: f32[2,1,128], index: 15, kind: input, shape index: {}]
  %s16 = inlined_call_operand.hbm [shape: f32[2,8,128], index: 16, kind: output, shape index: {}]
  %s17 = sld [smem:[#allocation0]]
  $region141: #{tpu_custom_call.1} parent=0
    _
  %s19 = ssub.s32 1, %s17
  %s20 = scalar_select 0, %s19, %s17
  $region1: #{tpu_custom_call.1} parent=0
    #allocation2 [shape = 'u8[8192]{0}', space=vmem, size = 0x2000, scoped, tag = 'input window, operand 0']
    #allocation3 [shape = 's32[2]{0}', space=sflag, size = 0x8, scoped, tag = 'scoped memory for tpu_custom_call.1']
    #allocation4 [shape = 's32[2]{0}', space=sflag, size = 0x8, scoped, tag = 'scoped memory for tpu_custom_call.1']
    #allocation5 [shape = 'u8[1024]{0}', space=vmem, size = 0x400, scoped, tag = 'input window, operand 1']
    #allocation6 [shape = 's32[2]{0}', space=sflag, size = 0x8, scoped, tag = 'scoped memory for tpu_custom_call.1']
    #allocation7 [shape = 'u8[512]{0}', space=vmem, size = 0x400, scoped, tag = 'input window, operand 2, single buffered']
    #allocation8 [shape = 'u8[512]{0}', space=vmem, size = 0x400, scoped, tag = 'input window, operand 3, single buffered']
    #allocation9 [shape = 's32[1]{0}', space=sflag, size = 0x4, scoped, tag = 'scoped memory for tpu_custom_call.1']
    #allocation10 [shape = 'u8[196608]{0}', space=vmem, size = 0x30000, scoped, tag = 'input window, operand 4']
    #allocation11 [shape = 'u8[65536]{0}', space=vmem, size = 0x10000, scoped, tag = 'input window, operand 6']
    #allocation12 [shape = 'u8[1024]{0}', space=vmem, size = 0x400, scoped, tag = 'input window, operand 8']
    #allocation13 [shape = 'u8[1024]{0}', space=vmem, size = 0x400, scoped, tag = 'input window, operand 9']
    #allocation14 [shape = 'u8[262144]{0}', space=vmem, size = 0x40000, scoped, tag = 'input window, operand 10']
    #allocation15 [shape = 'u8[262144]{0}', space=vmem, size = 0x40000, scoped, tag = 'input window, operand 12']
    #allocation16 [shape = 'u8[8192]{0}', space=vmem, size = 0x2000, scoped, tag = 'output window, operand 0']
    %21 = vsyncpa [#allocation3], 0
    %s22 = scalar_lea.sflag [#allocation3], 1
    %23 = vsyncpa %s22, 0
    %24 = vsyncpa [#allocation6], 0
    %s25 = scalar_lea.sflag [#allocation6], 1
    %26 = vsyncpa %s25, 0
    %27 = vsyncpa [#allocation9], 0
    %28 = vsyncpa [#allocation4], 0
    %s29 = scalar_lea.sflag [#allocation4], 1
    %30 = vsyncpa %s29, 0
    loop: start=0, step=1, limit=6
    $region2: #{tpu_custom_call.1} parent=1 // loop_pre_header
      _
    $region3: #{tpu_custom_call.1} parent=1 // loop_header
      %s32 = sphi 0, %s36
      %p33 = scmp.ge.s32.totalorder %s32, 6
      %s39 = sphi 0, %s51
      %s40 = sphi 0, %s47
      %s41 = sphi 0, %s39
      %s42 = sphi 0, %s40
      %s43 = sphi 0, %s41
      %s44 = sphi 0, %s42
      %s54 = sphi 0, %s56
      %s57 = sphi 0, %s54
      %s58 = sphi 0, %s57
      %s74 = sphi 0, %s58
      %s80 = sphi 0, %s82
      %s83 = sphi 0, %s80
      %s84 = sphi 0, %s83
      %s100 = sphi 0, %s84
      %s104 = sphi 0, %s104
      %s106 = sphi 0, %s104
      %s107 = sphi 0, %s106
      %s121 = sphi 0, %s107
      %s125 = sphi 0, %s125
      %s127 = sphi 0, %s125
      %s128 = sphi 0, %s127
      %s142 = sphi 0, %s128
      %s148 = sphi 0, %s150
      %s151 = sphi 0, %s148
      %s152 = sphi 0, %s151
      %s168 = sphi 0, %s152
      %s174 = sphi 0, %s176
      %s177 = sphi 0, %s174
      %s178 = sphi 0, %s177
      %s194 = sphi 0, %s178
      %s200 = sphi 0, %s202
      %s203 = sphi 0, %s200
      %s204 = sphi 0, %s203
      %s220 = sphi 0, %s204
      %s226 = sphi 0, %s228
      %s229 = sphi 0, %s226
      %s230 = sphi 0, %s229
      %s246 = sphi 0, %s230
      %s252 = sphi 0, %s254
      %s255 = sphi 0, %s252
      %s256 = sphi 0, %s255
      %s272 = sphi 0, %s256
      %s278 = sphi 0, %s280
      %s281 = sphi 0, %s278
      %s282 = sphi 0, %s281
      %s298 = sphi 0, %s282
      %s304 = sphi 0, %s306
      %s307 = sphi 0, %s304
      %s308 = sphi 0, %s307
      %s324 = sphi 0, %s308
      %s330 = sphi 0, %s332
      %s333 = sphi 0, %s330
      %s334 = sphi 0, %s333
      %s350 = sphi 0, %s334
      %s356 = sphi 0, %s358
      %s359 = sphi 0, %s356
      %s360 = sphi 0, %s359
      %s376 = sphi 0, %s360
      %s382 = sphi 0, %s384
      %s385 = sphi 0, %s382
      %s386 = sphi 0, %s385
      %s402 = sphi 0, %s386
      %s408 = sphi 0, %s410
      %s411 = sphi 0, %s408
      %s412 = sphi 0, %s411
      %s428 = sphi 0, %s412
      %s434 = sphi 0, %s436
      %s437 = sphi 0, %s434
      %s438 = sphi 0, %s437
      %s454 = sphi 0, %s438
      %s460 = sphi 0, %s462
      %s463 = sphi 0, %s460
      %s464 = sphi 0, %s463
      %s480 = sphi 0, %s464
    $region4: #{tpu_custom_call.1} parent=1 // loop_header_branch
      %35 = sbr.rel (%p33) target = $region8
    $region5: #{tpu_custom_call.1} parent=1 // loop_body
      %s37 = ssub.s32 %s32, 1
      %s38 = ssub.s32 %s32, 2
      %s45 = sadd.s32 1, %s40
      %p46 = scmp.ge.s32.totalorder %s45, 2
      %s47 = scalar_select %p46, 0, %s45
      %s48 = sadd.s32 1, %s39
      %s49 = scalar_select %p46, %s48, %s39
      %p50 = scmp.ge.s32.totalorder %s49, 2
      %s51 = scalar_select %p50, 0, %s49
      %s52 = ssub.s32 %s39, %s51
      %p53 = scmp.eq.s32.totalorder %s52, 0
      %s55 = sadd.s32 %s54, 1
      %s56 = scalar_select %p53, %s54, %s55
      %p59 = pneg %p53
      %p60 = scmp.eq.s32.totalorder %s32, 3
      %p61 = por %p59, %p60
      %p62 = scmp.ne.s32.totalorder %s54, %s57
      %p63 = scmp.eq.s32.totalorder %s32, 0
      %p64 = por %p62, %p63
      %p65 = scmp.ne.s32.totalorder %s54, %s57
      %p66 = scmp.eq.s32.totalorder %s37, 3
      %p67 = por %p65, %p66
      %p68 = scmp.ne.s32.totalorder %s57, %s58
      %p69 = scmp.eq.s32.totalorder %s37, 0
      %p70 = por %p68, %p69
      %p71 = scmp.ne.s32.totalorder %s57, %s58
      %p72 = scmp.eq.s32.totalorder %s38, 3
      %p73 = por %p71, %p72
      %p75 = scmp.ne.s32.totalorder %s58, %s74
      %p76 = scmp.eq.s32.totalorder %s38, 0
      %p77 = por %p75, %p76
      %s78 = ssub.s32 %s39, %s51
      %p79 = scmp.eq.s32.totalorder %s78, 0
      %s81 = sadd.s32 %s80, 1
      %s82 = scalar_select %p79, %s80, %s81
      %p85 = pneg %p79
      %p86 = scmp.eq.s32.totalorder %s32, 3
      %p87 = por %p85, %p86
      %p88 = scmp.ne.s32.totalorder %s80, %s83
      %p89 = scmp.eq.s32.totalorder %s32, 0
      %p90 = por %p88, %p89
      %p91 = scmp.ne.s32.totalorder %s80, %s83
      %p92 = scmp.eq.s32.totalorder %s37, 3
      %p93 = por %p91, %p92
      %p94 = scmp.ne.s32.totalorder %s83, %s84
      %p95 = scmp.eq.s32.totalorder %s37, 0
      %p96 = por %p94, %p95
      %p97 = scmp.ne.s32.totalorder %s83, %s84
      %p98 = scmp.eq.s32.totalorder %s38, 3
      %p99 = por %p97, %p98
      %p101 = scmp.ne.s32.totalorder %s84, %s100
      %p102 = scmp.eq.s32.totalorder %s38, 0
      %p103 = por %p101, %p102
      %s105 = sadd.s32 %s104, 1
      %p108 = scmp.eq.s32.totalorder %s32, 3
      %p109 = scmp.ne.s32.totalorder %s104, %s106
      %p110 = scmp.eq.s32.totalorder %s32, 0
      %p111 = por %p109, %p110
      %p112 = scmp.ne.s32.totalorder %s104, %s106
      %p113 = scmp.eq.s32.totalorder %s37, 3
      %p114 = por %p112, %p113
      %p115 = scmp.ne.s32.totalorder %s106, %s107
      %p116 = scmp.eq.s32.totalorder %s37, 0
      %p117 = por %p115, %p116
      %p118 = scmp.ne.s32.totalorder %s106, %s107
      %p119 = scmp.eq.s32.totalorder %s38, 3
      %p120 = por %p118, %p119
      %p122 = scmp.ne.s32.totalorder %s107, %s121
      %p123 = scmp.eq.s32.totalorder %s38, 0
      %p124 = por %p122, %p123
      %s126 = sadd.s32 %s125, 1
      %p129 = scmp.eq.s32.totalorder %s32, 3
      %p130 = scmp.ne.s32.totalorder %s125, %s127
      %p131 = scmp.eq.s32.totalorder %s32, 0
      %p132 = por %p130, %p131
      %p133 = scmp.ne.s32.totalorder %s125, %s127
      %p134 = scmp.eq.s32.totalorder %s37, 3
      %p135 = por %p133, %p134
      %p136 = scmp.ne.s32.totalorder %s127, %s128
      %p137 = scmp.eq.s32.totalorder %s37, 0
      %p138 = por %p136, %p137
      %p139 = scmp.ne.s32.totalorder %s127, %s128
      %p140 = scmp.eq.s32.totalorder %s38, 3
      %p141 = por %p139, %p140
      %p143 = scmp.ne.s32.totalorder %s128, %s142
      %p144 = scmp.eq.s32.totalorder %s38, 0
      %p145 = por %p143, %p144
      %s146 = ssub.s32 %s40, %s47
      %p147 = scmp.eq.s32.totalorder %s146, 0
      %s149 = sadd.s32 %s148, 1
      %s150 = scalar_select %p147, %s148, %s149
      %p153 = pneg %p147
      %p154 = scmp.eq.s32.totalorder %s32, 3
      %p155 = por %p153, %p154
      %p156 = scmp.ne.s32.totalorder %s148, %s151
      %p157 = scmp.eq.s32.totalorder %s32, 0
      %p158 = por %p156, %p157
      %p159 = scmp.ne.s32.totalorder %s148, %s151
      %p160 = scmp.eq.s32.totalorder %s37, 3
      %p161 = por %p159, %p160
      %p162 = scmp.ne.s32.totalorder %s151, %s152
      %p163 = scmp.eq.s32.totalorder %s37, 0
      %p164 = por %p162, %p163
      %p165 = scmp.ne.s32.totalorder %s151, %s152
      %p166 = scmp.eq.s32.totalorder %s38, 3
      %p167 = por %p165, %p166
      %p169 = scmp.ne.s32.totalorder %s152, %s168
      %p170 = scmp.eq.s32.totalorder %s38, 0
      %p171 = por %p169, %p170
      %s172 = ssub.s32 %s40, %s47
      %p173 = scmp.eq.s32.totalorder %s172, 0
      %s175 = sadd.s32 %s174, 1
      %s176 = scalar_select %p173, %s174, %s175
      %p179 = pneg %p173
      %p180 = scmp.eq.s32.totalorder %s32, 3
      %p181 = por %p179, %p180
      %p182 = scmp.ne.s32.totalorder %s174, %s177
      %p183 = scmp.eq.s32.totalorder %s32, 0
      %p184 = por %p182, %p183
      %p185 = scmp.ne.s32.totalorder %s174, %s177
      %p186 = scmp.eq.s32.totalorder %s37, 3
      %p187 = por %p185, %p186
      %p188 = scmp.ne.s32.totalorder %s177, %s178
      %p189 = scmp.eq.s32.totalorder %s37, 0
      %p190 = por %p188, %p189
      %p191 = scmp.ne.s32.totalorder %s177, %s178
      %p192 = scmp.eq.s32.totalorder %s38, 3
      %p193 = por %p191, %p192
      %p195 = scmp.ne.s32.totalorder %s178, %s194
      %p196 = scmp.eq.s32.totalorder %s38, 0
      %p197 = por %p195, %p196
      %s198 = ssub.s32 %s40, %s47
      %p199 = scmp.eq.s32.totalorder %s198, 0
      %s201 = sadd.s32 %s200, 1
      %s202 = scalar_select %p199, %s200, %s201
      %p205 = pneg %p199
      %p206 = scmp.eq.s32.totalorder %s32, 3
      %p207 = por %p205, %p206
      %p208 = scmp.ne.s32.totalorder %s200, %s203
      %p209 = scmp.eq.s32.totalorder %s32, 0
      %p210 = por %p208, %p209
      %p211 = scmp.ne.s32.totalorder %s200, %s203
      %p212 = scmp.eq.s32.totalorder %s37, 3
      %p213 = por %p211, %p212
      %p214 = scmp.ne.s32.totalorder %s203, %s204
      %p215 = scmp.eq.s32.totalorder %s37, 0
      %p216 = por %p214, %p215
      %p217 = scmp.ne.s32.totalorder %s203, %s204
      %p218 = scmp.eq.s32.totalorder %s38, 3
      %p219 = por %p217, %p218
      %p221 = scmp.ne.s32.totalorder %s204, %s220
      %p222 = scmp.eq.s32.totalorder %s38, 0
      %p223 = por %p221, %p222
      %s224 = ssub.s32 %s40, %s47
      %p225 = scmp.eq.s32.totalorder %s224, 0
      %s227 = sadd.s32 %s226, 1
      %s228 = scalar_select %p225, %s226, %s227
      %p231 = pneg %p225
      %p232 = scmp.eq.s32.totalorder %s32, 3
      %p233 = por %p231, %p232
      %p234 = scmp.ne.s32.totalorder %s226, %s229
      %p235 = scmp.eq.s32.totalorder %s32, 0
      %p236 = por %p234, %p235
      %p237 = scmp.ne.s32.totalorder %s226, %s229
      %p238 = scmp.eq.s32.totalorder %s37, 3
      %p239 = por %p237, %p238
      %p240 = scmp.ne.s32.totalorder %s229, %s230
      %p241 = scmp.eq.s32.totalorder %s37, 0
      %p242 = por %p240, %p241
      %p243 = scmp.ne.s32.totalorder %s229, %s230
      %p244 = scmp.eq.s32.totalorder %s38, 3
      %p245 = por %p243, %p244
      %p247 = scmp.ne.s32.totalorder %s230, %s246
      %p248 = scmp.eq.s32.totalorder %s38, 0
      %p249 = por %p247, %p248
      %s250 = ssub.s32 %s40, %s47
      %p251 = scmp.eq.s32.totalorder %s250, 0
      %s253 = sadd.s32 %s252, 1
      %s254 = scalar_select %p251, %s252, %s253
      %p257 = pneg %p251
      %p258 = scmp.eq.s32.totalorder %s32, 3
      %p259 = por %p257, %p258
      %p260 = scmp.ne.s32.totalorder %s252, %s255
      %p261 = scmp.eq.s32.totalorder %s32, 0
      %p262 = por %p260, %p261
      %p263 = scmp.ne.s32.totalorder %s252, %s255
      %p264 = scmp.eq.s32.totalorder %s37, 3
      %p265 = por %p263, %p264
      %p266 = scmp.ne.s32.totalorder %s255, %s256
      %p267 = scmp.eq.s32.totalorder %s37, 0
      %p268 = por %p266, %p267
      %p269 = scmp.ne.s32.totalorder %s255, %s256
      %p270 = scmp.eq.s32.totalorder %s38, 3
      %p271 = por %p269, %p270
      %p273 = scmp.ne.s32.totalorder %s256, %s272
      %p274 = scmp.eq.s32.totalorder %s38, 0
      %p275 = por %p273, %p274
      %s276 = ssub.s32 %s40, %s47
      %p277 = scmp.eq.s32.totalorder %s276, 0
      %s279 = sadd.s32 %s278, 1
      %s280 = scalar_select %p277, %s278, %s279
      %p283 = pneg %p277
      %p284 = scmp.eq.s32.totalorder %s32, 3
      %p285 = por %p283, %p284
      %p286 = scmp.ne.s32.totalorder %s278, %s281
      %p287 = scmp.eq.s32.totalorder %s32, 0
      %p288 = por %p286, %p287
      %p289 = scmp.ne.s32.totalorder %s278, %s281
      %p290 = scmp.eq.s32.totalorder %s37, 3
      %p291 = por %p289, %p290
      %p292 = scmp.ne.s32.totalorder %s281, %s282
      %p293 = scmp.eq.s32.totalorder %s37, 0
      %p294 = por %p292, %p293
      %p295 = scmp.ne.s32.totalorder %s281, %s282
      %p296 = scmp.eq.s32.totalorder %s38, 3
      %p297 = por %p295, %p296
      %p299 = scmp.ne.s32.totalorder %s282, %s298
      %p300 = scmp.eq.s32.totalorder %s38, 0
      %p301 = por %p299, %p300
      %s302 = ssub.s32 %s40, %s47
      %p303 = scmp.eq.s32.totalorder %s302, 0
      %s305 = sadd.s32 %s304, 1
      %s306 = scalar_select %p303, %s304, %s305
      %p309 = pneg %p303
      %p310 = scmp.eq.s32.totalorder %s32, 3
      %p311 = por %p309, %p310
      %p312 = scmp.ne.s32.totalorder %s304, %s307
      %p313 = scmp.eq.s32.totalorder %s32, 0
      %p314 = por %p312, %p313
      %p315 = scmp.ne.s32.totalorder %s304, %s307
      %p316 = scmp.eq.s32.totalorder %s37, 3
      %p317 = por %p315, %p316
      %p318 = scmp.ne.s32.totalorder %s307, %s308
      %p319 = scmp.eq.s32.totalorder %s37, 0
      %p320 = por %p318, %p319
      %p321 = scmp.ne.s32.totalorder %s307, %s308
      %p322 = scmp.eq.s32.totalorder %s38, 3
      %p323 = por %p321, %p322
      %p325 = scmp.ne.s32.totalorder %s308, %s324
      %p326 = scmp.eq.s32.totalorder %s38, 0
      %p327 = por %p325, %p326
      %s328 = ssub.s32 %s40, %s47
      %p329 = scmp.eq.s32.totalorder %s328, 0
      %s331 = sadd.s32 %s330, 1
      %s332 = scalar_select %p329, %s330, %s331
      %p335 = pneg %p329
      %p336 = scmp.eq.s32.totalorder %s32, 3
      %p337 = por %p335, %p336
      %p338 = scmp.ne.s32.totalorder %s330, %s333
      %p339 = scmp.eq.s32.totalorder %s32, 0
      %p340 = por %p338, %p339
      %p341 = scmp.ne.s32.totalorder %s330, %s333
      %p342 = scmp.eq.s32.totalorder %s37, 3
      %p343 = por %p341, %p342
      %p344 = scmp.ne.s32.totalorder %s333, %s334
      %p345 = scmp.eq.s32.totalorder %s37, 0
      %p346 = por %p344, %p345
      %p347 = scmp.ne.s32.totalorder %s333, %s334
      %p348 = scmp.eq.s32.totalorder %s38, 3
      %p349 = por %p347, %p348
      %p351 = scmp.ne.s32.totalorder %s334, %s350
      %p352 = scmp.eq.s32.totalorder %s38, 0
      %p353 = por %p351, %p352
      %s354 = ssub.s32 %s40, %s47
      %p355 = scmp.eq.s32.totalorder %s354, 0
      %s357 = sadd.s32 %s356, 1
      %s358 = scalar_select %p355, %s356, %s357
      %p361 = pneg %p355
      %p362 = scmp.eq.s32.totalorder %s32, 3
      %p363 = por %p361, %p362
      %p364 = scmp.ne.s32.totalorder %s356, %s359
      %p365 = scmp.eq.s32.totalorder %s32, 0
      %p366 = por %p364, %p365
      %p367 = scmp.ne.s32.totalorder %s356, %s359
      %p368 = scmp.eq.s32.totalorder %s37, 3
      %p369 = por %p367, %p368
      %p370 = scmp.ne.s32.totalorder %s359, %s360
      %p371 = scmp.eq.s32.totalorder %s37, 0
      %p372 = por %p370, %p371
      %p373 = scmp.ne.s32.totalorder %s359, %s360
      %p374 = scmp.eq.s32.totalorder %s38, 3
      %p375 = por %p373, %p374
      %p377 = scmp.ne.s32.totalorder %s360, %s376
      %p378 = scmp.eq.s32.totalorder %s38, 0
      %p379 = por %p377, %p378
      %s380 = ssub.s32 %s40, %s47
      %p381 = scmp.eq.s32.totalorder %s380, 0
      %s383 = sadd.s32 %s382, 1
      %s384 = scalar_select %p381, %s382, %s383
      %p387 = pneg %p381
      %p388 = scmp.eq.s32.totalorder %s32, 3
      %p389 = por %p387, %p388
      %p390 = scmp.ne.s32.totalorder %s382, %s385
      %p391 = scmp.eq.s32.totalorder %s32, 0
      %p392 = por %p390, %p391
      %p393 = scmp.ne.s32.totalorder %s382, %s385
      %p394 = scmp.eq.s32.totalorder %s37, 3
      %p395 = por %p393, %p394
      %p396 = scmp.ne.s32.totalorder %s385, %s386
      %p397 = scmp.eq.s32.totalorder %s37, 0
      %p398 = por %p396, %p397
      %p399 = scmp.ne.s32.totalorder %s385, %s386
      %p400 = scmp.eq.s32.totalorder %s38, 3
      %p401 = por %p399, %p400
      %p403 = scmp.ne.s32.totalorder %s386, %s402
      %p404 = scmp.eq.s32.totalorder %s38, 0
      %p405 = por %p403, %p404
      %s406 = ssub.s32 %s40, %s47
      %p407 = scmp.eq.s32.totalorder %s406, 0
      %s409 = sadd.s32 %s408, 1
      %s410 = scalar_select %p407, %s408, %s409
      %p413 = pneg %p407
      %p414 = scmp.eq.s32.totalorder %s32, 3
      %p415 = por %p413, %p414
      %p416 = scmp.ne.s32.totalorder %s408, %s411
      %p417 = scmp.eq.s32.totalorder %s32, 0
      %p418 = por %p416, %p417
      %p419 = scmp.ne.s32.totalorder %s408, %s411
      %p420 = scmp.eq.s32.totalorder %s37, 3
      %p421 = por %p419, %p420
      %p422 = scmp.ne.s32.totalorder %s411, %s412
      %p423 = scmp.eq.s32.totalorder %s37, 0
      %p424 = por %p422, %p423
      %p425 = scmp.ne.s32.totalorder %s411, %s412
      %p426 = scmp.eq.s32.totalorder %s38, 3
      %p427 = por %p425, %p426
      %p429 = scmp.ne.s32.totalorder %s412, %s428
      %p430 = scmp.eq.s32.totalorder %s38, 0
      %p431 = por %p429, %p430
      %s432 = ssub.s32 %s40, %s47
      %p433 = scmp.eq.s32.totalorder %s432, 0
      %s435 = sadd.s32 %s434, 1
      %s436 = scalar_select %p433, %s434, %s435
      %p439 = pneg %p433
      %p440 = scmp.eq.s32.totalorder %s32, 3
      %p441 = por %p439, %p440
      %p442 = scmp.ne.s32.totalorder %s434, %s437
      %p443 = scmp.eq.s32.totalorder %s32, 0
      %p444 = por %p442, %p443
      %p445 = scmp.ne.s32.totalorder %s434, %s437
      %p446 = scmp.eq.s32.totalorder %s37, 3
      %p447 = por %p445, %p446
      %p448 = scmp.ne.s32.totalorder %s437, %s438
      %p449 = scmp.eq.s32.totalorder %s37, 0
      %p450 = por %p448, %p449
      %p451 = scmp.ne.s32.totalorder %s437, %s438
      %p452 = scmp.eq.s32.totalorder %s38, 3
      %p453 = por %p451, %p452
      %p455 = scmp.ne.s32.totalorder %s438, %s454
      %p456 = scmp.eq.s32.totalorder %s38, 0
      %p457 = por %p455, %p456
      %s458 = ssub.s32 %s39, %s51
      %p459 = scmp.eq.s32.totalorder %s458, 0
      %s461 = sadd.s32 %s460, 1
      %s462 = scalar_select %p459, %s460, %s461
      %p465 = pneg %p459
      %p466 = scmp.eq.s32.totalorder %s32, 3
      %p467 = por %p465, %p466
      %p468 = scmp.ne.s32.totalorder %s460, %s463
      %p469 = scmp.eq.s32.totalorder %s32, 0
      %p470 = por %p468, %p469
      %p471 = scmp.ne.s32.totalorder %s460, %s463
      %p472 = scmp.eq.s32.totalorder %s37, 3
      %p473 = por %p471, %p472
      %p474 = scmp.ne.s32.totalorder %s463, %s464
      %p475 = scmp.eq.s32.totalorder %s37, 0
      %p476 = por %p474, %p475
      %p477 = scmp.ne.s32.totalorder %s463, %s464
      %p478 = scmp.eq.s32.totalorder %s38, 3
      %p479 = por %p477, %p478
      %p481 = scmp.ne.s32.totalorder %s464, %s480
      %p482 = scmp.eq.s32.totalorder %s38, 0
      %p483 = por %p481, %p482
      %p484 = scmp.le.s32.totalorder 1, %s32
      %p485 = scmp.lt.s32.totalorder %s32, 5
      %p486 = pnand %p484, %p485
      %p487 = pneg %p486
      // Predicated region
      $region9: #{tpu_custom_call.1} parent=5 // pred_check
        _
      $region10: #{tpu_custom_call.1} parent=5 // pred_check_branch
        %489 = sbr.rel (%p486) target = $region12
      $region11: #{tpu_custom_call.1} parent=5 // pred_region
        %s490 = ssub.s32 %s32, 1
        // Predicated region
        $region13: #{tpu_custom_call.1} parent=11 // pred_check
          %p491 = pneg %p117
        $region14: #{tpu_custom_call.1} parent=11 // pred_check_branch
          %493 = sbr.rel (%p491) target = $region16
        $region15: #{tpu_custom_call.1} parent=11 // pred_region
          %s495 = ssub.s32 16, 16
          %496 = vsyncadd [#allocation6], %s495
          %s498 = sshll.u32 [#allocation7], 4
          %s499 = int_to_ptr.vmem [resolvable:$true] %s498
          %501 = dma.hbm_to_vmem [thread:$0]  %s2, 16, %s499, [#allocation6]
        $region16: #{tpu_custom_call.1} parent=11 // pred_fallthru
          _
        // Predicated region
        $region17: #{tpu_custom_call.1} parent=11 // pred_check
          %p502 = pneg %p138
        $region18: #{tpu_custom_call.1} parent=11 // pred_check_branch
          %504 = sbr.rel (%p502) target = $region20
        $region19: #{tpu_custom_call.1} parent=11 // pred_region
          %s506 = ssub.s32 16, 16
          %507 = vsyncadd [#allocation9], %s506
          %s509 = sshll.u32 [#allocation8], 4
          %s510 = int_to_ptr.vmem [resolvable:$true] %s509
          %512 = dma.hbm_to_vmem [thread:$0]  %s3, 16, %s510, [#allocation9]
        $region20: #{tpu_custom_call.1} parent=11 // pred_fallthru
          _
      $region12: #{tpu_custom_call.1} parent=5 // pred_fallthru
        _
      %p513 = scmp.lt.s32.totalorder %s32, 4
      // Predicated region
      $region21: #{tpu_custom_call.1} parent=5 // pred_check
        %p514 = pneg %p513
      $region22: #{tpu_custom_call.1} parent=5 // pred_check_branch
        %516 = sbr.rel (%p514) target = $region24
      $region23: #{tpu_custom_call.1} parent=5 // pred_region
        // Predicated region
        $region25: #{tpu_custom_call.1} parent=23 // pred_check
          %p517 = pneg %p64
        $region26: #{tpu_custom_call.1} parent=23 // pred_check_branch
          %519 = sbr.rel (%p517) target = $region28
        $region27: #{tpu_custom_call.1} parent=23 // pred_region
          %s520 = sand.u32 %s32, 1
          %s521 = scalar_lea.sflag [#allocation3], %s520
          %s522 = sand.u32 %s54, 1
          %s523 = smul.addr %s522, 8
          %s524 = scalar_lea.vmem [#allocation2], %s523
          %s526 = ssub.s32 128, 128
          %527 = vsyncadd %s521, %s526
          %s528 = smul.addr %s39, 128
          %s529 = scalar_lea.hbm %s0, %s528
          %s531 = sshll.u32 %s524, 4
          %s532 = int_to_ptr.vmem [resolvable:$true] %s531
          %534 = dma.hbm_to_vmem [thread:$0]  %s529, 128, %s532, %s521
        $region28: #{tpu_custom_call.1} parent=23 // pred_fallthru
          _
        // Predicated region
        $region29: #{tpu_custom_call.1} parent=23 // pred_check
          %p535 = pneg %p90
        $region30: #{tpu_custom_call.1} parent=23 // pred_check_branch
          %537 = sbr.rel (%p535) target = $region32
        $region31: #{tpu_custom_call.1} parent=23 // pred_region
          %s538 = sand.u32 %s32, 1
          %s539 = scalar_lea.sflag [#allocation6], %s538
          %s540 = sand.u32 %s80, 1
          %s541 = scalar_lea.vmem [#allocation5], %s540
          %s543 = ssub.s32 16, 16
          %544 = vsyncadd %s539, %s543
          %s545 = smul.addr %s39, 16
          %s546 = scalar_lea.hbm %s1, %s545
          %s548 = sshll.u32 %s541, 4
          %s549 = int_to_ptr.vmem [resolvable:$true] %s548
          %551 = dma.hbm_to_vmem [thread:$0]  %s546, 16, %s549, %s539
        $region32: #{tpu_custom_call.1} parent=23 // pred_fallthru
          _
        // Predicated region
        $region33: #{tpu_custom_call.1} parent=23 // pred_check
          %p552 = pneg %p158
        $region34: #{tpu_custom_call.1} parent=23 // pred_check_branch
          %554 = sbr.rel (%p552) target = $region36
        $region35: #{tpu_custom_call.1} parent=23 // pred_region
          %s555 = sand.u32 %s32, 1
          %s556 = scalar_lea.sflag [#allocation3], %s555
          %s557 = sand.u32 %s148, 1
          %s558 = smul.addr %s557, 192
          %s559 = scalar_lea.vmem [#allocation10], %s558
          %s561 = ssub.s32 3072, 3072
          %562 = vsyncadd %s556, %s561
          %s563 = smul.addr %s40, 48
          %s564 = smul.addr %s563, 64
          %s565 = scalar_lea.hbm %s4, %s564
          %s566 = sshll.u32 %s559, 4
          %s567 = int_to_ptr.vmem [resolvable:$true] %s566
          %572 = dma.hbm_to_vmem [thread:$0]  %s565, 3072, %s567, %s556, 192, 192, 12
        $region36: #{tpu_custom_call.1} parent=23 // pred_fallthru
          _
        // Predicated region
        $region37: #{tpu_custom_call.1} parent=23 // pred_check
          %p573 = pneg %p184
        $region38: #{tpu_custom_call.1} parent=23 // pred_check_branch
          %575 = sbr.rel (%p573) target = $region40
        $region39: #{tpu_custom_call.1} parent=23 // pred_region
          %p576 = scmp.lt.s32.totalorder %s40, 1
          %s577 = scalar_select %p576, %s40, 1
          %s578 = smul.addr %s577, 3
          %s579 = scalar_lea.vmem %s5, %s578
        $region40: #{tpu_custom_call.1} parent=23 // pred_fallthru
          _
        // Predicated region
        $region41: #{tpu_custom_call.1} parent=23 // pred_check
          %p580 = pneg %p210
        $region42: #{tpu_custom_call.1} parent=23 // pred_check_branch
          %582 = sbr.rel (%p580) target = $region44
        $region43: #{tpu_custom_call.1} parent=23 // pred_region
          %s583 = sand.u32 %s32, 1
          %s584 = scalar_lea.sflag [#allocation6], %s583
          %s585 = sand.u32 %s200, 1
          %s586 = smul.addr %s585, 64
          %s587 = scalar_lea.vmem [#allocation11], %s586
          %s589 = ssub.s32 1024, 1024
          %590 = vsyncadd %s584, %s589
          %s591 = smul.addr %s40, 16
          %s592 = smul.addr %s591, 64
          %s593 = scalar_lea.hbm %s6, %s592
          %s594 = sshll.u32 %s587, 4
          %s595 = int_to_ptr.vmem [resolvable:$true] %s594
          %600 = dma.hbm_to_vmem [thread:$0]  %s593, 1024, %s595, %s584, 64, 64, 4
        $region44: #{tpu_custom_call.1} parent=23 // pred_fallthru
          _
        // Predicated region
        $region45: #{tpu_custom_call.1} parent=23 // pred_check
          %p601 = pneg %p236
        $region46: #{tpu_custom_call.1} parent=23 // pred_check_branch
          %603 = sbr.rel (%p601) target = $region48
        $region47: #{tpu_custom_call.1} parent=23 // pred_region
          %p604 = scmp.lt.s32.totalorder %s40, 1
          %s605 = scalar_select %p604, %s40, 1
          %s606 = scalar_lea.vmem %s7, %s605
        $region48: #{tpu_custom_call.1} parent=23 // pred_fallthru
          _
        // Predicated region
        $region49: #{tpu_custom_call.1} parent=23 // pred_check
          %p607 = pneg %p262
        $region50: #{tpu_custom_call.1} parent=23 // pred_check_branch
          %609 = sbr.rel (%p607) target = $region52
        $region51: #{tpu_custom_call.1} parent=23 // pred_region
          %s610 = sand.u32 %s32, 1
          %s611 = scalar_lea.sflag [#allocation3], %s610
          %s612 = sand.u32 %s252, 1
          %s613 = scalar_lea.vmem [#allocation12], %s612
          %s615 = ssub.s32 16, 16
          %616 = vsyncadd %s611, %s615
          %s617 = smul.addr %s40, 16
          %s618 = scalar_lea.hbm %s8, %s617
          %s620 = sshll.u32 %s613, 4
          %s621 = int_to_ptr.vmem [resolvable:$true] %s620
          %623 = dma.hbm_to_vmem [thread:$0]  %s618, 16, %s621, %s611
        $region52: #{tpu_custom_call.1} parent=23 // pred_fallthru
          _
        // Predicated region
        $region53: #{tpu_custom_call.1} parent=23 // pred_check
          %p624 = pneg %p288
        $region54: #{tpu_custom_call.1} parent=23 // pred_check_branch
          %626 = sbr.rel (%p624) target = $region56
        $region55: #{tpu_custom_call.1} parent=23 // pred_region
          %s627 = sand.u32 %s32, 1
          %s628 = scalar_lea.sflag [#allocation6], %s627
          %s629 = sand.u32 %s278, 1
          %s630 = scalar_lea.vmem [#allocation13], %s629
          %s632 = ssub.s32 16, 16
          %633 = vsyncadd %s628, %s632
          %s634 = smul.addr %s40, 16
          %s635 = scalar_lea.hbm %s9, %s634
          %s637 = sshll.u32 %s630, 4
          %s638 = int_to_ptr.vmem [resolvable:$true] %s637
          %640 = dma.hbm_to_vmem [thread:$0]  %s635, 16, %s638, %s628
        $region56: #{tpu_custom_call.1} parent=23 // pred_fallthru
          _
        // Predicated region
        $region57: #{tpu_custom_call.1} parent=23 // pred_check
          %p641 = pneg %p314
        $region58: #{tpu_custom_call.1} parent=23 // pred_check_branch
          %643 = sbr.rel (%p641) target = $region60
        $region59: #{tpu_custom_call.1} parent=23 // pred_region
          %s644 = sand.u32 %s32, 1
          %s645 = scalar_lea.sflag [#allocation3], %s644
          %s646 = sand.u32 %s304, 1
          %s647 = smul.addr %s646, 256
          %s648 = scalar_lea.vmem [#allocation14], %s647
          %s650 = ssub.s32 4096, 4096
          %651 = vsyncadd %s645, %s650
          %s652 = smul.addr %s40, 64
          %s653 = smul.addr %s652, 64
          %s654 = scalar_lea.hbm %s10, %s653
          %s655 = sshll.u32 %s648, 4
          %s656 = int_to_ptr.vmem [resolvable:$true] %s655
          %661 = dma.hbm_to_vmem [thread:$0]  %s654, 4096, %s656, %s645, 256, 256, 16
        $region60: #{tpu_custom_call.1} parent=23 // pred_fallthru
          _
        // Predicated region
        $region61: #{tpu_custom_call.1} parent=23 // pred_check
          %p662 = pneg %p340
        $region62: #{tpu_custom_call.1} parent=23 // pred_check_branch
          %664 = sbr.rel (%p662) target = $region64
        $region63: #{tpu_custom_call.1} parent=23 // pred_region
          %p665 = scmp.lt.s32.totalorder %s40, 1
          %s666 = scalar_select %p665, %s40, 1
          %s667 = smul.addr %s666, 4
          %s668 = scalar_lea.vmem %s11, %s667
        $region64: #{tpu_custom_call.1} parent=23 // pred_fallthru
          _
        // Predicated region
        $region65: #{tpu_custom_call.1} parent=23 // pred_check
          %p669 = pneg %p366
        $region66: #{tpu_custom_call.1} parent=23 // pred_check_branch
          %671 = sbr.rel (%p669) target = $region68
        $region67: #{tpu_custom_call.1} parent=23 // pred_region
          %s672 = sand.u32 %s32, 1
          %s673 = scalar_lea.sflag [#allocation6], %s672
          %s674 = sand.u32 %s356, 1
          %s675 = smul.addr %s674, 256
          %s676 = scalar_lea.vmem [#allocation15], %s675
          %s678 = ssub.s32 4096, 4096
          %679 = vsyncadd %s673, %s678
          %s680 = smul.addr %s40, 64
          %s681 = smul.addr %s680, 64
          %s682 = scalar_lea.hbm %s12, %s681
          %s683 = sshll.u32 %s676, 4
          %s684 = int_to_ptr.vmem [resolvable:$true] %s683
          %689 = dma.hbm_to_vmem [thread:$0]  %s682, 4096, %s684, %s673, 64, 64, 4
        $region68: #{tpu_custom_call.1} parent=23 // pred_fallthru
          _
        // Predicated region
        $region69: #{tpu_custom_call.1} parent=23 // pred_check
          %p690 = pneg %p392
        $region70: #{tpu_custom_call.1} parent=23 // pred_check_branch
          %692 = sbr.rel (%p690) target = $region72
        $region71: #{tpu_custom_call.1} parent=23 // pred_region
          %p693 = scmp.lt.s32.totalorder %s40, 1
          %s694 = scalar_select %p693, %s40, 1
          %s695 = scalar_lea.vmem %s13, %s694
        $region72: #{tpu_custom_call.1} parent=23 // pred_fallthru
          _
        // Predicated region
        $region73: #{tpu_custom_call.1} parent=23 // pred_check
          %p696 = pneg %p418
        $region74: #{tpu_custom_call.1} parent=23 // pred_check_branch
          %698 = sbr.rel (%p696) target = $region76
        $region75: #{tpu_custom_call.1} parent=23 // pred_region
          %p699 = scmp.lt.s32.totalorder %s40, 1
          %s700 = scalar_select %p699, %s40, 1
          %s701 = scalar_lea.vmem %s14, %s700
        $region76: #{tpu_custom_call.1} parent=23 // pred_fallthru
          _
        // Predicated region
        $region77: #{tpu_custom_call.1} parent=23 // pred_check
          %p702 = pneg %p444
        $region78: #{tpu_custom_call.1} parent=23 // pred_check_branch
          %704 = sbr.rel (%p702) target = $region80
        $region79: #{tpu_custom_call.1} parent=23 // pred_region
          %p705 = scmp.lt.s32.totalorder %s40, 1
          %s706 = scalar_select %p705, %s40, 1
          %s707 = scalar_lea.vmem %s15, %s706
        $region80: #{tpu_custom_call.1} parent=23 // pred_fallthru
          _
      $region24: #{tpu_custom_call.1} parent=5 // pred_fallthru
        _
      %p708 = scmp.le.s32.totalorder 1, %s32
      %p709 = scmp.lt.s32.totalorder %s32, 5
      %p710 = pnand %p708, %p709
      %p711 = pneg %p710
      // Predicated region
      $region81: #{tpu_custom_call.1} parent=5 // pred_check
        _
      $region82: #{tpu_custom_call.1} parent=5 // pred_check_branch
        %713 = sbr.rel (%p710) target = $region84
      $region83: #{tpu_custom_call.1} parent=5 // pred_region
        %s714 = ssub.s32 %s32, 1
        %s715 = sand.u32 %s37, 1
        %s716 = scalar_lea.sflag [#allocation3], %s715
        %s717 = sand.u32 %s57, 1
        %s718 = smul.addr %s717, 8
        %s719 = scalar_lea.vmem [#allocation2], %s718
        // Predicated region
        $region85: #{tpu_custom_call.1} parent=83 // pred_check
          %p720 = pneg %p70
        $region86: #{tpu_custom_call.1} parent=83 // pred_check_branch
          %722 = sbr.rel (%p720) target = $region88
        $region87: #{tpu_custom_call.1} parent=83 // pred_region
          %723 = dma.done %s716, 128
        $region88: #{tpu_custom_call.1} parent=83 // pred_fallthru
          _
        %s724 = sand.u32 %s37, 1
        %s725 = scalar_lea.sflag [#allocation6], %s724
        %s726 = sand.u32 %s83, 1
        %s727 = scalar_lea.vmem [#allocation5], %s726
        // Predicated region
        $region89: #{tpu_custom_call.1} parent=83 // pred_check
          %p728 = pneg %p96
        $region90: #{tpu_custom_call.1} parent=83 // pred_check_branch
          %730 = sbr.rel (%p728) target = $region92
        $region91: #{tpu_custom_call.1} parent=83 // pred_region
          %731 = dma.done %s725, 16
        $region92: #{tpu_custom_call.1} parent=83 // pred_fallthru
          _
        // Predicated region
        $region93: #{tpu_custom_call.1} parent=83 // pred_check
          %p732 = pneg %p117
        $region94: #{tpu_custom_call.1} parent=83 // pred_check_branch
          %734 = sbr.rel (%p732) target = $region96
        $region95: #{tpu_custom_call.1} parent=83 // pred_region
          %735 = dma.done [#allocation6], 16
        $region96: #{tpu_custom_call.1} parent=83 // pred_fallthru
          _
        // Predicated region
        $region97: #{tpu_custom_call.1} parent=83 // pred_check
          %p736 = pneg %p138
        $region98: #{tpu_custom_call.1} parent=83 // pred_check_branch
          %738 = sbr.rel (%p736) target = $region100
        $region99: #{tpu_custom_call.1} parent=83 // pred_region
          %739 = dma.done [#allocation9], 16
        $region100: #{tpu_custom_call.1} parent=83 // pred_fallthru
          _
        %s740 = sand.u32 %s37, 1
        %s741 = scalar_lea.sflag [#allocation3], %s740
        %s742 = sand.u32 %s151, 1
        %s743 = smul.addr %s742, 192
        %s744 = scalar_lea.vmem [#allocation10], %s743
        // Predicated region
        $region101: #{tpu_custom_call.1} parent=83 // pred_check
          %p745 = pneg %p164
        $region102: #{tpu_custom_call.1} parent=83 // pred_check_branch
          %747 = sbr.rel (%p745) target = $region104
        $region103: #{tpu_custom_call.1} parent=83 // pred_region
          %748 = dma.done %s741, 3072
        $region104: #{tpu_custom_call.1} parent=83 // pred_fallthru
          _
        %s749 = sand.u32 %s37, 1
        %s750 = scalar_lea.sflag [#allocation6], %s749
        %s751 = sand.u32 %s203, 1
        %s752 = smul.addr %s751, 64
        %s753 = scalar_lea.vmem [#allocation11], %s752
        // Predicated region
        $region105: #{tpu_custom_call.1} parent=83 // pred_check
          %p754 = pneg %p216
        $region106: #{tpu_custom_call.1} parent=83 // pred_check_branch
          %756 = sbr.rel (%p754) target = $region108
        $region107: #{tpu_custom_call.1} parent=83 // pred_region
          %757 = dma.done %s750, 1024
        $region108: #{tpu_custom_call.1} parent=83 // pred_fallthru
          _
        %s758 = sand.u32 %s37, 1
        %s759 = scalar_lea.sflag [#allocation3], %s758
        %s760 = sand.u32 %s255, 1
        %s761 = scalar_lea.vmem [#allocation12], %s760
        // Predicated region
        $region109: #{tpu_custom_call.1} parent=83 // pred_check
          %p762 = pneg %p268
        $region110: #{tpu_custom_call.1} parent=83 // pred_check_branch
          %764 = sbr.rel (%p762) target = $region112
        $region111: #{tpu_custom_call.1} parent=83 // pred_region
          %765 = dma.done %s759, 16
        $region112: #{tpu_custom_call.1} parent=83 // pred_fallthru
          _
        %s766 = sand.u32 %s37, 1
        %s767 = scalar_lea.sflag [#allocation6], %s766
        %s768 = sand.u32 %s281, 1
        %s769 = scalar_lea.vmem [#allocation13], %s768
        // Predicated region
        $region113: #{tpu_custom_call.1} parent=83 // pred_check
          %p770 = pneg %p294
        $region114: #{tpu_custom_call.1} parent=83 // pred_check_branch
          %772 = sbr.rel (%p770) target = $region116
        $region115: #{tpu_custom_call.1} parent=83 // pred_region
          %773 = dma.done %s767, 16
        $region116: #{tpu_custom_call.1} parent=83 // pred_fallthru
          _
        %s774 = sand.u32 %s37, 1
        %s775 = scalar_lea.sflag [#allocation3], %s774
        %s776 = sand.u32 %s307, 1
        %s777 = smul.addr %s776, 256
        %s778 = scalar_lea.vmem [#allocation14], %s777
        // Predicated region
        $region117: #{tpu_custom_call.1} parent=83 // pred_check
          %p779 = pneg %p320
        $region118: #{tpu_custom_call.1} parent=83 // pred_check_branch
          %781 = sbr.rel (%p779) target = $region120
        $region119: #{tpu_custom_call.1} parent=83 // pred_region
          %782 = dma.done %s775, 4096
        $region120: #{tpu_custom_call.1} parent=83 // pred_fallthru
          _
        %s783 = sand.u32 %s37, 1
        %s784 = scalar_lea.sflag [#allocation6], %s783
        %s785 = sand.u32 %s359, 1
        %s786 = smul.addr %s785, 256
        %s787 = scalar_lea.vmem [#allocation15], %s786
        // Predicated region
        $region121: #{tpu_custom_call.1} parent=83 // pred_check
          %p788 = pneg %p372
        $region122: #{tpu_custom_call.1} parent=83 // pred_check_branch
          %790 = sbr.rel (%p788) target = $region124
        $region123: #{tpu_custom_call.1} parent=83 // pred_region
          %791 = dma.done %s784, 4096
        $region124: #{tpu_custom_call.1} parent=83 // pred_fallthru
          _
        %s792 = sand.u32 %s37, 1
        %s793 = scalar_lea.sflag [#allocation3], %s792
        %s794 = sand.u32 %s57, 1
        %s795 = smul.addr %s794, 8
        %s796 = scalar_lea.vmem [#allocation2], %s795
        %p797 = pneg %p70
        %p798 = pneg %p67
        %s799 = sand.u32 %s37, 1
        %s800 = scalar_lea.sflag [#allocation6], %s799
        %s801 = sand.u32 %s83, 1
        %s802 = scalar_lea.vmem [#allocation5], %s801
        %p803 = pneg %p96
        %p804 = pneg %p93
        %p805 = pneg %p117
        %p806 = pneg %p114
        %p807 = pneg %p138
        %p808 = pneg %p135
        %s809 = sand.u32 %s37, 1
        %s810 = scalar_lea.sflag [#allocation3], %s809
        %s811 = sand.u32 %s151, 1
        %s812 = smul.addr %s811, 192
        %s813 = scalar_lea.vmem [#allocation10], %s812
        %p814 = pneg %p164
        %p815 = pneg %p161
        %p816 = scmp.lt.s32.totalorder %s42, 1
        %s817 = scalar_select %p816, %s42, 1
        %s818 = smul.addr %s817, 3
        %s819 = scalar_lea.vmem %s5, %s818
        %p820 = pneg %p190
        %p821 = pneg %p187
        %s822 = sand.u32 %s37, 1
        %s823 = scalar_lea.sflag [#allocation6], %s822
        %s824 = sand.u32 %s203, 1
        %s825 = smul.addr %s824, 64
        %s826 = scalar_lea.vmem [#allocation11], %s825
        %p827 = pneg %p216
        %p828 = pneg %p213
        %p829 = scmp.lt.s32.totalorder %s42, 1
        %s830 = scalar_select %p829, %s42, 1
        %s831 = scalar_lea.vmem %s7, %s830
        %p832 = pneg %p242
        %p833 = pneg %p239
        %s834 = sand.u32 %s37, 1
        %s835 = scalar_lea.sflag [#allocation3], %s834
        %s836 = sand.u32 %s255, 1
        %s837 = scalar_lea.vmem [#allocation12], %s836
        %p838 = pneg %p268
        %p839 = pneg %p265
        %s840 = sand.u32 %s37, 1
        %s841 = scalar_lea.sflag [#allocation6], %s840
        %s842 = sand.u32 %s281, 1
        %s843 = scalar_lea.vmem [#allocation13], %s842
        %p844 = pneg %p294
        %p845 = pneg %p291
        %s846 = sand.u32 %s37, 1
        %s847 = scalar_lea.sflag [#allocation3], %s846
        %s848 = sand.u32 %s307, 1
        %s849 = smul.addr %s848, 256
        %s850 = scalar_lea.vmem [#allocation14], %s849
        %p851 = pneg %p320
        %p852 = pneg %p317
        %p853 = scmp.lt.s32.totalorder %s42, 1
        %s854 = scalar_select %p853, %s42, 1
        %s855 = smul.addr %s854, 4
        %s856 = scalar_lea.vmem %s11, %s855
        %p857 = pneg %p346
        %p858 = pneg %p343
        %s859 = sand.u32 %s37, 1
        %s860 = scalar_lea.sflag [#allocation6], %s859
        %s861 = sand.u32 %s359, 1
        %s862 = smul.addr %s861, 256
        %s863 = scalar_lea.vmem [#allocation15], %s862
        %p864 = pneg %p372
        %p865 = pneg %p369
        %p866 = scmp.lt.s32.totalorder %s42, 1
        %s867 = scalar_select %p866, %s42, 1
        %s868 = scalar_lea.vmem %s13, %s867
        %p869 = pneg %p398
        %p870 = pneg %p395
        %p871 = scmp.lt.s32.totalorder %s42, 1
        %s872 = scalar_select %p871, %s42, 1
        %s873 = scalar_lea.vmem %s14, %s872
        %p874 = pneg %p424
        %p875 = pneg %p421
        %p876 = scmp.lt.s32.totalorder %s42, 1
        %s877 = scalar_select %p876, %s42, 1
        %s878 = scalar_lea.vmem %s15, %s877
        %p879 = pneg %p450
        %p880 = pneg %p447
        %p881 = pneg %p476
        %p882 = pneg %p473
        %s883 = sand.u32 %s463, 1
        %s884 = scalar_lea.sflag [#allocation4], %s883
        %s885 = sand.u32 %s463, 1
        %s886 = smul.addr %s885, 8
        %s887 = scalar_lea.vmem [#allocation16], %s886
        %p888 = scmp.lt.s32.totalorder %s42, 1
        %s889 = scalar_select %p888, %s42, 1
        %s890 = smul.addr %s889, 3
        %s891 = scalar_lea.vmem %s5, %s890
        %p892 = scmp.lt.s32.totalorder %s42, 1
        %s893 = scalar_select %p892, %s42, 1
        %s894 = scalar_lea.vmem %s7, %s893
        %p895 = scmp.lt.s32.totalorder %s42, 1
        %s896 = scalar_select %p895, %s42, 1
        %s897 = smul.addr %s896, 4
        %s898 = scalar_lea.vmem %s11, %s897
        %p899 = scmp.lt.s32.totalorder %s42, 1
        %s900 = scalar_select %p899, %s42, 1
        %s901 = scalar_lea.vmem %s13, %s900
        %p902 = scmp.lt.s32.totalorder %s42, 1
        %s903 = scalar_select %p902, %s42, 1
        %s904 = scalar_lea.vmem %s14, %s903
        %p905 = scmp.lt.s32.totalorder %s42, 1
        %s906 = scalar_select %p905, %s42, 1
        %s907 = scalar_lea.vmem %s15, %s906
        %p909 = scmp.eq.s32.totalorder %s42, 0
        // Predicated region
        $region125: #{tpu_custom_call.1} parent=83 // pred_check
          %p910 = pneg %p909
        $region126: #{tpu_custom_call.1} parent=83 // pred_check_branch
          %912 = sbr.rel (%p910) target = $region128
        $region127: #{tpu_custom_call.1} parent=83 // pred_region
          %v913 = vld [vmem:[%s719] sm:$0xff]
          %v914 = vld [vmem:[#allocation7] sm:$0x1]
          %v915 = vld [vmem:[#allocation8] sm:$0x1]
          %916 = vadd.xlane.f32.xlu0 %v913
          %v917 = vpop.xlane.xlu0 %916
          %v918 = vrcp.pop 128.0
          %v919 = vmul.f32 %v917, %v918
          %v920 = vsub.f32 %v913, %v919
          %v921 = vmul.f32 %v920, %v920
          %922 = vadd.xlane.f32.xlu0 %v921
          %v923 = vpop.xlane.xlu0 %922
          %v924 = vmul.f32 %v923, %v918
          %v925 = vadd.f32 %v924, 1e-05
          %v926 = vrsqrt.pop %v925
          %v927 = vmul.f32 %v920, %v926
          %v929 = vlaneseq
          %v930 = vshrl.u32 %v929, 7
          %v931 = vsub.s32 0, %v930
          %v932 = vrot.slane %v914, %v931
          %v934 = vmul.f32 %v927, %v932
          %v936 = vlaneseq
          %v937 = vshrl.u32 %v936, 7
          %v938 = vsub.s32 0, %v937
          %v939 = vrot.slane %v915, %v938
          %v941 = vadd.f32 %v934, %v939
          %942 = vst [vmem:[%s887] sm:$0xff] %v941
        $region128: #{tpu_custom_call.1} parent=83 // pred_fallthru
          _
        %v943 = vld [vmem:[%s887] sm:$0xff]
        %v944 = vld [vmem:[%s727] sm:$0x1]
        %v945 = vld [vmem:[%s744] sm:$0xff]
        %v946 = vld [vmem:[%s744 + $0x8] sm:$0xf]
        %v947 = vld [vmem:[%s744 + $0xc] sm:$0xff]
        %v948 = vld [vmem:[%s744 + $0x14] sm:$0xf]
        %v949 = vld [vmem:[%s744 + $0x18] sm:$0xff]
        %v950 = vld [vmem:[%s744 + $0x20] sm:$0xf]
        %v951 = vld [vmem:[%s744 + $0x24] sm:$0xff]
        %v952 = vld [vmem:[%s744 + $0x2c] sm:$0xf]
        %v953 = vld [vmem:[%s744 + $0x30] sm:$0xff]
        %v954 = vld [vmem:[%s744 + $0x38] sm:$0xf]
        %v955 = vld [vmem:[%s744 + $0x3c] sm:$0xff]
        %v956 = vld [vmem:[%s744 + $0x44] sm:$0xf]
        %v957 = vld [vmem:[%s744 + $0x48] sm:$0xff]
        %v958 = vld [vmem:[%s744 + $0x50] sm:$0xf]
        %v959 = vld [vmem:[%s744 + $0x54] sm:$0xff]
        %v960 = vld [vmem:[%s744 + $0x5c] sm:$0xf]
        %v961 = vld [vmem:[%s744 + $0x60] sm:$0xff]
        %v962 = vld [vmem:[%s744 + $0x68] sm:$0xf]
        %v963 = vld [vmem:[%s744 + $0x6c] sm:$0xff]
        %v964 = vld [vmem:[%s744 + $0x74] sm:$0xf]
        %v965 = vld [vmem:[%s744 + $0x78] sm:$0xff]
        %v966 = vld [vmem:[%s744 + $0x80] sm:$0xf]
        %v967 = vld [vmem:[%s744 + $0x84] sm:$0xff]
        %v968 = vld [vmem:[%s744 + $0x8c] sm:$0xf]
        %v969 = vld [vmem:[%s744 + $0x90] sm:$0xff]
        %v970 = vld [vmem:[%s744 + $0x98] sm:$0xf]
        %v971 = vld [vmem:[%s744 + $0x9c] sm:$0xff]
        %v972 = vld [vmem:[%s744 + $0xa4] sm:$0xf]
        %v973 = vld [vmem:[%s744 + $0xa8] sm:$0xff]
        %v974 = vld [vmem:[%s744 + $0xb0] sm:$0xf]
        %v975 = vld [vmem:[%s744 + $0xb4] sm:$0xff]
        %v976 = vld [vmem:[%s744 + $0xbc] sm:$0xf]
        %v977 = vpack.c.bf16 %v943, %v943
        %v978 = vld [vmem:[%s891] sm:$0x7]
        %v980 = vlaneseq
        %v981 = vshrl.u32 %v980, 7
        %v982 = vsub.s32 0, %v981
        %v983 = vrot.slane %v978, %v982
        %v984 = vlaneseq
        %v985 = vshrl.u32 %v984, 7
        %v986 = vsub.s32 1, %v985
        %v987 = vrot.slane %v978, %v986
        %v988 = vlaneseq
        %v989 = vshrl.u32 %v988, 7
        %v990 = vsub.s32 2, %v989
        %v991 = vrot.slane %v978, %v990
        %v1027 = vunpack.c.l.b16 %v945
        %v1028 = vunpack.c.h.b16 %v945
        %v1029 = vunpack.c.l.b16 %v946
        %v1030 = vunpack.c.l.b16 %v947
        %v1031 = vunpack.c.h.b16 %v947
        %v1032 = vunpack.c.l.b16 %v948
        %v1033 = vunpack.c.l.b16 %v949
        %v1034 = vunpack.c.h.b16 %v949
        %v1035 = vunpack.c.l.b16 %v950
        %v1036 = vunpack.c.l.b16 %v951
        %v1037 = vunpack.c.h.b16 %v951
        %v1038 = vunpack.c.l.b16 %v952
        %v1039 = vunpack.c.l.b16 %v953
        %v1040 = vunpack.c.h.b16 %v953
        %v1041 = vunpack.c.l.b16 %v954
        %v1042 = vunpack.c.l.b16 %v955
        %v1043 = vunpack.c.h.b16 %v955
        %v1044 = vunpack.c.l.b16 %v956
        %v1045 = vunpack.c.l.b16 %v957
        %v1046 = vunpack.c.h.b16 %v957
        %v1047 = vunpack.c.l.b16 %v958
        %v1048 = vunpack.c.l.b16 %v959
        %v1049 = vunpack.c.h.b16 %v959
        %v1050 = vunpack.c.l.b16 %v960
        %v1051 = vunpack.c.l.b16 %v961
        %v1052 = vunpack.c.h.b16 %v961
        %v1053 = vunpack.c.l.b16 %v962
        %v1054 = vunpack.c.l.b16 %v963
        %v1055 = vunpack.c.h.b16 %v963
        %v1056 = vunpack.c.l.b16 %v964
        %v1057 = vunpack.c.l.b16 %v965
        %v1058 = vunpack.c.h.b16 %v965
        %v1059 = vunpack.c.l.b16 %v966
        %v1060 = vunpack.c.l.b16 %v967
        %v1061 = vunpack.c.h.b16 %v967
        %v1062 = vunpack.c.l.b16 %v968
        %v1063 = vunpack.c.l.b16 %v969
        %v1064 = vunpack.c.h.b16 %v969
        %v1065 = vunpack.c.l.b16 %v970
        %v1066 = vunpack.c.l.b16 %v971
        %v1067 = vunpack.c.h.b16 %v971
        %v1068 = vunpack.c.l.b16 %v972
        %v1069 = vunpack.c.l.b16 %v973
        %v1070 = vunpack.c.h.b16 %v973
        %v1071 = vunpack.c.l.b16 %v974
        %v1072 = vunpack.c.l.b16 %v975
        %v1073 = vunpack.c.h.b16 %v975
        %v1074 = vunpack.c.l.b16 %v976
        %v1075 = vpack.c.b16 %v1030, %v1027
        %v1076 = vpack.c.b16 %v1031, %v1028
        %v1077 = vpack.c.b16 %v1032, %v1029
        %v1078 = vpack.c.b16 %v1036, %v1033
        %v1079 = vpack.c.b16 %v1037, %v1034
        %v1080 = vpack.c.b16 %v1038, %v1035
        %v1081 = vpack.c.b16 %v1042, %v1039
        %v1082 = vpack.c.b16 %v1043, %v1040
        %v1083 = vpack.c.b16 %v1044, %v1041
        %v1084 = vpack.c.b16 %v1048, %v1045
        %v1085 = vpack.c.b16 %v1049, %v1046
        %v1086 = vpack.c.b16 %v1050, %v1047
        %v1087 = vpack.c.b16 %v1054, %v1051
        %v1088 = vpack.c.b16 %v1055, %v1052
        %v1089 = vpack.c.b16 %v1056, %v1053
        %v1090 = vpack.c.b16 %v1060, %v1057
        %v1091 = vpack.c.b16 %v1061, %v1058
        %v1092 = vpack.c.b16 %v1062, %v1059
        %v1093 = vpack.c.b16 %v1066, %v1063
        %v1094 = vpack.c.b16 %v1067, %v1064
        %v1095 = vpack.c.b16 %v1068, %v1065
        %v1096 = vpack.c.b16 %v1072, %v1069
        %v1097 = vpack.c.b16 %v1073, %v1070
        %v1098 = vpack.c.b16 %v1074, %v1071
        %1123 = vmatprep.subr.bf16.mxu0 %v1097
        %1124 = vmatpush1.bf16.msra.mxu0 %v1096
        %1125 = vmatprep.subr.bf16.mxu0 %v1094
        %1126 = vmatpush1.bf16.msra.mxu0 %v1093
        %1127 = vmatprep.subr.bf16.mxu0 %v1091
        %1128 = vmatpush1.bf16.msra.mxu0 %v1090
        %1129 = vmatprep.subr.bf16.mxu0 %v1088
        %1130 = vmatpush1.bf16.msra.mxu0 %v1087
        %1131 = vmatprep.subr.bf16.mxu0 %v1085
        %1132 = vmatpush1.bf16.msra.mxu0 %v1084
        %1133 = vmatprep.subr.bf16.mxu0 %v1082
        %1134 = vmatpush1.bf16.msra.mxu0 %v1081
        %1135 = vmatprep.subr.bf16.mxu0 %v1079
        %1136 = vmatpush1.bf16.msra.mxu0 %v1078
        %1137 = vmatprep.subr.bf16.mxu0 %v1076
        %1138 = vmatpush1.bf16.msra.mxu0 %v1075
        %1139 = vmatprep.subr.bf16.mxu0 0
        %1140 = vmatpush2.bf16.msra.mxu0 0
        %1141 = vmatprep.subr.bf16.mxu0 0
        %1142 = vmatpush2.bf16.msra.mxu0 0
        %1143 = vmatprep.subr.bf16.mxu0 0
        %1144 = vmatpush2.bf16.msra.mxu0 0
        %1145 = vmatprep.subr.bf16.mxu0 0
        %1146 = vmatpush2.bf16.msra.mxu0 0
        %1147 = vmatprep.subr.bf16.mxu0 0
        %1148 = vmatpush2.bf16.msra.mxu0 0
        %1149 = vmatprep.subr.bf16.mxu0 0
        %1150 = vmatpush2.bf16.msra.mxu0 0
        %1151 = vmatprep.subr.bf16.mxu0 0
        %1152 = vmatpush2.bf16.msra.mxu0 0
        %1153 = vmatprep.subr.bf16.mxu0 0
        %1154 = vmatpush2.bf16.msra.mxu0 0
        %1155 = vmatprep.mubr.bf16.mxu0 0
        %1156 = vmatmul.mubr.bf16.gmra.mxu0 %v977
        %v1157 = vpop.f32.mrf.mxu0
        %v1158 = vadd.f32 %v983, %v1157
        %v1159 = vpop.f32.mrf.mxu0
        %v1160 = vadd.f32 %v987, %v1159
        %v1161 = vpop.f32.mrf.mxu0
        %v1162 = vpop.f32.mrf.mxu0
        %1163 = vdwg.mxu0
        %1164 = vmatprep.subr.bf16.mxu0 0
        %1165 = vmatpush1.bf16.msra.mxu0 %v1098
        %1166 = vmatprep.subr.bf16.mxu0 0
        %1167 = vmatpush1.bf16.msra.mxu0 %v1095
        %1168 = vmatprep.subr.bf16.mxu0 0
        %1169 = vmatpush1.bf16.msra.mxu0 %v1092
        %1170 = vmatprep.subr.bf16.mxu0 0
        %1171 = vmatpush1.bf16.msra.mxu0 %v1089
        %1172 = vmatprep.subr.bf16.mxu0 0
        %1173 = vmatpush1.bf16.msra.mxu0 %v1086
        %1174 = vmatprep.subr.bf16.mxu0 0
        %1175 = vmatpush1.bf16.msra.mxu0 %v1083
        %1176 = vmatprep.subr.bf16.mxu0 0
        %1177 = vmatpush1.bf16.msra.mxu0 %v1080
        %1178 = vmatprep.subr.bf16.mxu0 0
        %1179 = vmatpush1.bf16.msra.mxu0 %v1077
        %1180 = vmatprep.subr.bf16.mxu0 0
        %1181 = vmatpush2.bf16.msra.mxu0 0
        %1182 = vmatprep.subr.bf16.mxu0 0
        %1183 = vmatpush2.bf16.msra.mxu0 0
        %1184 = vmatprep.subr.bf16.mxu0 0
        %1185 = vmatpush2.bf16.msra.mxu0 0
        %1186 = vmatprep.subr.bf16.mxu0 0
        %1187 = vmatpush2.bf16.msra.mxu0 0
        %1188 = vmatprep.subr.bf16.mxu0 0
        %1189 = vmatpush2.bf16.msra.mxu0 0
        %1190 = vmatprep.subr.bf16.mxu0 0
        %1191 = vmatpush2.bf16.msra.mxu0 0
        %1192 = vmatprep.subr.bf16.mxu0 0
        %1193 = vmatpush2.bf16.msra.mxu0 0
        %1194 = vmatprep.subr.bf16.mxu0 0
        %1195 = vmatpush2.bf16.msra.mxu0 0
        %1196 = vmatprep.mubr.bf16.mxu0 0
        %1197 = vmatmul.mubr.bf16.gmra.mxu0 %v977
        %v1198 = vpop.f32.mrf.mxu0
        %v1199 = vadd.f32 %v991, %v1198
        %v1200 = vpop.f32.mrf.mxu0
        %v1201 = vpop.f32.mrf.mxu0
        %v1202 = vpop.f32.mrf.mxu0
        %1203 = vdwg.mxu0
        %vm1204 = vcmask 261120
        %v1206 = vsel %vm1204, %v1158, 0
        %v1209 = vsel %vm1204, %v1160, 0
        %1211 = vmatprep.subr.mxu0 0.0
        %1212 = vmatpush1.xpose.msra.mxu0 0.0
        %1213 = vmatprep.subr.mxu0 0.0
        %1214 = vmatpush1.xpose.msra.mxu0 0.0
        %1215 = vmatprep.subr.mxu0 0.0
        %1216 = vmatpush1.xpose.msra.mxu0 0.0
        %1217 = vmatprep.subr.mxu0 0.0
        %1218 = vmatpush1.xpose.msra.mxu0 0.0
        %1219 = vmatprep.subr.mxu0 0.0
        %1220 = vmatpush1.xpose.msra.mxu0 0.0
        %1221 = vmatprep.subr.mxu0 0.0
        %1222 = vmatpush1.xpose.msra.mxu0 0.0
        %1223 = vmatprep.subr.mxu0 0.0
        %1224 = vmatpush1.xpose.msra.mxu0 0.0
        %1225 = vmatprep.subr.mxu0 0.0
        %1226 = vmatpush1.xpose.msra.mxu0 0.0
        %1227 = vmatprep.subr.mxu0 0.0
        %1228 = vmatpush1.xpose.msra.mxu0 0.0
        %1229 = vmatprep.subr.mxu0 0.0
        %1230 = vmatpush1.xpose.msra.mxu0 0.0
        %1231 = vmatprep.subr.mxu0 0.0
        %1232 = vmatpush1.xpose.msra.mxu0 0.0
        %1233 = vmatprep.subr.mxu0 0.0
        %1234 = vmatpush1.xpose.msra.mxu0 0.0
        %1235 = vmatprep.subr.mxu0 0.0
        %1236 = vmatpush1.xpose.msra.mxu0 0.0
        %1237 = vmatprep.subr.mxu0 0.0
        %1238 = vmatpush1.xpose.msra.mxu0 0.0
        %1239 = vmatprep.subr.mxu0 0.0
        %1240 = vmatpush1.xpose.msra.mxu0 0.0
        %1241 = vmatprep.subr.mxu0 0.0
        %1242 = vmatpush1.xpose.msra.mxu0 %v1209
        %1243 = vmatprep.subr.mxu0 0.0
        %1244 = vmatpush2.xpose.msra.mxu0 0.0
        %1245 = vmatprep.subr.mxu0 0.0
        %1246 = vmatpush2.xpose.msra.mxu0 0.0
        %1247 = vmatprep.subr.mxu0 0.0
        %1248 = vmatpush2.xpose.msra.mxu0 0.0
        %1249 = vmatprep.subr.mxu0 0.0
        %1250 = vmatpush2.xpose.msra.mxu0 0.0
        %1251 = vmatprep.subr.mxu0 0.0
        %1252 = vmatpush2.xpose.msra.mxu0 0.0
        %1253 = vmatprep.subr.mxu0 0.0
        %1254 = vmatpush2.xpose.msra.mxu0 0.0
        %1255 = vmatprep.subr.mxu0 0.0
        %1256 = vmatpush2.xpose.msra.mxu0 0.0
        %1257 = vmatprep.subr.mxu0 0.0
        %1258 = vmatpush2.xpose.msra.mxu0 0.0
        %1259 = vmatprep.subr.mxu0 0.0
        %1260 = vmatpush2.xpose.msra.mxu0 0.0
        %1261 = vmatprep.subr.mxu0 0.0
        %1262 = vmatpush2.xpose.msra.mxu0 0.0
        %1263 = vmatprep.subr.mxu0 0.0
        %1264 = vmatpush2.xpose.msra.mxu0 0.0
        %1265 = vmatprep.subr.mxu0 0.0
        %1266 = vmatpush2.xpose.msra.mxu0 0.0
        %1267 = vmatprep.subr.mxu0 0.0
        %1268 = vmatpush2.xpose.msra.mxu0 0.0
        %1269 = vmatprep.subr.mxu0 0.0
        %1270 = vmatpush2.xpose.msra.mxu0 0.0
        %1271 = vmatprep.subr.mxu0 0.0
        %1272 = vmatpush2.xpose.msra.mxu0 0.0
        %1273 = vmatprep.subr.mxu0 0.0
        %1274 = vmatpush2.xpose.msra.mxu0 0.0
        %1275 = vmatprep.mubr.f32.mxu0 0.0
        %1276 = vmatmul.mubr.f32.gmra.mxu0 %v1206
        %v1277 = vpop.f32.mrf.mxu0
        %v1278 = vadd.f32 0.0, %v1277
        %v1279 = vpop.f32.mrf.mxu0
        %1280 = vdwg.mxu0
        %v1281 = vmul.f32 %v1278, 0.17677669
        %v1283 = vlaneseq
        %v1284 = vshrl.u32 %v1283, 7
        %v1285 = vsub.s32 0, %v1284
        %v1286 = vrot.slane %v944, %v1285
        %v1288 = vadd.f32 %v1281, %v1286
        %vm1289 = vcmask 64512
        %v1290 = vsel %vm1289, %v1288, -inf
        %1291 = vmax.xlane.f32.xlu0 %v1290
        %v1292 = vpop.xlane.xlu0 %1291
        %v1293 = vsub.f32 %v1288, %v1292
        %v1294 = vmul.f32 %v1293, 1.442695
        %v1295 = vpow.pop %v1294
        %v1296 = vsel %vm1289, %v1295, 0.0
        %1297 = vadd.xlane.f32.xlu0 %v1296
        %v1298 = vpop.xlane.xlu0 %1297
        %v1299 = vrcp.pop %v1298
        %v1300 = vmul.f32 %v1295, %v1299
        %v1302 = vsel %vm1289, %v1300, 0
        %1304 = vmatprep.subr.mxu0 0.0
        %1305 = vmatpush1.msra.mxu0 0.0
        %1306 = vmatprep.subr.mxu0 0.0
        %1307 = vmatpush1.msra.mxu0 0.0
        %1308 = vmatprep.subr.mxu0 0.0
        %1309 = vmatpush1.msra.mxu0 0.0
        %1310 = vmatprep.subr.mxu0 0.0
        %1311 = vmatpush1.msra.mxu0 0.0
        %1312 = vmatprep.subr.mxu0 0.0
        %1313 = vmatpush1.msra.mxu0 0.0
        %1314 = vmatprep.subr.mxu0 0.0
        %1315 = vmatpush1.msra.mxu0 0.0
        %1316 = vmatprep.subr.mxu0 0.0
        %1317 = vmatpush1.msra.mxu0 0.0
        %1318 = vmatprep.subr.mxu0 0.0
        %1319 = vmatpush1.msra.mxu0 0.0
        %1320 = vmatprep.subr.mxu0 0.0
        %1321 = vmatpush1.msra.mxu0 0.0
        %1322 = vmatprep.subr.mxu0 0.0
        %1323 = vmatpush1.msra.mxu0 0.0
        %1324 = vmatprep.subr.mxu0 0.0
        %1325 = vmatpush1.msra.mxu0 0.0
        %1326 = vmatprep.subr.mxu0 0.0
        %1327 = vmatpush1.msra.mxu0 0.0
        %1328 = vmatprep.subr.mxu0 0.0
        %1329 = vmatpush1.msra.mxu0 0.0
        %1330 = vmatprep.subr.mxu0 0.0
        %1331 = vmatpush1.msra.mxu0 0.0
        %1332 = vmatprep.subr.mxu0 0.0
        %1333 = vmatpush1.msra.mxu0 0.0
        %1334 = vmatprep.subr.mxu0 0.0
        %1335 = vmatpush1.msra.mxu0 %v1199
        %1336 = vmatprep.subr.mxu0 0.0
        %1337 = vmatpush2.msra.mxu0 0.0
        %1338 = vmatprep.subr.mxu0 0.0
        %1339 = vmatpush2.msra.mxu0 0.0
        %1340 = vmatprep.subr.mxu0 0.0
        %1341 = vmatpush2.msra.mxu0 0.0
        %1342 = vmatprep.subr.mxu0 0.0
        %1343 = vmatpush2.msra.mxu0 0.0
        %1344 = vmatprep.subr.mxu0 0.0
        %1345 = vmatpush2.msra.mxu0 0.0
        %1346 = vmatprep.subr.mxu0 0.0
        %1347 = vmatpush2.msra.mxu0 0.0
        %1348 = vmatprep.subr.mxu0 0.0
        %1349 = vmatpush2.msra.mxu0 0.0
        %1350 = vmatprep.subr.mxu0 0.0
        %1351 = vmatpush2.msra.mxu0 0.0
        %1352 = vmatprep.subr.mxu0 0.0
        %1353 = vmatpush2.msra.mxu0 0.0
        %1354 = vmatprep.subr.mxu0 0.0
        %1355 = vmatpush2.msra.mxu0 0.0
        %1356 = vmatprep.subr.mxu0 0.0
        %1357 = vmatpush2.msra.mxu0 0.0
        %1358 = vmatprep.subr.mxu0 0.0
        %1359 = vmatpush2.msra.mxu0 0.0
        %1360 = vmatprep.subr.mxu0 0.0
        %1361 = vmatpush2.msra.mxu0 0.0
        %1362 = vmatprep.subr.mxu0 0.0
        %1363 = vmatpush2.msra.mxu0 0.0
        %1364 = vmatprep.subr.mxu0 0.0
        %1365 = vmatpush2.msra.mxu0 0.0
        %1366 = vmatprep.subr.mxu0 0.0
        %1367 = vmatpush2.msra.mxu0 0.0
        %1368 = vmatprep.mubr.f32.mxu0 0.0
        %1369 = vmatmul.mubr.f32.gmra.mxu0 %v1302
        %v1370 = vpop.f32.mrf.mxu0
        %v1371 = vadd.f32 0.0, %v1370
        %v1372 = vpop.f32.mrf.mxu0
        %1373 = vdwg.mxu0
        %1374 = vrot.lane.b32.xlu0 %v1158, 96
        %v1375 = vpop.permute.xlu0 %1374
        %1376 = vrot.lane.b32.xlu0 %v1160, 96
        %v1377 = vpop.permute.xlu0 %1376
        %v1378 = vsel %vm1204, %v1375, 0
        %v1380 = vsel %vm1204, %v1377, 0
        %1382 = vmatprep.subr.mxu0 0.0
        %1383 = vmatpush1.xpose.msra.mxu0 0.0
        %1384 = vmatprep.subr.mxu0 0.0
        %1385 = vmatpush1.xpose.msra.mxu0 0.0
        %1386 = vmatprep.subr.mxu0 0.0
        %1387 = vmatpush1.xpose.msra.mxu0 0.0
        %1388 = vmatprep.subr.mxu0 0.0
        %1389 = vmatpush1.xpose.msra.mxu0 0.0
        %1390 = vmatprep.subr.mxu0 0.0
        %1391 = vmatpush1.xpose.msra.mxu0 0.0
        %1392 = vmatprep.subr.mxu0 0.0
        %1393 = vmatpush1.xpose.msra.mxu0 0.0
        %1394 = vmatprep.subr.mxu0 0.0
        %1395 = vmatpush1.xpose.msra.mxu0 0.0
        %1396 = vmatprep.subr.mxu0 0.0
        %1397 = vmatpush1.xpose.msra.mxu0 0.0
        %1398 = vmatprep.subr.mxu0 0.0
        %1399 = vmatpush1.xpose.msra.mxu0 0.0
        %1400 = vmatprep.subr.mxu0 0.0
        %1401 = vmatpush1.xpose.msra.mxu0 0.0
        %1402 = vmatprep.subr.mxu0 0.0
        %1403 = vmatpush1.xpose.msra.mxu0 0.0
        %1404 = vmatprep.subr.mxu0 0.0
        %1405 = vmatpush1.xpose.msra.mxu0 0.0
        %1406 = vmatprep.subr.mxu0 0.0
        %1407 = vmatpush1.xpose.msra.mxu0 0.0
        %1408 = vmatprep.subr.mxu0 0.0
        %1409 = vmatpush1.xpose.msra.mxu0 0.0
        %1410 = vmatprep.subr.mxu0 0.0
        %1411 = vmatpush1.xpose.msra.mxu0 0.0
        %1412 = vmatprep.subr.mxu0 0.0
        %1413 = vmatpush1.xpose.msra.mxu0 %v1380
        %1414 = vmatprep.subr.mxu0 0.0
        %1415 = vmatpush2.xpose.msra.mxu0 0.0
        %1416 = vmatprep.subr.mxu0 0.0
        %1417 = vmatpush2.xpose.msra.mxu0 0.0
        %1418 = vmatprep.subr.mxu0 0.0
        %1419 = vmatpush2.xpose.msra.mxu0 0.0
        %1420 = vmatprep.subr.mxu0 0.0
        %1421 = vmatpush2.xpose.msra.mxu0 0.0
        %1422 = vmatprep.subr.mxu0 0.0
        %1423 = vmatpush2.xpose.msra.mxu0 0.0
        %1424 = vmatprep.subr.mxu0 0.0
        %1425 = vmatpush2.xpose.msra.mxu0 0.0
        %1426 = vmatprep.subr.mxu0 0.0
        %1427 = vmatpush2.xpose.msra.mxu0 0.0
        %1428 = vmatprep.subr.mxu0 0.0
        %1429 = vmatpush2.xpose.msra.mxu0 0.0
        %1430 = vmatprep.subr.mxu0 0.0
        %1431 = vmatpush2.xpose.msra.mxu0 0.0
        %1432 = vmatprep.subr.mxu0 0.0
        %1433 = vmatpush2.xpose.msra.mxu0 0.0
        %1434 = vmatprep.subr.mxu0 0.0
        %1435 = vmatpush2.xpose.msra.mxu0 0.0
        %1436 = vmatprep.subr.mxu0 0.0
        %1437 = vmatpush2.xpose.msra.mxu0 0.0
        %1438 = vmatprep.subr.mxu0 0.0
        %1439 = vmatpush2.xpose.msra.mxu0 0.0
        %1440 = vmatprep.subr.mxu0 0.0
        %1441 = vmatpush2.xpose.msra.mxu0 0.0
        %1442 = vmatprep.subr.mxu0 0.0
        %1443 = vmatpush2.xpose.msra.mxu0 0.0
        %1444 = vmatprep.subr.mxu0 0.0
        %1445 = vmatpush2.xpose.msra.mxu0 0.0
        %1446 = vmatprep.mubr.f32.mxu0 0.0
        %1447 = vmatmul.mubr.f32.gmra.mxu0 %v1378
        %v1448 = vpop.f32.mrf.mxu0
        %v1449 = vadd.f32 0.0, %v1448
        %v1450 = vpop.f32.mrf.mxu0
        %1451 = vdwg.mxu0
        %v1452 = vmul.f32 %v1449, 0.17677669
        %v1453 = vadd.f32 %v1452, %v1286
        %v1454 = vsel %vm1289, %v1453, -inf
        %1455 = vmax.xlane.f32.xlu0 %v1454
        %v1456 = vpop.xlane.xlu0 %1455
        %v1457 = vsub.f32 %v1453, %v1456
        %v1458 = vmul.f32 %v1457, 1.442695
        %v1459 = vpow.pop %v1458
        %v1460 = vsel %vm1289, %v1459, 0.0
        %1461 = vadd.xlane.f32.xlu0 %v1460
        %v1462 = vpop.xlane.xlu0 %1461
        %v1463 = vrcp.pop %v1462
        %v1464 = vmul.f32 %v1459, %v1463
        %1466 = vrot.lane.b32.xlu0 %v1199, 96
        %v1467 = vpop.permute.xlu0 %1466
        %v1470 = vsel %vm1289, %v1464, 0
        %1472 = vmatprep.subr.mxu0 0.0
        %1473 = vmatpush1.msra.mxu0 0.0
        %1474 = vmatprep.subr.mxu0 0.0
        %1475 = vmatpush1.msra.mxu0 0.0
        %1476 = vmatprep.subr.mxu0 0.0
        %1477 = vmatpush1.msra.mxu0 0.0
        %1478 = vmatprep.subr.mxu0 0.0
        %1479 = vmatpush1.msra.mxu0 0.0
        %1480 = vmatprep.subr.mxu0 0.0
        %1481 = vmatpush1.msra.mxu0 0.0
        %1482 = vmatprep.subr.mxu0 0.0
        %1483 = vmatpush1.msra.mxu0 0.0
        %1484 = vmatprep.subr.mxu0 0.0
        %1485 = vmatpush1.msra.mxu0 0.0
        %1486 = vmatprep.subr.mxu0 0.0
        %1487 = vmatpush1.msra.mxu0 0.0
        %1488 = vmatprep.subr.mxu0 0.0
        %1489 = vmatpush1.msra.mxu0 0.0
        %1490 = vmatprep.subr.mxu0 0.0
        %1491 = vmatpush1.msra.mxu0 0.0
        %1492 = vmatprep.subr.mxu0 0.0
        %1493 = vmatpush1.msra.mxu0 0.0
        %1494 = vmatprep.subr.mxu0 0.0
        %1495 = vmatpush1.msra.mxu0 0.0
        %1496 = vmatprep.subr.mxu0 0.0
        %1497 = vmatpush1.msra.mxu0 0.0
        %1498 = vmatprep.subr.mxu0 0.0
        %1499 = vmatpush1.msra.mxu0 0.0
        %1500 = vmatprep.subr.mxu0 0.0
        %1501 = vmatpush1.msra.mxu0 0.0
        %1502 = vmatprep.subr.mxu0 0.0
        %1503 = vmatpush1.msra.mxu0 %v1467
        %1504 = vmatprep.subr.mxu0 0.0
        %1505 = vmatpush2.msra.mxu0 0.0
        %1506 = vmatprep.subr.mxu0 0.0
        %1507 = vmatpush2.msra.mxu0 0.0
        %1508 = vmatprep.subr.mxu0 0.0
        %1509 = vmatpush2.msra.mxu0 0.0
        %1510 = vmatprep.subr.mxu0 0.0
        %1511 = vmatpush2.msra.mxu0 0.0
        %1512 = vmatprep.subr.mxu0 0.0
        %1513 = vmatpush2.msra.mxu0 0.0
        %1514 = vmatprep.subr.mxu0 0.0
        %1515 = vmatpush2.msra.mxu0 0.0
        %1516 = vmatprep.subr.mxu0 0.0
        %1517 = vmatpush2.msra.mxu0 0.0
        %1518 = vmatprep.subr.mxu0 0.0
        %1519 = vmatpush2.msra.mxu0 0.0
        %1520 = vmatprep.subr.mxu0 0.0
        %1521 = vmatpush2.msra.mxu0 0.0
        %1522 = vmatprep.subr.mxu0 0.0
        %1523 = vmatpush2.msra.mxu0 0.0
        %1524 = vmatprep.subr.mxu0 0.0
        %1525 = vmatpush2.msra.mxu0 0.0
        %1526 = vmatprep.subr.mxu0 0.0
        %1527 = vmatpush2.msra.mxu0 0.0
        %1528 = vmatprep.subr.mxu0 0.0
        %1529 = vmatpush2.msra.mxu0 0.0
        %1530 = vmatprep.subr.mxu0 0.0
        %1531 = vmatpush2.msra.mxu0 0.0
        %1532 = vmatprep.subr.mxu0 0.0
        %1533 = vmatpush2.msra.mxu0 0.0
        %1534 = vmatprep.subr.mxu0 0.0
        %1535 = vmatpush2.msra.mxu0 0.0
        %1536 = vmatprep.mubr.f32.mxu0 0.0
        %1537 = vmatmul.mubr.f32.gmra.mxu0 %v1470
        %v1538 = vpop.f32.mrf.mxu0
        %v1539 = vadd.f32 0.0, %v1538
        %v1540 = vpop.f32.mrf.mxu0
        %1541 = vdwg.mxu0
        %1542 = vrot.lane.b32.xlu0 %v1158, 64
        %v1543 = vpop.permute.xlu0 %1542
        %1544 = vrot.lane.b32.xlu0 %v1160, 64
        %v1545 = vpop.permute.xlu0 %1544
        %v1546 = vsel %vm1204, %v1543, 0
        %v1548 = vsel %vm1204, %v1545, 0
        %1550 = vmatprep.subr.mxu0 0.0
        %1551 = vmatpush1.xpose.msra.mxu0 0.0
        %1552 = vmatprep.subr.mxu0 0.0
        %1553 = vmatpush1.xpose.msra.mxu0 0.0
        %1554 = vmatprep.subr.mxu0 0.0
        %1555 = vmatpush1.xpose.msra.mxu0 0.0
        %1556 = vmatprep.subr.mxu0 0.0
        %1557 = vmatpush1.xpose.msra.mxu0 0.0
        %1558 = vmatprep.subr.mxu0 0.0
        %1559 = vmatpush1.xpose.msra.mxu0 0.0
        %1560 = vmatprep.subr.mxu0 0.0
        %1561 = vmatpush1.xpose.msra.mxu0 0.0
        %1562 = vmatprep.subr.mxu0 0.0
        %1563 = vmatpush1.xpose.msra.mxu0 0.0
        %1564 = vmatprep.subr.mxu0 0.0
        %1565 = vmatpush1.xpose.msra.mxu0 0.0
        %1566 = vmatprep.subr.mxu0 0.0
        %1567 = vmatpush1.xpose.msra.mxu0 0.0
        %1568 = vmatprep.subr.mxu0 0.0
        %1569 = vmatpush1.xpose.msra.mxu0 0.0
        %1570 = vmatprep.subr.mxu0 0.0
        %1571 = vmatpush1.xpose.msra.mxu0 0.0
        %1572 = vmatprep.subr.mxu0 0.0
        %1573 = vmatpush1.xpose.msra.mxu0 0.0
        %1574 = vmatprep.subr.mxu0 0.0
        %1575 = vmatpush1.xpose.msra.mxu0 0.0
        %1576 = vmatprep.subr.mxu0 0.0
        %1577 = vmatpush1.xpose.msra.mxu0 0.0
        %1578 = vmatprep.subr.mxu0 0.0
        %1579 = vmatpush1.xpose.msra.mxu0 0.0
        %1580 = vmatprep.subr.mxu0 0.0
        %1581 = vmatpush1.xpose.msra.mxu0 %v1548
        %1582 = vmatprep.subr.mxu0 0.0
        %1583 = vmatpush2.xpose.msra.mxu0 0.0
        %1584 = vmatprep.subr.mxu0 0.0
        %1585 = vmatpush2.xpose.msra.mxu0 0.0
        %1586 = vmatprep.subr.mxu0 0.0
        %1587 = vmatpush2.xpose.msra.mxu0 0.0
        %1588 = vmatprep.subr.mxu0 0.0
        %1589 = vmatpush2.xpose.msra.mxu0 0.0
        %1590 = vmatprep.subr.mxu0 0.0
        %1591 = vmatpush2.xpose.msra.mxu0 0.0
        %1592 = vmatprep.subr.mxu0 0.0
        %1593 = vmatpush2.xpose.msra.mxu0 0.0
        %1594 = vmatprep.subr.mxu0 0.0
        %1595 = vmatpush2.xpose.msra.mxu0 0.0
        %1596 = vmatprep.subr.mxu0 0.0
        %1597 = vmatpush2.xpose.msra.mxu0 0.0
        %1598 = vmatprep.subr.mxu0 0.0
        %1599 = vmatpush2.xpose.msra.mxu0 0.0
        %1600 = vmatprep.subr.mxu0 0.0
        %1601 = vmatpush2.xpose.msra.mxu0 0.0
        %1602 = vmatprep.subr.mxu0 0.0
        %1603 = vmatpush2.xpose.msra.mxu0 0.0
        %1604 = vmatprep.subr.mxu0 0.0
        %1605 = vmatpush2.xpose.msra.mxu0 0.0
        %1606 = vmatprep.subr.mxu0 0.0
        %1607 = vmatpush2.xpose.msra.mxu0 0.0
        %1608 = vmatprep.subr.mxu0 0.0
        %1609 = vmatpush2.xpose.msra.mxu0 0.0
        %1610 = vmatprep.subr.mxu0 0.0
        %1611 = vmatpush2.xpose.msra.mxu0 0.0
        %1612 = vmatprep.subr.mxu0 0.0
        %1613 = vmatpush2.xpose.msra.mxu0 0.0
        %1614 = vmatprep.mubr.f32.mxu0 0.0
        %1615 = vmatmul.mubr.f32.gmra.mxu0 %v1546
        %v1616 = vpop.f32.mrf.mxu0
        %v1617 = vadd.f32 0.0, %v1616
        %v1618 = vpop.f32.mrf.mxu0
        %1619 = vdwg.mxu0
        %v1620 = vmul.f32 %v1617, 0.17677669
        %v1621 = vadd.f32 %v1620, %v1286
        %v1622 = vsel %vm1289, %v1621, -inf
        %1623 = vmax.xlane.f32.xlu0 %v1622
        %v1624 = vpop.xlane.xlu0 %1623
        %v1625 = vsub.f32 %v1621, %v1624
        %v1626 = vmul.f32 %v1625, 1.442695
        %v1627 = vpow.pop %v1626
        %v1628 = vsel %vm1289, %v1627, 0.0
        %1629 = vadd.xlane.f32.xlu0 %v1628
        %v1630 = vpop.xlane.xlu0 %1629
        %v1631 = vrcp.pop %v1630
        %v1632 = vmul.f32 %v1627, %v1631
        %1633 = vrot.lane.b32.xlu0 %v1199, 64
        %v1634 = vpop.permute.xlu0 %1633
        %v1637 = vsel %vm1289, %v1632, 0
        %1639 = vmatprep.subr.mxu0 0.0
        %1640 = vmatpush1.msra.mxu0 0.0
        %1641 = vmatprep.subr.mxu0 0.0
        %1642 = vmatpush1.msra.mxu0 0.0
        %1643 = vmatprep.subr.mxu0 0.0
        %1644 = vmatpush1.msra.mxu0 0.0
        %1645 = vmatprep.subr.mxu0 0.0
        %1646 = vmatpush1.msra.mxu0 0.0
        %1647 = vmatprep.subr.mxu0 0.0
        %1648 = vmatpush1.msra.mxu0 0.0
        %1649 = vmatprep.subr.mxu0 0.0
        %1650 = vmatpush1.msra.mxu0 0.0
        %1651 = vmatprep.subr.mxu0 0.0
        %1652 = vmatpush1.msra.mxu0 0.0
        %1653 = vmatprep.subr.mxu0 0.0
        %1654 = vmatpush1.msra.mxu0 0.0
        %1655 = vmatprep.subr.mxu0 0.0
        %1656 = vmatpush1.msra.mxu0 0.0
        %1657 = vmatprep.subr.mxu0 0.0
        %1658 = vmatpush1.msra.mxu0 0.0
        %1659 = vmatprep.subr.mxu0 0.0
        %1660 = vmatpush1.msra.mxu0 0.0
        %1661 = vmatprep.subr.mxu0 0.0
        %1662 = vmatpush1.msra.mxu0 0.0
        %1663 = vmatprep.subr.mxu0 0.0
        %1664 = vmatpush1.msra.mxu0 0.0
        %1665 = vmatprep.subr.mxu0 0.0
        %1666 = vmatpush1.msra.mxu0 0.0
        %1667 = vmatprep.subr.mxu0 0.0
        %1668 = vmatpush1.msra.mxu0 0.0
        %1669 = vmatprep.subr.mxu0 0.0
        %1670 = vmatpush1.msra.mxu0 %v1634
        %1671 = vmatprep.subr.mxu0 0.0
        %1672 = vmatpush2.msra.mxu0 0.0
        %1673 = vmatprep.subr.mxu0 0.0
        %1674 = vmatpush2.msra.mxu0 0.0
        %1675 = vmatprep.subr.mxu0 0.0
        %1676 = vmatpush2.msra.mxu0 0.0
        %1677 = vmatprep.subr.mxu0 0.0
        %1678 = vmatpush2.msra.mxu0 0.0
        %1679 = vmatprep.subr.mxu0 0.0
        %1680 = vmatpush2.msra.mxu0 0.0
        %1681 = vmatprep.subr.mxu0 0.0
        %1682 = vmatpush2.msra.mxu0 0.0
        %1683 = vmatprep.subr.mxu0 0.0
        %1684 = vmatpush2.msra.mxu0 0.0
        %1685 = vmatprep.subr.mxu0 0.0
        %1686 = vmatpush2.msra.mxu0 0.0
        %1687 = vmatprep.subr.mxu0 0.0
        %1688 = vmatpush2.msra.mxu0 0.0
        %1689 = vmatprep.subr.mxu0 0.0
        %1690 = vmatpush2.msra.mxu0 0.0
        %1691 = vmatprep.subr.mxu0 0.0
        %1692 = vmatpush2.msra.mxu0 0.0
        %1693 = vmatprep.subr.mxu0 0.0
        %1694 = vmatpush2.msra.mxu0 0.0
        %1695 = vmatprep.subr.mxu0 0.0
        %1696 = vmatpush2.msra.mxu0 0.0
        %1697 = vmatprep.subr.mxu0 0.0
        %1698 = vmatpush2.msra.mxu0 0.0
        %1699 = vmatprep.subr.mxu0 0.0
        %1700 = vmatpush2.msra.mxu0 0.0
        %1701 = vmatprep.subr.mxu0 0.0
        %1702 = vmatpush2.msra.mxu0 0.0
        %1703 = vmatprep.mubr.f32.mxu0 0.0
        %1704 = vmatmul.mubr.f32.gmra.mxu0 %v1637
        %v1705 = vpop.f32.mrf.mxu0
        %v1706 = vadd.f32 0.0, %v1705
        %v1707 = vpop.f32.mrf.mxu0
        %1708 = vdwg.mxu0
        %1709 = vrot.lane.b32.xlu0 %v1158, 32
        %v1710 = vpop.permute.xlu0 %1709
        %1711 = vrot.lane.b32.xlu0 %v1160, 32
        %v1712 = vpop.permute.xlu0 %1711
        %v1713 = vsel %vm1204, %v1710, 0
        %v1715 = vsel %vm1204, %v1712, 0
        %1717 = vmatprep.subr.mxu0 0.0
        %1718 = vmatpush1.xpose.msra.mxu0 0.0
        %1719 = vmatprep.subr.mxu0 0.0
        %1720 = vmatpush1.xpose.msra.mxu0 0.0
        %1721 = vmatprep.subr.mxu0 0.0
        %1722 = vmatpush1.xpose.msra.mxu0 0.0
        %1723 = vmatprep.subr.mxu0 0.0
        %1724 = vmatpush1.xpose.msra.mxu0 0.0
        %1725 = vmatprep.subr.mxu0 0.0
        %1726 = vmatpush1.xpose.msra.mxu0 0.0
        %1727 = vmatprep.subr.mxu0 0.0
        %1728 = vmatpush1.xpose.msra.mxu0 0.0
        %1729 = vmatprep.subr.mxu0 0.0
        %1730 = vmatpush1.xpose.msra.mxu0 0.0
        %1731 = vmatprep.subr.mxu0 0.0
        %1732 = vmatpush1.xpose.msra.mxu0 0.0
        %1733 = vmatprep.subr.mxu0 0.0
        %1734 = vmatpush1.xpose.msra.mxu0 0.0
        %1735 = vmatprep.subr.mxu0 0.0
        %1736 = vmatpush1.xpose.msra.mxu0 0.0
        %1737 = vmatprep.subr.mxu0 0.0
        %1738 = vmatpush1.xpose.msra.mxu0 0.0
        %1739 = vmatprep.subr.mxu0 0.0
        %1740 = vmatpush1.xpose.msra.mxu0 0.0
        %1741 = vmatprep.subr.mxu0 0.0
        %1742 = vmatpush1.xpose.msra.mxu0 0.0
        %1743 = vmatprep.subr.mxu0 0.0
        %1744 = vmatpush1.xpose.msra.mxu0 0.0
        %1745 = vmatprep.subr.mxu0 0.0
        %1746 = vmatpush1.xpose.msra.mxu0 0.0
        %1747 = vmatprep.subr.mxu0 0.0
        %1748 = vmatpush1.xpose.msra.mxu0 %v1715
        %1749 = vmatprep.subr.mxu0 0.0
        %1750 = vmatpush2.xpose.msra.mxu0 0.0
        %1751 = vmatprep.subr.mxu0 0.0
        %1752 = vmatpush2.xpose.msra.mxu0 0.0
        %1753 = vmatprep.subr.mxu0 0.0
        %1754 = vmatpush2.xpose.msra.mxu0 0.0
        %1755 = vmatprep.subr.mxu0 0.0
        %1756 = vmatpush2.xpose.msra.mxu0 0.0
        %1757 = vmatprep.subr.mxu0 0.0
        %1758 = vmatpush2.xpose.msra.mxu0 0.0
        %1759 = vmatprep.subr.mxu0 0.0
        %1760 = vmatpush2.xpose.msra.mxu0 0.0
        %1761 = vmatprep.subr.mxu0 0.0
        %1762 = vmatpush2.xpose.msra.mxu0 0.0
        %1763 = vmatprep.subr.mxu0 0.0
        %1764 = vmatpush2.xpose.msra.mxu0 0.0
        %1765 = vmatprep.subr.mxu0 0.0
        %1766 = vmatpush2.xpose.msra.mxu0 0.0
        %1767 = vmatprep.subr.mxu0 0.0
        %1768 = vmatpush2.xpose.msra.mxu0 0.0
        %1769 = vmatprep.subr.mxu0 0.0
        %1770 = vmatpush2.xpose.msra.mxu0 0.0
        %1771 = vmatprep.subr.mxu0 0.0
        %1772 = vmatpush2.xpose.msra.mxu0 0.0
        %1773 = vmatprep.subr.mxu0 0.0
        %1774 = vmatpush2.xpose.msra.mxu0 0.0
        %1775 = vmatprep.subr.mxu0 0.0
        %1776 = vmatpush2.xpose.msra.mxu0 0.0
        %1777 = vmatprep.subr.mxu0 0.0
        %1778 = vmatpush2.xpose.msra.mxu0 0.0
        %1779 = vmatprep.subr.mxu0 0.0
        %1780 = vmatpush2.xpose.msra.mxu0 0.0
        %1781 = vmatprep.mubr.f32.mxu0 0.0
        %1782 = vmatmul.mubr.f32.gmra.mxu0 %v1713
        %v1783 = vpop.f32.mrf.mxu0
        %v1784 = vadd.f32 0.0, %v1783
        %v1785 = vpop.f32.mrf.mxu0
        %1786 = vdwg.mxu0
        %v1787 = vmul.f32 %v1784, 0.17677669
        %v1788 = vadd.f32 %v1787, %v1286
        %v1789 = vsel %vm1289, %v1788, -inf
        %1790 = vmax.xlane.f32.xlu0 %v1789
        %v1791 = vpop.xlane.xlu0 %1790
        %v1792 = vsub.f32 %v1788, %v1791
        %v1793 = vmul.f32 %v1792, 1.442695
        %v1794 = vpow.pop %v1793
        %v1795 = vsel %vm1289, %v1794, 0.0
        %1796 = vadd.xlane.f32.xlu0 %v1795
        %v1797 = vpop.xlane.xlu0 %1796
        %v1798 = vrcp.pop %v1797
        %v1799 = vmul.f32 %v1794, %v1798
        %1800 = vrot.lane.b32.xlu0 %v1199, 32
        %v1801 = vpop.permute.xlu0 %1800
        %v1804 = vsel %vm1289, %v1799, 0
        %1806 = vmatprep.subr.mxu0 0.0
        %1807 = vmatpush1.msra.mxu0 0.0
        %1808 = vmatprep.subr.mxu0 0.0
        %1809 = vmatpush1.msra.mxu0 0.0
        %1810 = vmatprep.subr.mxu0 0.0
        %1811 = vmatpush1.msra.mxu0 0.0
        %1812 = vmatprep.subr.mxu0 0.0
        %1813 = vmatpush1.msra.mxu0 0.0
        %1814 = vmatprep.subr.mxu0 0.0
        %1815 = vmatpush1.msra.mxu0 0.0
        %1816 = vmatprep.subr.mxu0 0.0
        %1817 = vmatpush1.msra.mxu0 0.0
        %1818 = vmatprep.subr.mxu0 0.0
        %1819 = vmatpush1.msra.mxu0 0.0
        %1820 = vmatprep.subr.mxu0 0.0
        %1821 = vmatpush1.msra.mxu0 0.0
        %1822 = vmatprep.subr.mxu0 0.0
        %1823 = vmatpush1.msra.mxu0 0.0
        %1824 = vmatprep.subr.mxu0 0.0
        %1825 = vmatpush1.msra.mxu0 0.0
        %1826 = vmatprep.subr.mxu0 0.0
        %1827 = vmatpush1.msra.mxu0 0.0
        %1828 = vmatprep.subr.mxu0 0.0
        %1829 = vmatpush1.msra.mxu0 0.0
        %1830 = vmatprep.subr.mxu0 0.0
        %1831 = vmatpush1.msra.mxu0 0.0
        %1832 = vmatprep.subr.mxu0 0.0
        %1833 = vmatpush1.msra.mxu0 0.0
        %1834 = vmatprep.subr.mxu0 0.0
        %1835 = vmatpush1.msra.mxu0 0.0
        %1836 = vmatprep.subr.mxu0 0.0
        %1837 = vmatpush1.msra.mxu0 %v1801
        %1838 = vmatprep.subr.mxu0 0.0
        %1839 = vmatpush2.msra.mxu0 0.0
        %1840 = vmatprep.subr.mxu0 0.0
        %1841 = vmatpush2.msra.mxu0 0.0
        %1842 = vmatprep.subr.mxu0 0.0
        %1843 = vmatpush2.msra.mxu0 0.0
        %1844 = vmatprep.subr.mxu0 0.0
        %1845 = vmatpush2.msra.mxu0 0.0
        %1846 = vmatprep.subr.mxu0 0.0
        %1847 = vmatpush2.msra.mxu0 0.0
        %1848 = vmatprep.subr.mxu0 0.0
        %1849 = vmatpush2.msra.mxu0 0.0
        %1850 = vmatprep.subr.mxu0 0.0
        %1851 = vmatpush2.msra.mxu0 0.0
        %1852 = vmatprep.subr.mxu0 0.0
        %1853 = vmatpush2.msra.mxu0 0.0
        %1854 = vmatprep.subr.mxu0 0.0
        %1855 = vmatpush2.msra.mxu0 0.0
        %1856 = vmatprep.subr.mxu0 0.0
        %1857 = vmatpush2.msra.mxu0 0.0
        %1858 = vmatprep.subr.mxu0 0.0
        %1859 = vmatpush2.msra.mxu0 0.0
        %1860 = vmatprep.subr.mxu0 0.0
        %1861 = vmatpush2.msra.mxu0 0.0
        %1862 = vmatprep.subr.mxu0 0.0
        %1863 = vmatpush2.msra.mxu0 0.0
        %1864 = vmatprep.subr.mxu0 0.0
        %1865 = vmatpush2.msra.mxu0 0.0
        %1866 = vmatprep.subr.mxu0 0.0
        %1867 = vmatpush2.msra.mxu0 0.0
        %1868 = vmatprep.subr.mxu0 0.0
        %1869 = vmatpush2.msra.mxu0 0.0
        %1870 = vmatprep.mubr.f32.mxu0 0.0
        %1871 = vmatmul.mubr.f32.gmra.mxu0 %v1804
        %v1872 = vpop.f32.mrf.mxu0
        %v1873 = vadd.f32 0.0, %v1872
        %v1874 = vpop.f32.mrf.mxu0
        %1875 = vdwg.mxu0
        %1877 = vrot.lane.b32.xlu0 %v1539, 32
        %v1878 = vpop.permute.xlu0 %1877
        %1881 = vrot.lane.b32.xlu0 %v1706, 64
        %v1882 = vpop.permute.xlu0 %1881
        %1885 = vrot.lane.b32.xlu0 %v1873, 96
        %v1886 = vpop.permute.xlu0 %1885
        %v1888 = vsel %vm1204, %v1371, %v1878
        %vm1889 = vcmask 523264
        %v1890 = vsel %vm1889, %v1888, %v1882
        %vm1891 = vcmask 785408
        %v1892 = vsel %vm1891, %v1890, %v1886
        %v1893 = vld [vmem:[%s753] sm:$0xf]
        %v1894 = vld [vmem:[%s753 + $0x4] sm:$0xf]
        %v1895 = vld [vmem:[%s753 + $0x8] sm:$0xf]
        %v1896 = vld [vmem:[%s753 + $0xc] sm:$0xf]
        %v1897 = vld [vmem:[%s753 + $0x10] sm:$0xf]
        %v1898 = vld [vmem:[%s753 + $0x14] sm:$0xf]
        %v1899 = vld [vmem:[%s753 + $0x18] sm:$0xf]
        %v1900 = vld [vmem:[%s753 + $0x1c] sm:$0xf]
        %v1901 = vld [vmem:[%s753 + $0x20] sm:$0xf]
        %v1902 = vld [vmem:[%s753 + $0x24] sm:$0xf]
        %v1903 = vld [vmem:[%s753 + $0x28] sm:$0xf]
        %v1904 = vld [vmem:[%s753 + $0x2c] sm:$0xf]
        %v1905 = vld [vmem:[%s753 + $0x30] sm:$0xf]
        %v1906 = vld [vmem:[%s753 + $0x34] sm:$0xf]
        %v1907 = vld [vmem:[%s753 + $0x38] sm:$0xf]
        %v1908 = vld [vmem:[%s753 + $0x3c] sm:$0xf]
        %v1909 = vpack.c.bf16 %v1892, %v1892
        %v1910 = vld [vmem:[%s894] sm:$0x1]
        %v1912 = vlaneseq
        %v1913 = vshrl.u32 %v1912, 7
        %v1914 = vsub.s32 0, %v1913
        %v1915 = vrot.slane %v1910, %v1914
        %v1933 = vunpack.c.l.b16 %v1893
        %v1934 = vunpack.c.l.b16 %v1894
        %v1935 = vunpack.c.l.b16 %v1895
        %v1936 = vunpack.c.l.b16 %v1896
        %v1937 = vunpack.c.l.b16 %v1897
        %v1938 = vunpack.c.l.b16 %v1898
        %v1939 = vunpack.c.l.b16 %v1899
        %v1940 = vunpack.c.l.b16 %v1900
        %v1941 = vunpack.c.l.b16 %v1901
        %v1942 = vunpack.c.l.b16 %v1902
        %v1943 = vunpack.c.l.b16 %v1903
        %v1944 = vunpack.c.l.b16 %v1904
        %v1945 = vunpack.c.l.b16 %v1905
        %v1946 = vunpack.c.l.b16 %v1906
        %v1947 = vunpack.c.l.b16 %v1907
        %v1948 = vunpack.c.l.b16 %v1908
        %v1949 = vpack.c.b16 %v1934, %v1933
        %v1950 = vpack.c.b16 %v1936, %v1935
        %v1951 = vpack.c.b16 %v1938, %v1937
        %v1952 = vpack.c.b16 %v1940, %v1939
        %v1953 = vpack.c.b16 %v1942, %v1941
        %v1954 = vpack.c.b16 %v1944, %v1943
        %v1955 = vpack.c.b16 %v1946, %v1945
        %v1956 = vpack.c.b16 %v1948, %v1947
        %1965 = vmatprep.subr.bf16.mxu0 0
        %1966 = vmatpush1.bf16.msra.mxu0 %v1956
        %1967 = vmatprep.subr.bf16.mxu0 0
        %1968 = vmatpush1.bf16.msra.mxu0 %v1955
        %1969 = vmatprep.subr.bf16.mxu0 0
        %1970 = vmatpush1.bf16.msra.mxu0 %v1954
        %1971 = vmatprep.subr.bf16.mxu0 0
        %1972 = vmatpush1.bf16.msra.mxu0 %v1953
        %1973 = vmatprep.subr.bf16.mxu0 0
        %1974 = vmatpush1.bf16.msra.mxu0 %v1952
        %1975 = vmatprep.subr.bf16.mxu0 0
        %1976 = vmatpush1.bf16.msra.mxu0 %v1951
        %1977 = vmatprep.subr.bf16.mxu0 0
        %1978 = vmatpush1.bf16.msra.mxu0 %v1950
        %1979 = vmatprep.subr.bf16.mxu0 0
        %1980 = vmatpush1.bf16.msra.mxu0 %v1949
        %1981 = vmatprep.subr.bf16.mxu0 0
        %1982 = vmatpush2.bf16.msra.mxu0 0
        %1983 = vmatprep.subr.bf16.mxu0 0
        %1984 = vmatpush2.bf16.msra.mxu0 0
        %1985 = vmatprep.subr.bf16.mxu0 0
        %1986 = vmatpush2.bf16.msra.mxu0 0
        %1987 = vmatprep.subr.bf16.mxu0 0
        %1988 = vmatpush2.bf16.msra.mxu0 0
        %1989 = vmatprep.subr.bf16.mxu0 0
        %1990 = vmatpush2.bf16.msra.mxu0 0
        %1991 = vmatprep.subr.bf16.mxu0 0
        %1992 = vmatpush2.bf16.msra.mxu0 0
        %1993 = vmatprep.subr.bf16.mxu0 0
        %1994 = vmatpush2.bf16.msra.mxu0 0
        %1995 = vmatprep.subr.bf16.mxu0 0
        %1996 = vmatpush2.bf16.msra.mxu0 0
        %1997 = vmatprep.mubr.bf16.mxu0 0
        %1998 = vmatmul.mubr.bf16.gmra.mxu0 %v1909
        %v1999 = vpop.f32.mrf.mxu0
        %v2000 = vadd.f32 %v1915, %v1999
        %v2001 = vpop.f32.mrf.mxu0
        %v2002 = vpop.f32.mrf.mxu0
        %v2003 = vpop.f32.mrf.mxu0
        %2004 = vdwg.mxu0
        %v2005 = vadd.f32 %v2000, %v943
        %v2006 = vld [vmem:[%s761] sm:$0x1]
        %v2007 = vld [vmem:[%s769] sm:$0x1]
        %2008 = vadd.xlane.f32.xlu0 %v2005
        %v2009 = vpop.xlane.xlu0 %2008
        %v2010 = vrcp.pop 128.0
        %v2011 = vmul.f32 %v2009, %v2010
        %v2012 = vsub.f32 %v2005, %v2011
        %v2013 = vmul.f32 %v2012, %v2012
        %2014 = vadd.xlane.f32.xlu0 %v2013
        %v2015 = vpop.xlane.xlu0 %2014
        %v2016 = vmul.f32 %v2015, %v2010
        %v2017 = vadd.f32 %v2016, 1e-05
        %v2018 = vrsqrt.pop %v2017
        %v2019 = vmul.f32 %v2012, %v2018
        %v2021 = vlaneseq
        %v2022 = vshrl.u32 %v2021, 7
        %v2023 = vsub.s32 0, %v2022
        %v2024 = vrot.slane %v2006, %v2023
        %v2026 = vmul.f32 %v2019, %v2024
        %v2028 = vlaneseq
        %v2029 = vshrl.u32 %v2028, 7
        %v2030 = vsub.s32 0, %v2029
        %v2031 = vrot.slane %v2007, %v2030
        %v2033 = vadd.f32 %v2026, %v2031
        %v2034 = vld [vmem:[%s778] sm:$0xff]
        %v2035 = vld [vmem:[%s778 + $0x8] sm:$0xff]
        %v2036 = vld [vmem:[%s778 + $0x10] sm:$0xff]
        %v2037 = vld [vmem:[%s778 + $0x18] sm:$0xff]
        %v2038 = vld [vmem:[%s778 + $0x20] sm:$0xff]
        %v2039 = vld [vmem:[%s778 + $0x28] sm:$0xff]
        %v2040 = vld [vmem:[%s778 + $0x30] sm:$0xff]
        %v2041 = vld [vmem:[%s778 + $0x38] sm:$0xff]
        %v2042 = vld [vmem:[%s778 + $0x40] sm:$0xff]
        %v2043 = vld [vmem:[%s778 + $0x48] sm:$0xff]
        %v2044 = vld [vmem:[%s778 + $0x50] sm:$0xff]
        %v2045 = vld [vmem:[%s778 + $0x58] sm:$0xff]
        %v2046 = vld [vmem:[%s778 + $0x60] sm:$0xff]
        %v2047 = vld [vmem:[%s778 + $0x68] sm:$0xff]
        %v2048 = vld [vmem:[%s778 + $0x70] sm:$0xff]
        %v2049 = vld [vmem:[%s778 + $0x78] sm:$0xff]
        %v2050 = vld [vmem:[%s778 + $0x80] sm:$0xff]
        %v2051 = vld [vmem:[%s778 + $0x88] sm:$0xff]
        %v2052 = vld [vmem:[%s778 + $0x90] sm:$0xff]
        %v2053 = vld [vmem:[%s778 + $0x98] sm:$0xff]
        %v2054 = vld [vmem:[%s778 + $0xa0] sm:$0xff]
        %v2055 = vld [vmem:[%s778 + $0xa8] sm:$0xff]
        %v2056 = vld [vmem:[%s778 + $0xb0] sm:$0xff]
        %v2057 = vld [vmem:[%s778 + $0xb8] sm:$0xff]
        %v2058 = vld [vmem:[%s778 + $0xc0] sm:$0xff]
        %v2059 = vld [vmem:[%s778 + $0xc8] sm:$0xff]
        %v2060 = vld [vmem:[%s778 + $0xd0] sm:$0xff]
        %v2061 = vld [vmem:[%s778 + $0xd8] sm:$0xff]
        %v2062 = vld [vmem:[%s778 + $0xe0] sm:$0xff]
        %v2063 = vld [vmem:[%s778 + $0xe8] sm:$0xff]
        %v2064 = vld [vmem:[%s778 + $0xf0] sm:$0xff]
        %v2065 = vld [vmem:[%s778 + $0xf8] sm:$0xff]
        %v2066 = vpack.c.bf16 %v2033, %v2033
        %v2067 = vld [vmem:[%s898] sm:$0xf]
        %v2069 = vlaneseq
        %v2070 = vshrl.u32 %v2069, 7
        %v2071 = vsub.s32 0, %v2070
        %v2072 = vrot.slane %v2067, %v2071
        %v2073 = vlaneseq
        %v2074 = vshrl.u32 %v2073, 7
        %v2075 = vsub.s32 1, %v2074
        %v2076 = vrot.slane %v2067, %v2075
        %v2077 = vlaneseq
        %v2078 = vshrl.u32 %v2077, 7
        %v2079 = vsub.s32 2, %v2078
        %v2080 = vrot.slane %v2067, %v2079
        %v2081 = vlaneseq
        %v2082 = vshrl.u32 %v2081, 7
        %v2083 = vsub.s32 3, %v2082
        %v2084 = vrot.slane %v2067, %v2083
        %v2121 = vunpack.c.l.b16 %v2034
        %v2122 = vunpack.c.h.b16 %v2034
        %v2123 = vunpack.c.l.b16 %v2035
        %v2124 = vunpack.c.h.b16 %v2035
        %v2125 = vunpack.c.l.b16 %v2036
        %v2126 = vunpack.c.h.b16 %v2036
        %v2127 = vunpack.c.l.b16 %v2037
        %v2128 = vunpack.c.h.b16 %v2037
        %v2129 = vunpack.c.l.b16 %v2038
        %v2130 = vunpack.c.h.b16 %v2038
        %v2131 = vunpack.c.l.b16 %v2039
        %v2132 = vunpack.c.h.b16 %v2039
        %v2133 = vunpack.c.l.b16 %v2040
        %v2134 = vunpack.c.h.b16 %v2040
        %v2135 = vunpack.c.l.b16 %v2041
        %v2136 = vunpack.c.h.b16 %v2041
        %v2137 = vunpack.c.l.b16 %v2042
        %v2138 = vunpack.c.h.b16 %v2042
        %v2139 = vunpack.c.l.b16 %v2043
        %v2140 = vunpack.c.h.b16 %v2043
        %v2141 = vunpack.c.l.b16 %v2044
        %v2142 = vunpack.c.h.b16 %v2044
        %v2143 = vunpack.c.l.b16 %v2045
        %v2144 = vunpack.c.h.b16 %v2045
        %v2145 = vunpack.c.l.b16 %v2046
        %v2146 = vunpack.c.h.b16 %v2046
        %v2147 = vunpack.c.l.b16 %v2047
        %v2148 = vunpack.c.h.b16 %v2047
        %v2149 = vunpack.c.l.b16 %v2048
        %v2150 = vunpack.c.h.b16 %v2048
        %v2151 = vunpack.c.l.b16 %v2049
        %v2152 = vunpack.c.h.b16 %v2049
        %v2153 = vunpack.c.l.b16 %v2050
        %v2154 = vunpack.c.h.b16 %v2050
        %v2155 = vunpack.c.l.b16 %v2051
        %v2156 = vunpack.c.h.b16 %v2051
        %v2157 = vunpack.c.l.b16 %v2052
        %v2158 = vunpack.c.h.b16 %v2052
        %v2159 = vunpack.c.l.b16 %v2053
        %v2160 = vunpack.c.h.b16 %v2053
        %v2161 = vunpack.c.l.b16 %v2054
        %v2162 = vunpack.c.h.b16 %v2054
        %v2163 = vunpack.c.l.b16 %v2055
        %v2164 = vunpack.c.h.b16 %v2055
        %v2165 = vunpack.c.l.b16 %v2056
        %v2166 = vunpack.c.h.b16 %v2056
        %v2167 = vunpack.c.l.b16 %v2057
        %v2168 = vunpack.c.h.b16 %v2057
        %v2169 = vunpack.c.l.b16 %v2058
        %v2170 = vunpack.c.h.b16 %v2058
        %v2171 = vunpack.c.l.b16 %v2059
        %v2172 = vunpack.c.h.b16 %v2059
        %v2173 = vunpack.c.l.b16 %v2060
        %v2174 = vunpack.c.h.b16 %v2060
        %v2175 = vunpack.c.l.b16 %v2061
        %v2176 = vunpack.c.h.b16 %v2061
        %v2177 = vunpack.c.l.b16 %v2062
        %v2178 = vunpack.c.h.b16 %v2062
        %v2179 = vunpack.c.l.b16 %v2063
        %v2180 = vunpack.c.h.b16 %v2063
        %v2181 = vunpack.c.l.b16 %v2064
        %v2182 = vunpack.c.h.b16 %v2064
        %v2183 = vunpack.c.l.b16 %v2065
        %v2184 = vunpack.c.h.b16 %v2065
        %v2185 = vpack.c.b16 %v2125, %v2121
        %v2186 = vpack.c.b16 %v2126, %v2122
        %v2187 = vpack.c.b16 %v2127, %v2123
        %v2188 = vpack.c.b16 %v2128, %v2124
        %v2189 = vpack.c.b16 %v2133, %v2129
        %v2190 = vpack.c.b16 %v2134, %v2130
        %v2191 = vpack.c.b16 %v2135, %v2131
        %v2192 = vpack.c.b16 %v2136, %v2132
        %v2193 = vpack.c.b16 %v2141, %v2137
        %v2194 = vpack.c.b16 %v2142, %v2138
        %v2195 = vpack.c.b16 %v2143, %v2139
        %v2196 = vpack.c.b16 %v2144, %v2140
        %v2197 = vpack.c.b16 %v2149, %v2145
        %v2198 = vpack.c.b16 %v2150, %v2146
        %v2199 = vpack.c.b16 %v2151, %v2147
        %v2200 = vpack.c.b16 %v2152, %v2148
        %v2201 = vpack.c.b16 %v2157, %v2153
        %v2202 = vpack.c.b16 %v2158, %v2154
        %v2203 = vpack.c.b16 %v2159, %v2155
        %v2204 = vpack.c.b16 %v2160, %v2156
        %v2205 = vpack.c.b16 %v2165, %v2161
        %v2206 = vpack.c.b16 %v2166, %v2162
        %v2207 = vpack.c.b16 %v2167, %v2163
        %v2208 = vpack.c.b16 %v2168, %v2164
        %v2209 = vpack.c.b16 %v2173, %v2169
        %v2210 = vpack.c.b16 %v2174, %v2170
        %v2211 = vpack.c.b16 %v2175, %v2171
        %v2212 = vpack.c.b16 %v2176, %v2172
        %v2213 = vpack.c.b16 %v2181, %v2177
        %v2214 = vpack.c.b16 %v2182, %v2178
        %v2215 = vpack.c.b16 %v2183, %v2179
        %v2216 = vpack.c.b16 %v2184, %v2180
        %2249 = vmatprep.subr.bf16.mxu0 %v2214
        %2250 = vmatpush1.bf16.msra.mxu0 %v2213
        %2251 = vmatprep.subr.bf16.mxu0 %v2210
        %2252 = vmatpush1.bf16.msra.mxu0 %v2209
        %2253 = vmatprep.subr.bf16.mxu0 %v2206
        %2254 = vmatpush1.bf16.msra.mxu0 %v2205
        %2255 = vmatprep.subr.bf16.mxu0 %v2202
        %2256 = vmatpush1.bf16.msra.mxu0 %v2201
        %2257 = vmatprep.subr.bf16.mxu0 %v2198
        %2258 = vmatpush1.bf16.msra.mxu0 %v2197
        %2259 = vmatprep.subr.bf16.mxu0 %v2194
        %2260 = vmatpush1.bf16.msra.mxu0 %v2193
        %2261 = vmatprep.subr.bf16.mxu0 %v2190
        %2262 = vmatpush1.bf16.msra.mxu0 %v2189
        %2263 = vmatprep.subr.bf16.mxu0 %v2186
        %2264 = vmatpush1.bf16.msra.mxu0 %v2185
        %2265 = vmatprep.subr.bf16.mxu0 0
        %2266 = vmatpush2.bf16.msra.mxu0 0
        %2267 = vmatprep.subr.bf16.mxu0 0
        %2268 = vmatpush2.bf16.msra.mxu0 0
        %2269 = vmatprep.subr.bf16.mxu0 0
        %2270 = vmatpush2.bf16.msra.mxu0 0
        %2271 = vmatprep.subr.bf16.mxu0 0
        %2272 = vmatpush2.bf16.msra.mxu0 0
        %2273 = vmatprep.subr.bf16.mxu0 0
        %2274 = vmatpush2.bf16.msra.mxu0 0
        %2275 = vmatprep.subr.bf16.mxu0 0
        %2276 = vmatpush2.bf16.msra.mxu0 0
        %2277 = vmatprep.subr.bf16.mxu0 0
        %2278 = vmatpush2.bf16.msra.mxu0 0
        %2279 = vmatprep.subr.bf16.mxu0 0
        %2280 = vmatpush2.bf16.msra.mxu0 0
        %2281 = vmatprep.mubr.bf16.mxu0 0
        %2282 = vmatmul.mubr.bf16.gmra.mxu0 %v2066
        %v2283 = vpop.f32.mrf.mxu0
        %v2284 = vadd.f32 %v2072, %v2283
        %v2285 = vpop.f32.mrf.mxu0
        %v2286 = vadd.f32 %v2076, %v2285
        %v2287 = vpop.f32.mrf.mxu0
        %v2288 = vpop.f32.mrf.mxu0
        %2289 = vdwg.mxu0
        %2290 = vmatprep.subr.bf16.mxu0 %v2216
        %2291 = vmatpush1.bf16.msra.mxu0 %v2215
        %2292 = vmatprep.subr.bf16.mxu0 %v2212
        %2293 = vmatpush1.bf16.msra.mxu0 %v2211
        %2294 = vmatprep.subr.bf16.mxu0 %v2208
        %2295 = vmatpush1.bf16.msra.mxu0 %v2207
        %2296 = vmatprep.subr.bf16.mxu0 %v2204
        %2297 = vmatpush1.bf16.msra.mxu0 %v2203
        %2298 = vmatprep.subr.bf16.mxu0 %v2200
        %2299 = vmatpush1.bf16.msra.mxu0 %v2199
        %2300 = vmatprep.subr.bf16.mxu0 %v2196
        %2301 = vmatpush1.bf16.msra.mxu0 %v2195
        %2302 = vmatprep.subr.bf16.mxu0 %v2192
        %2303 = vmatpush1.bf16.msra.mxu0 %v2191
        %2304 = vmatprep.subr.bf16.mxu0 %v2188
        %2305 = vmatpush1.bf16.msra.mxu0 %v2187
        %2306 = vmatprep.subr.bf16.mxu0 0
        %2307 = vmatpush2.bf16.msra.mxu0 0
        %2308 = vmatprep.subr.bf16.mxu0 0
        %2309 = vmatpush2.bf16.msra.mxu0 0
        %2310 = vmatprep.subr.bf16.mxu0 0
        %2311 = vmatpush2.bf16.msra.mxu0 0
        %2312 = vmatprep.subr.bf16.mxu0 0
        %2313 = vmatpush2.bf16.msra.mxu0 0
        %2314 = vmatprep.subr.bf16.mxu0 0
        %2315 = vmatpush2.bf16.msra.mxu0 0
        %2316 = vmatprep.subr.bf16.mxu0 0
        %2317 = vmatpush2.bf16.msra.mxu0 0
        %2318 = vmatprep.subr.bf16.mxu0 0
        %2319 = vmatpush2.bf16.msra.mxu0 0
        %2320 = vmatprep.subr.bf16.mxu0 0
        %2321 = vmatpush2.bf16.msra.mxu0 0
        %2322 = vmatprep.mubr.bf16.mxu0 0
        %2323 = vmatmul.mubr.bf16.gmra.mxu0 %v2066
        %v2324 = vpop.f32.mrf.mxu0
        %v2325 = vadd.f32 %v2080, %v2324
        %v2326 = vpop.f32.mrf.mxu0
        %v2327 = vadd.f32 %v2084, %v2326
        %v2328 = vpop.f32.mrf.mxu0
        %v2329 = vpop.f32.mrf.mxu0
        %2330 = vdwg.mxu0
        %v2331 = vmul.f32 %v2284, 0.5
        %v2332 = vmul.f32 %v2286, 0.5
        %v2333 = vmul.f32 %v2325, 0.5
        %v2334 = vmul.f32 %v2327, 0.5
        %v2335 = vmul.f32 %v2284, 0.044715
        %v2336 = vmul.f32 %v2286, 0.044715
        %v2337 = vmul.f32 %v2325, 0.044715
        %v2338 = vmul.f32 %v2327, 0.044715
        %v2339 = vmul.f32 %v2335, %v2284
        %v2340 = vmul.f32 %v2336, %v2286
        %v2341 = vmul.f32 %v2337, %v2325
        %v2342 = vmul.f32 %v2338, %v2327
        %v2343 = vmul.f32 %v2339, %v2284
        %v2344 = vmul.f32 %v2340, %v2286
        %v2345 = vmul.f32 %v2341, %v2325
        %v2346 = vmul.f32 %v2342, %v2327
        %v2347 = vadd.f32 %v2284, %v2343
        %v2348 = vadd.f32 %v2286, %v2344
        %v2349 = vadd.f32 %v2325, %v2345
        %v2350 = vadd.f32 %v2327, %v2346
        %v2351 = vmul.f32 %v2347, 0.7978846
        %v2352 = vmul.f32 %v2348, 0.7978846
        %v2353 = vmul.f32 %v2349, 0.7978846
        %v2354 = vmul.f32 %v2350, 0.7978846
        %v2355 = vtanh.pop %v2351
        %v2356 = vtanh.pop %v2352
        %v2357 = vtanh.pop %v2353
        %v2358 = vtanh.pop %v2354
        %v2359 = vadd.f32 %v2355, 1.0
        %v2360 = vadd.f32 %v2356, 1.0
        %v2361 = vadd.f32 %v2357, 1.0
        %v2362 = vadd.f32 %v2358, 1.0
        %v2363 = vmul.f32 %v2331, %v2359
        %v2364 = vmul.f32 %v2332, %v2360
        %v2365 = vmul.f32 %v2333, %v2361
        %v2366 = vmul.f32 %v2334, %v2362
        %v2367 = vld [vmem:[%s787] sm:$0xf]
        %v2368 = vld [vmem:[%s787 + $0x4] sm:$0xf]
        %v2369 = vld [vmem:[%s787 + $0x8] sm:$0xf]
        %v2370 = vld [vmem:[%s787 + $0xc] sm:$0xf]
        %v2371 = vld [vmem:[%s787 + $0x10] sm:$0xf]
        %v2372 = vld [vmem:[%s787 + $0x14] sm:$0xf]
        %v2373 = vld [vmem:[%s787 + $0x18] sm:$0xf]
        %v2374 = vld [vmem:[%s787 + $0x1c] sm:$0xf]
        %v2375 = vld [vmem:[%s787 + $0x20] sm:$0xf]
        %v2376 = vld [vmem:[%s787 + $0x24] sm:$0xf]
        %v2377 = vld [vmem:[%s787 + $0x28] sm:$0xf]
        %v2378 = vld [vmem:[%s787 + $0x2c] sm:$0xf]
        %v2379 = vld [vmem:[%s787 + $0x30] sm:$0xf]
        %v2380 = vld [vmem:[%s787 + $0x34] sm:$0xf]
        %v2381 = vld [vmem:[%s787 + $0x38] sm:$0xf]
        %v2382 = vld [vmem:[%s787 + $0x3c] sm:$0xf]
        %v2383 = vld [vmem:[%s787 + $0x40] sm:$0xf]
        %v2384 = vld [vmem:[%s787 + $0x44] sm:$0xf]
        %v2385 = vld [vmem:[%s787 + $0x48] sm:$0xf]
        %v2386 = vld [vmem:[%s787 + $0x4c] sm:$0xf]
        %v2387 = vld [vmem:[%s787 + $0x50] sm:$0xf]
        %v2388 = vld [vmem:[%s787 + $0x54] sm:$0xf]
        %v2389 = vld [vmem:[%s787 + $0x58] sm:$0xf]
        %v2390 = vld [vmem:[%s787 + $0x5c] sm:$0xf]
        %v2391 = vld [vmem:[%s787 + $0x60] sm:$0xf]
        %v2392 = vld [vmem:[%s787 + $0x64] sm:$0xf]
        %v2393 = vld [vmem:[%s787 + $0x68] sm:$0xf]
        %v2394 = vld [vmem:[%s787 + $0x6c] sm:$0xf]
        %v2395 = vld [vmem:[%s787 + $0x70] sm:$0xf]
        %v2396 = vld [vmem:[%s787 + $0x74] sm:$0xf]
        %v2397 = vld [vmem:[%s787 + $0x78] sm:$0xf]
        %v2398 = vld [vmem:[%s787 + $0x7c] sm:$0xf]
        %v2399 = vld [vmem:[%s787 + $0x80] sm:$0xf]
        %v2400 = vld [vmem:[%s787 + $0x84] sm:$0xf]
        %v2401 = vld [vmem:[%s787 + $0x88] sm:$0xf]
        %v2402 = vld [vmem:[%s787 + $0x8c] sm:$0xf]
        %v2403 = vld [vmem:[%s787 + $0x90] sm:$0xf]
        %v2404 = vld [vmem:[%s787 + $0x94] sm:$0xf]
        %v2405 = vld [vmem:[%s787 + $0x98] sm:$0xf]
        %v2406 = vld [vmem:[%s787 + $0x9c] sm:$0xf]
        %v2407 = vld [vmem:[%s787 + $0xa0] sm:$0xf]
        %v2408 = vld [vmem:[%s787 + $0xa4] sm:$0xf]
        %v2409 = vld [vmem:[%s787 + $0xa8] sm:$0xf]
        %v2410 = vld [vmem:[%s787 + $0xac] sm:$0xf]
        %v2411 = vld [vmem:[%s787 + $0xb0] sm:$0xf]
        %v2412 = vld [vmem:[%s787 + $0xb4] sm:$0xf]
        %v2413 = vld [vmem:[%s787 + $0xb8] sm:$0xf]
        %v2414 = vld [vmem:[%s787 + $0xbc] sm:$0xf]
        %v2415 = vld [vmem:[%s787 + $0xc0] sm:$0xf]
        %v2416 = vld [vmem:[%s787 + $0xc4] sm:$0xf]
        %v2417 = vld [vmem:[%s787 + $0xc8] sm:$0xf]
        %v2418 = vld [vmem:[%s787 + $0xcc] sm:$0xf]
        %v2419 = vld [vmem:[%s787 + $0xd0] sm:$0xf]
        %v2420 = vld [vmem:[%s787 + $0xd4] sm:$0xf]
        %v2421 = vld [vmem:[%s787 + $0xd8] sm:$0xf]
        %v2422 = vld [vmem:[%s787 + $0xdc] sm:$0xf]
        %v2423 = vld [vmem:[%s787 + $0xe0] sm:$0xf]
        %v2424 = vld [vmem:[%s787 + $0xe4] sm:$0xf]
        %v2425 = vld [vmem:[%s787 + $0xe8] sm:$0xf]
        %v2426 = vld [vmem:[%s787 + $0xec] sm:$0xf]
        %v2427 = vld [vmem:[%s787 + $0xf0] sm:$0xf]
        %v2428 = vld [vmem:[%s787 + $0xf4] sm:$0xf]
        %v2429 = vld [vmem:[%s787 + $0xf8] sm:$0xf]
        %v2430 = vld [vmem:[%s787 + $0xfc] sm:$0xf]
        %v2431 = vpack.c.bf16 %v2363, %v2363
        %v2432 = vpack.c.bf16 %v2364, %v2364
        %v2433 = vpack.c.bf16 %v2365, %v2365
        %v2434 = vpack.c.bf16 %v2366, %v2366
        %v2435 = vld [vmem:[%s901] sm:$0x1]
        %v2437 = vlaneseq
        %v2438 = vshrl.u32 %v2437, 7
        %v2439 = vsub.s32 0, %v2438
        %v2440 = vrot.slane %v2435, %v2439
        %v2506 = vunpack.c.l.b16 %v2367
        %v2507 = vunpack.c.l.b16 %v2368
        %v2508 = vunpack.c.l.b16 %v2369
        %v2509 = vunpack.c.l.b16 %v2370
        %v2510 = vunpack.c.l.b16 %v2371
        %v2511 = vunpack.c.l.b16 %v2372
        %v2512 = vunpack.c.l.b16 %v2373
        %v2513 = vunpack.c.l.b16 %v2374
        %v2514 = vunpack.c.l.b16 %v2375
        %v2515 = vunpack.c.l.b16 %v2376
        %v2516 = vunpack.c.l.b16 %v2377
        %v2517 = vunpack.c.l.b16 %v2378
        %v2518 = vunpack.c.l.b16 %v2379
        %v2519 = vunpack.c.l.b16 %v2380
        %v2520 = vunpack.c.l.b16 %v2381
        %v2521 = vunpack.c.l.b16 %v2382
        %v2522 = vunpack.c.l.b16 %v2383
        %v2523 = vunpack.c.l.b16 %v2384
        %v2524 = vunpack.c.l.b16 %v2385
        %v2525 = vunpack.c.l.b16 %v2386
        %v2526 = vunpack.c.l.b16 %v2387
        %v2527 = vunpack.c.l.b16 %v2388
        %v2528 = vunpack.c.l.b16 %v2389
        %v2529 = vunpack.c.l.b16 %v2390
        %v2530 = vunpack.c.l.b16 %v2391
        %v2531 = vunpack.c.l.b16 %v2392
        %v2532 = vunpack.c.l.b16 %v2393
        %v2533 = vunpack.c.l.b16 %v2394
        %v2534 = vunpack.c.l.b16 %v2395
        %v2535 = vunpack.c.l.b16 %v2396
        %v2536 = vunpack.c.l.b16 %v2397
        %v2537 = vunpack.c.l.b16 %v2398
        %v2538 = vunpack.c.l.b16 %v2399
        %v2539 = vunpack.c.l.b16 %v2400
        %v2540 = vunpack.c.l.b16 %v2401
        %v2541 = vunpack.c.l.b16 %v2402
        %v2542 = vunpack.c.l.b16 %v2403
        %v2543 = vunpack.c.l.b16 %v2404
        %v2544 = vunpack.c.l.b16 %v2405
        %v2545 = vunpack.c.l.b16 %v2406
        %v2546 = vunpack.c.l.b16 %v2407
        %v2547 = vunpack.c.l.b16 %v2408
        %v2548 = vunpack.c.l.b16 %v2409
        %v2549 = vunpack.c.l.b16 %v2410
        %v2550 = vunpack.c.l.b16 %v2411
        %v2551 = vunpack.c.l.b16 %v2412
        %v2552 = vunpack.c.l.b16 %v2413
        %v2553 = vunpack.c.l.b16 %v2414
        %v2554 = vunpack.c.l.b16 %v2415
        %v2555 = vunpack.c.l.b16 %v2416
        %v2556 = vunpack.c.l.b16 %v2417
        %v2557 = vunpack.c.l.b16 %v2418
        %v2558 = vunpack.c.l.b16 %v2419
        %v2559 = vunpack.c.l.b16 %v2420
        %v2560 = vunpack.c.l.b16 %v2421
        %v2561 = vunpack.c.l.b16 %v2422
        %v2562 = vunpack.c.l.b16 %v2423
        %v2563 = vunpack.c.l.b16 %v2424
        %v2564 = vunpack.c.l.b16 %v2425
        %v2565 = vunpack.c.l.b16 %v2426
        %v2566 = vunpack.c.l.b16 %v2427
        %v2567 = vunpack.c.l.b16 %v2428
        %v2568 = vunpack.c.l.b16 %v2429
        %v2569 = vunpack.c.l.b16 %v2430
        %v2570 = vpack.c.b16 %v2507, %v2506
        %v2571 = vpack.c.b16 %v2509, %v2508
        %v2572 = vpack.c.b16 %v2511, %v2510
        %v2573 = vpack.c.b16 %v2513, %v2512
        %v2574 = vpack.c.b16 %v2515, %v2514
        %v2575 = vpack.c.b16 %v2517, %v2516
        %v2576 = vpack.c.b16 %v2519, %v2518
        %v2577 = vpack.c.b16 %v2521, %v2520
        %v2578 = vpack.c.b16 %v2523, %v2522
        %v2579 = vpack.c.b16 %v2525, %v2524
        %v2580 = vpack.c.b16 %v2527, %v2526
        %v2581 = vpack.c.b16 %v2529, %v2528
        %v2582 = vpack.c.b16 %v2531, %v2530
        %v2583 = vpack.c.b16 %v2533, %v2532
        %v2584 = vpack.c.b16 %v2535, %v2534
        %v2585 = vpack.c.b16 %v2537, %v2536
        %v2586 = vpack.c.b16 %v2539, %v2538
        %v2587 = vpack.c.b16 %v2541, %v2540
        %v2588 = vpack.c.b16 %v2543, %v2542
        %v2589 = vpack.c.b16 %v2545, %v2544
        %v2590 = vpack.c.b16 %v2547, %v2546
        %v2591 = vpack.c.b16 %v2549, %v2548
        %v2592 = vpack.c.b16 %v2551, %v2550
        %v2593 = vpack.c.b16 %v2553, %v2552
        %v2594 = vpack.c.b16 %v2555, %v2554
        %v2595 = vpack.c.b16 %v2557, %v2556
        %v2596 = vpack.c.b16 %v2559, %v2558
        %v2597 = vpack.c.b16 %v2561, %v2560
        %v2598 = vpack.c.b16 %v2563, %v2562
        %v2599 = vpack.c.b16 %v2565, %v2564
        %v2600 = vpack.c.b16 %v2567, %v2566
        %v2601 = vpack.c.b16 %v2569, %v2568
        %2634 = vmatprep.subr.bf16.mxu0 0
        %2635 = vmatpush1.bf16.msra.mxu0 %v2577
        %2636 = vmatprep.subr.bf16.mxu0 0
        %2637 = vmatpush1.bf16.msra.mxu0 %v2576
        %2638 = vmatprep.subr.bf16.mxu0 0
        %2639 = vmatpush1.bf16.msra.mxu0 %v2575
        %2640 = vmatprep.subr.bf16.mxu0 0
        %2641 = vmatpush1.bf16.msra.mxu0 %v2574
        %2642 = vmatprep.subr.bf16.mxu0 0
        %2643 = vmatpush1.bf16.msra.mxu0 %v2573
        %2644 = vmatprep.subr.bf16.mxu0 0
        %2645 = vmatpush1.bf16.msra.mxu0 %v2572
        %2646 = vmatprep.subr.bf16.mxu0 0
        %2647 = vmatpush1.bf16.msra.mxu0 %v2571
        %2648 = vmatprep.subr.bf16.mxu0 0
        %2649 = vmatpush1.bf16.msra.mxu0 %v2570
        %2650 = vmatprep.subr.bf16.mxu0 0
        %2651 = vmatpush2.bf16.msra.mxu0 %v2585
        %2652 = vmatprep.subr.bf16.mxu0 0
        %2653 = vmatpush2.bf16.msra.mxu0 %v2584
        %2654 = vmatprep.subr.bf16.mxu0 0
        %2655 = vmatpush2.bf16.msra.mxu0 %v2583
        %2656 = vmatprep.subr.bf16.mxu0 0
        %2657 = vmatpush2.bf16.msra.mxu0 %v2582
        %2658 = vmatprep.subr.bf16.mxu0 0
        %2659 = vmatpush2.bf16.msra.mxu0 %v2581
        %2660 = vmatprep.subr.bf16.mxu0 0
        %2661 = vmatpush2.bf16.msra.mxu0 %v2580
        %2662 = vmatprep.subr.bf16.mxu0 0
        %2663 = vmatpush2.bf16.msra.mxu0 %v2579
        %2664 = vmatprep.subr.bf16.mxu0 0
        %2665 = vmatpush2.bf16.msra.mxu0 %v2578
        %2666 = vmatprep.mubr.bf16.mxu0 %v2432
        %2667 = vmatmul.mubr.bf16.gmra.mxu0 %v2431
        %v2668 = vpop.f32.mrf.mxu0
        %v2669 = vadd.f32 %v2440, %v2668
        %v2670 = vpop.f32.mrf.mxu0
        %v2671 = vpop.f32.mrf.mxu0
        %v2672 = vpop.f32.mrf.mxu0
        %2673 = vdwg.mxu0
        %2674 = vmatprep.subr.bf16.mxu0 0
        %2675 = vmatpush1.bf16.msra.mxu0 %v2593
        %2676 = vmatprep.subr.bf16.mxu0 0
        %2677 = vmatpush1.bf16.msra.mxu0 %v2592
        %2678 = vmatprep.subr.bf16.mxu0 0
        %2679 = vmatpush1.bf16.msra.mxu0 %v2591
        %2680 = vmatprep.subr.bf16.mxu0 0
        %2681 = vmatpush1.bf16.msra.mxu0 %v2590
        %2682 = vmatprep.subr.bf16.mxu0 0
        %2683 = vmatpush1.bf16.msra.mxu0 %v2589
        %2684 = vmatprep.subr.bf16.mxu0 0
        %2685 = vmatpush1.bf16.msra.mxu0 %v2588
        %2686 = vmatprep.subr.bf16.mxu0 0
        %2687 = vmatpush1.bf16.msra.mxu0 %v2587
        %2688 = vmatprep.subr.bf16.mxu0 0
        %2689 = vmatpush1.bf16.msra.mxu0 %v2586
        %2690 = vmatprep.subr.bf16.mxu0 0
        %2691 = vmatpush2.bf16.msra.mxu0 %v2601
        %2692 = vmatprep.subr.bf16.mxu0 0
        %2693 = vmatpush2.bf16.msra.mxu0 %v2600
        %2694 = vmatprep.subr.bf16.mxu0 0
        %2695 = vmatpush2.bf16.msra.mxu0 %v2599
        %2696 = vmatprep.subr.bf16.mxu0 0
        %2697 = vmatpush2.bf16.msra.mxu0 %v2598
        %2698 = vmatprep.subr.bf16.mxu0 0
        %2699 = vmatpush2.bf16.msra.mxu0 %v2597
        %2700 = vmatprep.subr.bf16.mxu0 0
        %2701 = vmatpush2.bf16.msra.mxu0 %v2596
        %2702 = vmatprep.subr.bf16.mxu0 0
        %2703 = vmatpush2.bf16.msra.mxu0 %v2595
        %2704 = vmatprep.subr.bf16.mxu0 0
        %2705 = vmatpush2.bf16.msra.mxu0 %v2594
        %2706 = vmatprep.mubr.bf16.mxu0 %v2434
        %2707 = vmatmul.mubr.bf16.gmra.mxu0 %v2433
        %v2708 = vpop.f32.mrf.mxu0
        %v2709 = vadd.f32 %v2669, %v2708
        %v2710 = vpop.f32.mrf.mxu0
        %v2711 = vpop.f32.mrf.mxu0
        %v2712 = vpop.f32.mrf.mxu0
        %2713 = vdwg.mxu0
        %v2714 = vadd.f32 %v2709, %v2033
        %v2715 = vld [vmem:[%s904] sm:$0x1]
        %v2716 = vld [vmem:[%s907] sm:$0x1]
        %2717 = vadd.xlane.f32.xlu0 %v2714
        %v2718 = vpop.xlane.xlu0 %2717
        %v2719 = vmul.f32 %v2718, %v2010
        %v2720 = vsub.f32 %v2714, %v2719
        %v2721 = vmul.f32 %v2720, %v2720
        %2722 = vadd.xlane.f32.xlu0 %v2721
        %v2723 = vpop.xlane.xlu0 %2722
        %v2724 = vmul.f32 %v2723, %v2010
        %v2725 = vadd.f32 %v2724, 1e-05
        %v2726 = vrsqrt.pop %v2725
        %v2727 = vmul.f32 %v2720, %v2726
        %v2729 = vlaneseq
        %v2730 = vshrl.u32 %v2729, 7
        %v2731 = vsub.s32 0, %v2730
        %v2732 = vrot.slane %v2715, %v2731
        %v2734 = vmul.f32 %v2727, %v2732
        %v2736 = vlaneseq
        %v2737 = vshrl.u32 %v2736, 7
        %v2738 = vsub.s32 0, %v2737
        %v2739 = vrot.slane %v2716, %v2738
        %v2741 = vadd.f32 %v2734, %v2739
        %2742 = vst [vmem:[%s887] sm:$0xff] %v2741
        %s2743 = sand.u32 %s463, 1
        %s2744 = scalar_lea.sflag [#allocation4], %s2743
        %s2745 = sand.u32 %s463, 1
        %s2746 = smul.addr %s2745, 8
        %s2747 = scalar_lea.vmem [#allocation16], %s2746
        // Predicated region
        $region129: #{tpu_custom_call.1} parent=83 // pred_check
          %p2748 = pneg %p473
        $region130: #{tpu_custom_call.1} parent=83 // pred_check_branch
          %2750 = sbr.rel (%p2748) target = $region132
        $region131: #{tpu_custom_call.1} parent=83 // pred_region
          %s2752 = ssub.s32 128, 128
          %2753 = vsyncadd %s2744, %s2752
          %s2754 = smul.addr %s41, 128
          %s2755 = scalar_lea.hbm %s16, %s2754
          %s2757 = sshll.u32 %s2747, 4
          %s2758 = int_to_ptr.vmem [resolvable:$true] %s2757
          %2760 = dma.vmem_to_hbm [thread:$0]  %s2758, 128, %s2755, %s2744
        $region132: #{tpu_custom_call.1} parent=83 // pred_fallthru
          _
      $region84: #{tpu_custom_call.1} parent=5 // pred_fallthru
        _
      %p2761 = scmp.le.s32.totalorder 2, %s32
      // Predicated region
      $region133: #{tpu_custom_call.1} parent=5 // pred_check
        %p2762 = pneg %p2761
      $region134: #{tpu_custom_call.1} parent=5 // pred_check_branch
        %2764 = sbr.rel (%p2762) target = $region136
      $region135: #{tpu_custom_call.1} parent=5 // pred_region
        %s2765 = ssub.s32 %s32, 2
        // Predicated region
        $region137: #{tpu_custom_call.1} parent=135 // pred_check
          %p2766 = pneg %p479
        $region138: #{tpu_custom_call.1} parent=135 // pred_check_branch
          %2768 = sbr.rel (%p2766) target = $region140
        $region139: #{tpu_custom_call.1} parent=135 // pred_region
          %s2769 = sand.u32 %s464, 1
          %s2770 = scalar_lea.sflag [#allocation4], %s2769
          %s2771 = sand.u32 %s464, 1
          %s2772 = smul.addr %s2771, 8
          %s2773 = scalar_lea.vmem [#allocation16], %s2772
          %2774 = dma.done %s2770, 128
        $region140: #{tpu_custom_call.1} parent=135 // pred_fallthru
          _
      $region136: #{tpu_custom_call.1} parent=5 // pred_fallthru
        _
    $region6: #{tpu_custom_call.1} parent=1 // loop_footer
      %s36 = sadd.s32 1, %s32
    $region7: #{tpu_custom_call.1} parent=1 // loop_footer_branch
      %31 = sbr.rel target = $region3
    $region8: #{tpu_custom_call.1} parent=1 // loop_exit
      _
    %2775 = vsyncpa [#allocation3], 1
    %s2776 = scalar_lea.sflag [#allocation3], 1
    %2777 = vsyncpa %s2776, 1
    %2778 = vsyncpa [#allocation6], 1
    %s2779 = scalar_lea.sflag [#allocation6], 1
    %2780 = vsyncpa %s2779, 1
    %2781 = vsyncpa [#allocation9], 1
    %2782 = vsyncpa [#allocation4], 1
    %s2783 = scalar_lea.sflag [#allocation4], 1
    %2784 = vsyncpa %s2783, 1

</llo_original>
